<compile_context>
chip_gen: v6e
topology: v6e:2x2x1
jax: 0.10.0
libtpu: 0.0.40
codegen_flags: <defaults>
</compile_context>

<pallas_src>
import jax
import jax.numpy as jnp
from jax.experimental import pallas as pl
from jax.experimental.pallas import tpu as pltpu


def mlp_kernel(x_ref, w1_ref, b1_ref, w2_ref, b2_ref, w3_ref, b3_ref,
               w4_ref, b4_ref, o_ref):
    x = x_ref[...]                         # (4, TB) f32, batch on lanes
    w1 = w1_ref[...]                       # (128, 4) f32

    # Layer 1 (K = 4): four VPU broadcast FMAs instead of an almost-empty MXU pass.
    h = b1_ref[...] + w1[:, 0:1] * x[0:1, :]
    h = h + w1[:, 1:2] * x[1:2, :]
    h = h + w1[:, 2:3] * x[2:3, :]
    h = h + w1[:, 3:4] * x[3:4, :]
    h = jnp.maximum(h, 0.0)                # (128, TB) f32

    # Layers 2-4 on the MXU (N = TB fills the array width).  Weights arrive as
    # bf16 (default) or f32; casting h to the weight dtype keeps the dot
    # homogeneous and, in the bf16 case, avoids the multi-pass f32 emulation.
    # Accumulation stays f32 via preferred_element_type.
    wdt = w2_ref.dtype

    h = jnp.dot(w2_ref[...], h.astype(wdt), preferred_element_type=jnp.float32)
    h = jnp.maximum(h + b2_ref[...], 0.0)  # (64, TB)

    h = jnp.dot(w3_ref[...], h.astype(wdt), preferred_element_type=jnp.float32)
    h = jnp.maximum(h + b3_ref[...], 0.0)  # (32, TB)

    # Layer 4 (padded to 8 rows, rows 3..7 zero): dense (8, TB) store.
    h = jnp.dot(w4_ref[...], h.astype(wdt), preferred_element_type=jnp.float32)
    o_ref[...] = (h + b4_ref[...]).astype(o_ref.dtype)


def _choose_tiling(B, tb):
    """Pick (tile, n_steps): tile is a lane-dense multiple of 128; the step
    count is kept even (>= 4 when each step still gets >= 1024 lanes, >= 2 when
    it gets >= 512) so v7x's two TensorCores get balanced work, and the steps
    are re-balanced so the last one is not a sliver."""
    lane = 128
    b128 = -(-B // lane) * lane
    tile = max(lane, (min(tb, b128) // lane) * lane)
    n = -(-b128 // tile)
    if b128 >= 4 * 1024 and (n < 4 or n % 2):
        n = max(4, n + (n % 2))            # >= 2 steps per TensorCore, even
    elif n == 1 and b128 >= 2 * 512:
        n = 2                              # medium batch: keep both cores busy
    elif n > 1 and n % 2:
        n += 1                             # avoid odd (imbalanced) step counts
    per = -(-b128 // n)
    tile = max(lane, -(-per // lane) * lane)
    return tile, n


def advanced_nn_forward(x, params, *, tb=8192, use_bf16=True, batch_last_out=False):
    """x: (B, 4) f32.  params: [(w, b)] with w (out, in), b (out, 1).

    Returns (B, 3) (or (3, B) when batch_last_out=True, skipping the epilogue
    transpose for callers that can consume the batch-on-lanes layout)."""
    B, din = x.shape
    assert din == 4
    (w1, b1), (w2, b2), (w3, b3), (w4, b4) = params

    # Zero-pad the last layer to 8 output rows -> fully dense (8, TB) stores.
    w4p = jnp.zeros((8, w4.shape[1]), w4.dtype).at[:3, :].set(w4)
    b4p = jnp.zeros((8, 1), b4.dtype).at[:3, :].set(b4)

    if use_bf16:
        # The MXU is bf16-native on v5e/v6e/v7x; f32 matmuls run as multi-pass
        # emulation.  Only the MXU-side weights are cast; layer-1 weights and
        # all biases stay f32 (VPU path / f32 adds), accumulation stays f32.
        w2 = w2.astype(jnp.bfloat16)
        w3 = w3.astype(jnp.bfloat16)
        w4p = w4p.astype(jnp.bfloat16)

    tile, n_steps = _choose_tiling(B, tb)
    B_pad = n_steps * tile

    # Single relayout pass on the tiny (16 B/row) input: transpose so batch
    # sits on lanes; pad only when the grid actually needs extra columns.
    xT = x.T
    if B_pad != B:
        xT = jnp.pad(xT, ((0, 0), (0, B_pad - B)))

    def resident(a):                       # weights/biases: same block every step
        return pl.BlockSpec(a.shape, lambda i: (0, 0))

    # At the default tile (<= 8192 lanes) per-step VMEM is ~8-12 MiB, inside
    # every generation's scoped default (16 MiB on v5e, 32 MiB on v6e/v7x).
    # Only raise the limit explicitly if a caller asks for a bigger tile.
    vmem_limit = None
    if tile > 8192:
        est = 2 * 16 * tile * 4 + 360 * tile * 4 + (1 << 20)
        vmem_limit = min(int(est * 1.25), 40 << 20)

    out = pl.pallas_call(
        mlp_kernel,
        out_shape=jax.ShapeDtypeStruct((8, B_pad), jnp.float32),
        grid_spec=pltpu.PrefetchScalarGridSpec(
            num_scalar_prefetch=0,
            grid=(n_steps,),
            in_specs=[
                pl.BlockSpec((4, tile), lambda i: (0, i)),        # x tile, lane-dense
                resident(w1), resident(b1),
                resident(w2), resident(b2),
                resident(w3), resident(b3),
                resident(w4p), resident(b4p),
            ],
            out_specs=pl.BlockSpec((8, tile), lambda i: (0, i)),  # lane-dense output
        ),
        compiler_params=pltpu.CompilerParams(
            dimension_semantics=("parallel",),
            vmem_limit_bytes=vmem_limit),
    )(xT, w1, b1, w2, b2, w3, b3, w4p, b4p)

    if batch_last_out:
        return out[:3, :B]                 # (3, B), no epilogue transpose
    return out[:3, :B].T                   # (B, 3), matching the PyTorch module


def init_params(key):
    """nn.Linear-style init: W (out, in), b (out, 1), both U(-1/sqrt(fan_in), +)."""
    dims = [(4, 128), (128, 64), (64, 32), (32, 3)]
    params = []
    for din, dout in dims:
        key, kw, kb = jax.random.split(key, 3)
        bound = 1.0 / jnp.sqrt(jnp.float32(din))
        w = jax.random.uniform(kw, (dout, din), jnp.float32, -bound, bound)
        b = jax.random.uniform(kb, (dout, 1), jnp.float32, -bound, bound)
        params.append((w, b))
    return params


def reference_forward(x, params):
    h = x
    for i, (w, b) in enumerate(params):
        h = h @ w.T + b[:, 0]
        if i < 3:
            h = jnp.maximum(h, 0.0)
    return h


if __name__ == "__main__":
    key = jax.random.PRNGKey(0)
    kx, kp = jax.random.split(key)
    params = init_params(kp)

    # Case 1: default bf16-MXU path; B=2500 exercises 2 balanced grid steps of
    # 1280 lanes plus zero-padded batch columns (B_pad=2560).
    B = 2500
    x = jax.random.normal(kx, (B, 4), jnp.float32)
    out = jax.block_until_ready(advanced_nn_forward(x, params))
    ref = reference_forward(x, params)
    assert out.shape == (B, 3)
    err = float(jnp.max(jnp.abs(out - ref)))
    assert jnp.allclose(out, ref, atol=2e-2, rtol=2e-2), err   # bf16 MXU tolerance

    # Case 2: exact f32 matmul path, tiny ragged batch (single grid step,
    # heavy lane padding).
    B2 = 37
    x2 = jax.random.normal(jax.random.fold_in(kx, 1), (B2, 4), jnp.float32)
    out2 = jax.block_until_ready(advanced_nn_forward(x2, params, use_bf16=False))
    ref2 = reference_forward(x2, params)
    assert out2.shape == (B2, 3)
    err2 = float(jnp.max(jnp.abs(out2 - ref2)))
    assert jnp.allclose(out2, ref2, atol=1e-4, rtol=1e-4), err2

    print("KERNEL_OK")
</pallas_src>

<mosaic_0001>
module attributes {stable_mosaic.version = 11 : i64} {
  func.func @mlp_kernel(%arg0: i32, %arg1: memref<4x1280xf32, #tpu.memory_space<vmem>>, %arg2: memref<128x4xf32, #tpu.memory_space<vmem>>, %arg3: memref<128x1xf32, #tpu.memory_space<vmem>>, %arg4: memref<64x128xbf16, #tpu.memory_space<vmem>>, %arg5: memref<64x1xf32, #tpu.memory_space<vmem>>, %arg6: memref<32x64xbf16, #tpu.memory_space<vmem>>, %arg7: memref<32x1xf32, #tpu.memory_space<vmem>>, %arg8: memref<8x32xbf16, #tpu.memory_space<vmem>>, %arg9: memref<8x1xf32, #tpu.memory_space<vmem>>, %arg10: memref<8x1280xf32, #tpu.memory_space<vmem>>) attributes {dimension_semantics = [#tpu.dimension_semantics<parallel>], iteration_bounds = array<i64: 2>, scalar_prefetch = 0 : i64, scratch_operands = 0 : i64, tpu.core_type = #tpu.core_type<tc>, window_params = [{transform_indices = @transform_0, window_bounds = array<i64: 4, 1280>}, {pipeline_mode = #tpu.pipeline_mode<synchronous>, transform_indices = @transform_1, window_bounds = array<i64: 128, 4>}, {pipeline_mode = #tpu.pipeline_mode<synchronous>, transform_indices = @transform_2, window_bounds = array<i64: 128, 1>}, {pipeline_mode = #tpu.pipeline_mode<synchronous>, transform_indices = @transform_3, window_bounds = array<i64: 64, 128>}, {pipeline_mode = #tpu.pipeline_mode<synchronous>, transform_indices = @transform_4, window_bounds = array<i64: 64, 1>}, {pipeline_mode = #tpu.pipeline_mode<synchronous>, transform_indices = @transform_5, window_bounds = array<i64: 32, 64>}, {pipeline_mode = #tpu.pipeline_mode<synchronous>, transform_indices = @transform_6, window_bounds = array<i64: 32, 1>}, {pipeline_mode = #tpu.pipeline_mode<synchronous>, transform_indices = @transform_7, window_bounds = array<i64: 8, 32>}, {pipeline_mode = #tpu.pipeline_mode<synchronous>, transform_indices = @transform_8, window_bounds = array<i64: 8, 1>}, {transform_indices = @transform_9, window_bounds = array<i64: 8, 1280>}]} {
    %c0 = arith.constant 0 : index
    %c0_0 = arith.constant 0 : index
    %0 = vector.load %arg1[%c0, %c0_0] : memref<4x1280xf32, #tpu.memory_space<vmem>>, vector<4x1280xf32>
    %c0_1 = arith.constant 0 : index
    %c0_2 = arith.constant 0 : index
    %1 = vector.load %arg2[%c0_1, %c0_2] : memref<128x4xf32, #tpu.memory_space<vmem>>, vector<128x4xf32>
    %c0_3 = arith.constant 0 : index
    %c0_4 = arith.constant 0 : index
    %2 = vector.load %arg3[%c0_3, %c0_4] : memref<128x1xf32, #tpu.memory_space<vmem>>, vector<128x1xf32>
    %3 = vector.extract_strided_slice %1 {offsets = [0, 0], sizes = [128, 1], strides = [1, 1]} : vector<128x4xf32> to vector<128x1xf32>
    %4 = vector.extract_strided_slice %0 {offsets = [0, 0], sizes = [1, 1280], strides = [1, 1]} : vector<4x1280xf32> to vector<1x1280xf32>
    %5 = vector.broadcast %3 : vector<128x1xf32> to vector<128x1280xf32>
    %6 = vector.broadcast %4 : vector<1x1280xf32> to vector<128x1280xf32>
    %7 = arith.mulf %5, %6 : vector<128x1280xf32>
    %8 = vector.broadcast %2 : vector<128x1xf32> to vector<128x1280xf32>
    %9 = arith.addf %8, %7 : vector<128x1280xf32>
    %10 = vector.extract_strided_slice %1 {offsets = [0, 1], sizes = [128, 1], strides = [1, 1]} : vector<128x4xf32> to vector<128x1xf32>
    %11 = vector.extract_strided_slice %0 {offsets = [1, 0], sizes = [1, 1280], strides = [1, 1]} : vector<4x1280xf32> to vector<1x1280xf32>
    %12 = vector.broadcast %10 : vector<128x1xf32> to vector<128x1280xf32>
    %13 = vector.broadcast %11 : vector<1x1280xf32> to vector<128x1280xf32>
    %14 = arith.mulf %12, %13 : vector<128x1280xf32>
    %15 = arith.addf %9, %14 : vector<128x1280xf32>
    %16 = vector.extract_strided_slice %1 {offsets = [0, 2], sizes = [128, 1], strides = [1, 1]} : vector<128x4xf32> to vector<128x1xf32>
    %17 = vector.extract_strided_slice %0 {offsets = [2, 0], sizes = [1, 1280], strides = [1, 1]} : vector<4x1280xf32> to vector<1x1280xf32>
    %18 = vector.broadcast %16 : vector<128x1xf32> to vector<128x1280xf32>
    %19 = vector.broadcast %17 : vector<1x1280xf32> to vector<128x1280xf32>
    %20 = arith.mulf %18, %19 : vector<128x1280xf32>
    %21 = arith.addf %15, %20 : vector<128x1280xf32>
    %22 = vector.extract_strided_slice %1 {offsets = [0, 3], sizes = [128, 1], strides = [1, 1]} : vector<128x4xf32> to vector<128x1xf32>
    %23 = vector.extract_strided_slice %0 {offsets = [3, 0], sizes = [1, 1280], strides = [1, 1]} : vector<4x1280xf32> to vector<1x1280xf32>
    %24 = vector.broadcast %22 : vector<128x1xf32> to vector<128x1280xf32>
    %25 = vector.broadcast %23 : vector<1x1280xf32> to vector<128x1280xf32>
    %26 = arith.mulf %24, %25 : vector<128x1280xf32>
    %27 = arith.addf %21, %26 : vector<128x1280xf32>
    %cst = arith.constant 0.000000e+00 : f32
    %28 = vector.broadcast %cst : f32 to vector<128x1280xf32>
    %29 = arith.maximumf %27, %28 : vector<128x1280xf32>
    %c0_5 = arith.constant 0 : index
    %c0_6 = arith.constant 0 : index
    %30 = vector.load %arg4[%c0_5, %c0_6] : memref<64x128xbf16, #tpu.memory_space<vmem>>, vector<64x128xbf16>
    %31 = arith.truncf %29 : vector<128x1280xf32> to vector<128x1280xbf16>
    %cst_7 = arith.constant dense<0.000000e+00> : vector<64x1280xf32>
    %32 = tpu.matmul %30, %31, %cst_7 {dimension_numbers = #tpu.dot_dimension_numbers<[1], [0], [0], [1], [0, 0, 1, 1], [], []>} : vector<64x128xbf16>, vector<128x1280xbf16>, vector<64x1280xf32> -> vector<64x1280xf32>
    %c0_8 = arith.constant 0 : index
    %c0_9 = arith.constant 0 : index
    %33 = vector.load %arg5[%c0_8, %c0_9] : memref<64x1xf32, #tpu.memory_space<vmem>>, vector<64x1xf32>
    %34 = vector.broadcast %33 : vector<64x1xf32> to vector<64x1280xf32>
    %35 = arith.addf %32, %34 : vector<64x1280xf32>
    %cst_10 = arith.constant 0.000000e+00 : f32
    %36 = vector.broadcast %cst_10 : f32 to vector<64x1280xf32>
    %37 = arith.maximumf %35, %36 : vector<64x1280xf32>
    %c0_11 = arith.constant 0 : index
    %c0_12 = arith.constant 0 : index
    %38 = vector.load %arg6[%c0_11, %c0_12] : memref<32x64xbf16, #tpu.memory_space<vmem>>, vector<32x64xbf16>
    %39 = arith.truncf %37 : vector<64x1280xf32> to vector<64x1280xbf16>
    %cst_13 = arith.constant dense<0.000000e+00> : vector<32x1280xf32>
    %40 = tpu.matmul %38, %39, %cst_13 {dimension_numbers = #tpu.dot_dimension_numbers<[1], [0], [0], [1], [0, 0, 1, 1], [], []>} : vector<32x64xbf16>, vector<64x1280xbf16>, vector<32x1280xf32> -> vector<32x1280xf32>
    %c0_14 = arith.constant 0 : index
    %c0_15 = arith.constant 0 : index
    %41 = vector.load %arg7[%c0_14, %c0_15] : memref<32x1xf32, #tpu.memory_space<vmem>>, vector<32x1xf32>
    %42 = vector.broadcast %41 : vector<32x1xf32> to vector<32x1280xf32>
    %43 = arith.addf %40, %42 : vector<32x1280xf32>
    %cst_16 = arith.constant 0.000000e+00 : f32
    %44 = vector.broadcast %cst_16 : f32 to vector<32x1280xf32>
    %45 = arith.maximumf %43, %44 : vector<32x1280xf32>
    %c0_17 = arith.constant 0 : index
    %c0_18 = arith.constant 0 : index
    %46 = vector.load %arg8[%c0_17, %c0_18] : memref<8x32xbf16, #tpu.memory_space<vmem>>, vector<8x32xbf16>
    %47 = arith.truncf %45 : vector<32x1280xf32> to vector<32x1280xbf16>
    %cst_19 = arith.constant dense<0.000000e+00> : vector<8x1280xf32>
    %48 = tpu.matmul %46, %47, %cst_19 {dimension_numbers = #tpu.dot_dimension_numbers<[1], [0], [0], [1], [0, 0, 1, 1], [], []>} : vector<8x32xbf16>, vector<32x1280xbf16>, vector<8x1280xf32> -> vector<8x1280xf32>
    %c0_20 = arith.constant 0 : index
    %c0_21 = arith.constant 0 : index
    %49 = vector.load %arg9[%c0_20, %c0_21] : memref<8x1xf32, #tpu.memory_space<vmem>>, vector<8x1xf32>
    %50 = vector.broadcast %49 : vector<8x1xf32> to vector<8x1280xf32>
    %51 = arith.addf %48, %50 : vector<8x1280xf32>
    %c0_22 = arith.constant 0 : index
    %c0_23 = arith.constant 0 : index
    %52 = vector.load %arg10[%c0_22, %c0_23] : memref<8x1280xf32, #tpu.memory_space<vmem>>, vector<8x1280xf32>
    tpu.vector_store %arg10[%c0_22, %c0_23], %51 {strides = array<i32>} : memref<8x1280xf32, #tpu.memory_space<vmem>>, vector<8x1280xf32>,
    return
  }
  func.func @transform_0(%arg0: i32) -> (i32, i32) {
    %c0_i32 = arith.constant 0 : i32
    %c0_i32_0 = arith.constant 0 : i32
    return %c0_i32, %arg0 : i32, i32
  }
  func.func @transform_1(%arg0: i32) -> (i32, i32) {
    %c0_i32 = arith.constant 0 : i32
    %c0_i32_0 = arith.constant 0 : i32
    %c0_i32_1 = arith.constant 0 : i32
    return %c0_i32, %c0_i32_0 : i32, i32
  }
  func.func @transform_2(%arg0: i32) -> (i32, i32) {
    %c0_i32 = arith.constant 0 : i32
    %c0_i32_0 = arith.constant 0 : i32
    %c0_i32_1 = arith.constant 0 : i32
    return %c0_i32, %c0_i32_0 : i32, i32
  }
  func.func @transform_3(%arg0: i32) -> (i32, i32) {
    %c0_i32 = arith.constant 0 : i32
    %c0_i32_0 = arith.constant 0 : i32
    %c0_i32_1 = arith.constant 0 : i32
    return %c0_i32, %c0_i32_0 : i32, i32
  }
  func.func @transform_4(%arg0: i32) -> (i32, i32) {
    %c0_i32 = arith.constant 0 : i32
    %c0_i32_0 = arith.constant 0 : i32
    %c0_i32_1 = arith.constant 0 : i32
    return %c0_i32, %c0_i32_0 : i32, i32
  }
  func.func @transform_5(%arg0: i32) -> (i32, i32) {
    %c0_i32 = arith.constant 0 : i32
    %c0_i32_0 = arith.constant 0 : i32
    %c0_i32_1 = arith.constant 0 : i32
    return %c0_i32, %c0_i32_0 : i32, i32
  }
  func.func @transform_6(%arg0: i32) -> (i32, i32) {
    %c0_i32 = arith.constant 0 : i32
    %c0_i32_0 = arith.constant 0 : i32
    %c0_i32_1 = arith.constant 0 : i32
    return %c0_i32, %c0_i32_0 : i32, i32
  }
  func.func @transform_7(%arg0: i32) -> (i32, i32) {
    %c0_i32 = arith.constant 0 : i32
    %c0_i32_0 = arith.constant 0 : i32
    %c0_i32_1 = arith.constant 0 : i32
    return %c0_i32, %c0_i32_0 : i32, i32
  }
  func.func @transform_8(%arg0: i32) -> (i32, i32) {
    %c0_i32 = arith.constant 0 : i32
    %c0_i32_0 = arith.constant 0 : i32
    %c0_i32_1 = arith.constant 0 : i32
    return %c0_i32, %c0_i32_0 : i32, i32
  }
  func.func @transform_9(%arg0: i32) -> (i32, i32) {
    %c0_i32 = arith.constant 0 : i32
    %c0_i32_0 = arith.constant 0 : i32
    return %c0_i32, %arg0 : i32, i32
  }
}

</mosaic_0001>

<llo_original>
// kernel: tpu_custom_call.1
$region0: #{tpu_custom_call.1}
  #allocation0 [shape = 'u32[]', space=smem, size = 0x4, offset = 0x4, fixed_abs, tag = 'smem constant byte address 0x4 - core index']
  #allocation1 [shape = 'u32[144,128]{1,0:T(1,128)}', space=vmem, size = 0x12000, scoped, tag = 'internal scratch']
  %s0 = inlined_call_operand.vmem [shape: f32[4,2560], index: 0, kind: input, shape index: {}]
  %s1 = inlined_call_operand.vmem [shape: f32[128,4], index: 1, kind: input, shape index: {}]
  %s2 = inlined_call_operand.vmem [shape: f32[128,1], index: 2, kind: input, shape index: {}]
  %s3 = inlined_call_operand.vmem [shape: bf16[64,128], index: 3, kind: input, shape index: {}]
  %s4 = inlined_call_operand.vmem [shape: f32[64,1], index: 4, kind: input, shape index: {}]
  %s5 = inlined_call_operand.vmem [shape: bf16[32,64], index: 5, kind: input, shape index: {}]
  %s6 = inlined_call_operand.vmem [shape: f32[32,1], index: 6, kind: input, shape index: {}]
  %s7 = inlined_call_operand.vmem [shape: bf16[8,32], index: 7, kind: input, shape index: {}]
  %s8 = inlined_call_operand.vmem [shape: f32[8,1], index: 8, kind: input, shape index: {}]
  %s9 = inlined_call_operand.hbm [shape: f32[8,2560], index: 9, kind: output, shape index: {}]
  %s10 = sld [smem:[#allocation0]]
  $region69: #{tpu_custom_call.1} parent=0
    _
  %s12 = ssub.s32 1, %s10
  %s13 = scalar_select 0, %s12, %s10
  $region1: #{tpu_custom_call.1} parent=0
    #allocation2 [shape = 'u8[81920]{0}', space=vmem, size = 0x14000, scoped, tag = 'output window, operand 0']
    #allocation3 [shape = 's32[2]{0}', space=sflag, size = 0x8, scoped, tag = 'scoped memory for tpu_custom_call.1']
    %14 = vsyncpa [#allocation3], 0
    %s15 = scalar_lea.sflag [#allocation3], 1
    %16 = vsyncpa %s15, 0
    loop: start=0, step=1, limit=4
    $region2: #{tpu_custom_call.1} parent=1 // loop_pre_header
      _
    $region3: #{tpu_custom_call.1} parent=1 // loop_header
      %s18 = sphi 0, %s22
      %p19 = scmp.ge.s32.totalorder %s18, 4
      %s28 = sphi 0, %s30
      %s31 = sphi 0, %s28
      %s32 = sphi 0, %s31
      %s48 = sphi 0, %s32
      %s52 = sphi 0, %s52
      %s54 = sphi 0, %s52
      %s55 = sphi 0, %s54
      %s69 = sphi 0, %s55
      %s73 = sphi 0, %s73
      %s75 = sphi 0, %s73
      %s76 = sphi 0, %s75
      %s90 = sphi 0, %s76
      %s94 = sphi 0, %s94
      %s96 = sphi 0, %s94
      %s97 = sphi 0, %s96
      %s111 = sphi 0, %s97
      %s115 = sphi 0, %s115
      %s117 = sphi 0, %s115
      %s118 = sphi 0, %s117
      %s132 = sphi 0, %s118
      %s136 = sphi 0, %s136
      %s138 = sphi 0, %s136
      %s139 = sphi 0, %s138
      %s153 = sphi 0, %s139
      %s157 = sphi 0, %s157
      %s159 = sphi 0, %s157
      %s160 = sphi 0, %s159
      %s174 = sphi 0, %s160
      %s178 = sphi 0, %s178
      %s180 = sphi 0, %s178
      %s181 = sphi 0, %s180
      %s195 = sphi 0, %s181
      %s199 = sphi 0, %s199
      %s201 = sphi 0, %s199
      %s202 = sphi 0, %s201
      %s216 = sphi 0, %s202
      %s222 = sphi 0, %s224
      %s225 = sphi 0, %s222
      %s226 = sphi 0, %s225
      %s242 = sphi 0, %s226
    $region4: #{tpu_custom_call.1} parent=1 // loop_header_branch
      %21 = sbr.rel (%p19) target = $region8
    $region5: #{tpu_custom_call.1} parent=1 // loop_body
      %s23 = ssub.s32 %s18, 1
      %s24 = ssub.s32 %s18, 2
      %s25 = sadd.s32 %s18, 1
      %s26 = ssub.s32 %s18, %s25
      %p27 = scmp.eq.s32.totalorder %s26, 0
      %s29 = sadd.s32 %s28, 1
      %s30 = scalar_select %p27, %s28, %s29
      %p33 = pneg %p27
      %p34 = scmp.eq.s32.totalorder %s18, 1
      %p35 = por %p33, %p34
      %p36 = scmp.ne.s32.totalorder %s28, %s31
      %p37 = scmp.eq.s32.totalorder %s18, 0
      %p38 = por %p36, %p37
      %p39 = scmp.ne.s32.totalorder %s28, %s31
      %p40 = scmp.eq.s32.totalorder %s23, 1
      %p41 = por %p39, %p40
      %p42 = scmp.ne.s32.totalorder %s31, %s32
      %p43 = scmp.eq.s32.totalorder %s23, 0
      %p44 = por %p42, %p43
      %p45 = scmp.ne.s32.totalorder %s31, %s32
      %p46 = scmp.eq.s32.totalorder %s24, 1
      %p47 = por %p45, %p46
      %p49 = scmp.ne.s32.totalorder %s32, %s48
      %p50 = scmp.eq.s32.totalorder %s24, 0
      %p51 = por %p49, %p50
      %s53 = sadd.s32 %s52, 1
      %p56 = scmp.eq.s32.totalorder %s18, 1
      %p57 = scmp.ne.s32.totalorder %s52, %s54
      %p58 = scmp.eq.s32.totalorder %s18, 0
      %p59 = por %p57, %p58
      %p60 = scmp.ne.s32.totalorder %s52, %s54
      %p61 = scmp.eq.s32.totalorder %s23, 1
      %p62 = por %p60, %p61
      %p63 = scmp.ne.s32.totalorder %s54, %s55
      %p64 = scmp.eq.s32.totalorder %s23, 0
      %p65 = por %p63, %p64
      %p66 = scmp.ne.s32.totalorder %s54, %s55
      %p67 = scmp.eq.s32.totalorder %s24, 1
      %p68 = por %p66, %p67
      %p70 = scmp.ne.s32.totalorder %s55, %s69
      %p71 = scmp.eq.s32.totalorder %s24, 0
      %p72 = por %p70, %p71
      %s74 = sadd.s32 %s73, 1
      %p77 = scmp.eq.s32.totalorder %s18, 1
      %p78 = scmp.ne.s32.totalorder %s73, %s75
      %p79 = scmp.eq.s32.totalorder %s18, 0
      %p80 = por %p78, %p79
      %p81 = scmp.ne.s32.totalorder %s73, %s75
      %p82 = scmp.eq.s32.totalorder %s23, 1
      %p83 = por %p81, %p82
      %p84 = scmp.ne.s32.totalorder %s75, %s76
      %p85 = scmp.eq.s32.totalorder %s23, 0
      %p86 = por %p84, %p85
      %p87 = scmp.ne.s32.totalorder %s75, %s76
      %p88 = scmp.eq.s32.totalorder %s24, 1
      %p89 = por %p87, %p88
      %p91 = scmp.ne.s32.totalorder %s76, %s90
      %p92 = scmp.eq.s32.totalorder %s24, 0
      %p93 = por %p91, %p92
      %s95 = sadd.s32 %s94, 1
      %p98 = scmp.eq.s32.totalorder %s18, 1
      %p99 = scmp.ne.s32.totalorder %s94, %s96
      %p100 = scmp.eq.s32.totalorder %s18, 0
      %p101 = por %p99, %p100
      %p102 = scmp.ne.s32.totalorder %s94, %s96
      %p103 = scmp.eq.s32.totalorder %s23, 1
      %p104 = por %p102, %p103
      %p105 = scmp.ne.s32.totalorder %s96, %s97
      %p106 = scmp.eq.s32.totalorder %s23, 0
      %p107 = por %p105, %p106
      %p108 = scmp.ne.s32.totalorder %s96, %s97
      %p109 = scmp.eq.s32.totalorder %s24, 1
      %p110 = por %p108, %p109
      %p112 = scmp.ne.s32.totalorder %s97, %s111
      %p113 = scmp.eq.s32.totalorder %s24, 0
      %p114 = por %p112, %p113
      %s116 = sadd.s32 %s115, 1
      %p119 = scmp.eq.s32.totalorder %s18, 1
      %p120 = scmp.ne.s32.totalorder %s115, %s117
      %p121 = scmp.eq.s32.totalorder %s18, 0
      %p122 = por %p120, %p121
      %p123 = scmp.ne.s32.totalorder %s115, %s117
      %p124 = scmp.eq.s32.totalorder %s23, 1
      %p125 = por %p123, %p124
      %p126 = scmp.ne.s32.totalorder %s117, %s118
      %p127 = scmp.eq.s32.totalorder %s23, 0
      %p128 = por %p126, %p127
      %p129 = scmp.ne.s32.totalorder %s117, %s118
      %p130 = scmp.eq.s32.totalorder %s24, 1
      %p131 = por %p129, %p130
      %p133 = scmp.ne.s32.totalorder %s118, %s132
      %p134 = scmp.eq.s32.totalorder %s24, 0
      %p135 = por %p133, %p134
      %s137 = sadd.s32 %s136, 1
      %p140 = scmp.eq.s32.totalorder %s18, 1
      %p141 = scmp.ne.s32.totalorder %s136, %s138
      %p142 = scmp.eq.s32.totalorder %s18, 0
      %p143 = por %p141, %p142
      %p144 = scmp.ne.s32.totalorder %s136, %s138
      %p145 = scmp.eq.s32.totalorder %s23, 1
      %p146 = por %p144, %p145
      %p147 = scmp.ne.s32.totalorder %s138, %s139
      %p148 = scmp.eq.s32.totalorder %s23, 0
      %p149 = por %p147, %p148
      %p150 = scmp.ne.s32.totalorder %s138, %s139
      %p151 = scmp.eq.s32.totalorder %s24, 1
      %p152 = por %p150, %p151
      %p154 = scmp.ne.s32.totalorder %s139, %s153
      %p155 = scmp.eq.s32.totalorder %s24, 0
      %p156 = por %p154, %p155
      %s158 = sadd.s32 %s157, 1
      %p161 = scmp.eq.s32.totalorder %s18, 1
      %p162 = scmp.ne.s32.totalorder %s157, %s159
      %p163 = scmp.eq.s32.totalorder %s18, 0
      %p164 = por %p162, %p163
      %p165 = scmp.ne.s32.totalorder %s157, %s159
      %p166 = scmp.eq.s32.totalorder %s23, 1
      %p167 = por %p165, %p166
      %p168 = scmp.ne.s32.totalorder %s159, %s160
      %p169 = scmp.eq.s32.totalorder %s23, 0
      %p170 = por %p168, %p169
      %p171 = scmp.ne.s32.totalorder %s159, %s160
      %p172 = scmp.eq.s32.totalorder %s24, 1
      %p173 = por %p171, %p172
      %p175 = scmp.ne.s32.totalorder %s160, %s174
      %p176 = scmp.eq.s32.totalorder %s24, 0
      %p177 = por %p175, %p176
      %s179 = sadd.s32 %s178, 1
      %p182 = scmp.eq.s32.totalorder %s18, 1
      %p183 = scmp.ne.s32.totalorder %s178, %s180
      %p184 = scmp.eq.s32.totalorder %s18, 0
      %p185 = por %p183, %p184
      %p186 = scmp.ne.s32.totalorder %s178, %s180
      %p187 = scmp.eq.s32.totalorder %s23, 1
      %p188 = por %p186, %p187
      %p189 = scmp.ne.s32.totalorder %s180, %s181
      %p190 = scmp.eq.s32.totalorder %s23, 0
      %p191 = por %p189, %p190
      %p192 = scmp.ne.s32.totalorder %s180, %s181
      %p193 = scmp.eq.s32.totalorder %s24, 1
      %p194 = por %p192, %p193
      %p196 = scmp.ne.s32.totalorder %s181, %s195
      %p197 = scmp.eq.s32.totalorder %s24, 0
      %p198 = por %p196, %p197
      %s200 = sadd.s32 %s199, 1
      %p203 = scmp.eq.s32.totalorder %s18, 1
      %p204 = scmp.ne.s32.totalorder %s199, %s201
      %p205 = scmp.eq.s32.totalorder %s18, 0
      %p206 = por %p204, %p205
      %p207 = scmp.ne.s32.totalorder %s199, %s201
      %p208 = scmp.eq.s32.totalorder %s23, 1
      %p209 = por %p207, %p208
      %p210 = scmp.ne.s32.totalorder %s201, %s202
      %p211 = scmp.eq.s32.totalorder %s23, 0
      %p212 = por %p210, %p211
      %p213 = scmp.ne.s32.totalorder %s201, %s202
      %p214 = scmp.eq.s32.totalorder %s24, 1
      %p215 = por %p213, %p214
      %p217 = scmp.ne.s32.totalorder %s202, %s216
      %p218 = scmp.eq.s32.totalorder %s24, 0
      %p219 = por %p217, %p218
      %s220 = ssub.s32 %s18, %s25
      %p221 = scmp.eq.s32.totalorder %s220, 0
      %s223 = sadd.s32 %s222, 1
      %s224 = scalar_select %p221, %s222, %s223
      %p227 = pneg %p221
      %p228 = scmp.eq.s32.totalorder %s18, 1
      %p229 = por %p227, %p228
      %p230 = scmp.ne.s32.totalorder %s222, %s225
      %p231 = scmp.eq.s32.totalorder %s18, 0
      %p232 = por %p230, %p231
      %p233 = scmp.ne.s32.totalorder %s222, %s225
      %p234 = scmp.eq.s32.totalorder %s23, 1
      %p235 = por %p233, %p234
      %p236 = scmp.ne.s32.totalorder %s225, %s226
      %p237 = scmp.eq.s32.totalorder %s23, 0
      %p238 = por %p236, %p237
      %p239 = scmp.ne.s32.totalorder %s225, %s226
      %p240 = scmp.eq.s32.totalorder %s24, 1
      %p241 = por %p239, %p240
      %p243 = scmp.ne.s32.totalorder %s226, %s242
      %p244 = scmp.eq.s32.totalorder %s24, 0
      %p245 = por %p243, %p244
      %p246 = scmp.le.s32.totalorder 1, %s18
      %p247 = scmp.lt.s32.totalorder %s18, 3
      %p248 = pnand %p246, %p247
      %p249 = pneg %p248
      // Predicated region
      $region9: #{tpu_custom_call.1} parent=5 // pred_check
        _
      $region10: #{tpu_custom_call.1} parent=5 // pred_check_branch
        %251 = sbr.rel (%p248) target = $region12
      $region11: #{tpu_custom_call.1} parent=5 // pred_region
        %s252 = ssub.s32 %s18, 1
        // Predicated region
        $region13: #{tpu_custom_call.1} parent=11 // pred_check
          %p253 = pneg %p65
        $region14: #{tpu_custom_call.1} parent=11 // pred_check_branch
          %255 = sbr.rel (%p253) target = $region16
        $region15: #{tpu_custom_call.1} parent=11 // pred_region
          _
        $region16: #{tpu_custom_call.1} parent=11 // pred_fallthru
          _
        // Predicated region
        $region17: #{tpu_custom_call.1} parent=11 // pred_check
          %p256 = pneg %p86
        $region18: #{tpu_custom_call.1} parent=11 // pred_check_branch
          %258 = sbr.rel (%p256) target = $region20
        $region19: #{tpu_custom_call.1} parent=11 // pred_region
          _
        $region20: #{tpu_custom_call.1} parent=11 // pred_fallthru
          _
        // Predicated region
        $region21: #{tpu_custom_call.1} parent=11 // pred_check
          %p259 = pneg %p107
        $region22: #{tpu_custom_call.1} parent=11 // pred_check_branch
          %261 = sbr.rel (%p259) target = $region24
        $region23: #{tpu_custom_call.1} parent=11 // pred_region
          _
        $region24: #{tpu_custom_call.1} parent=11 // pred_fallthru
          _
        // Predicated region
        $region25: #{tpu_custom_call.1} parent=11 // pred_check
          %p262 = pneg %p128
        $region26: #{tpu_custom_call.1} parent=11 // pred_check_branch
          %264 = sbr.rel (%p262) target = $region28
        $region27: #{tpu_custom_call.1} parent=11 // pred_region
          _
        $region28: #{tpu_custom_call.1} parent=11 // pred_fallthru
          _
        // Predicated region
        $region29: #{tpu_custom_call.1} parent=11 // pred_check
          %p265 = pneg %p149
        $region30: #{tpu_custom_call.1} parent=11 // pred_check_branch
          %267 = sbr.rel (%p265) target = $region32
        $region31: #{tpu_custom_call.1} parent=11 // pred_region
          _
        $region32: #{tpu_custom_call.1} parent=11 // pred_fallthru
          _
        // Predicated region
        $region33: #{tpu_custom_call.1} parent=11 // pred_check
          %p268 = pneg %p170
        $region34: #{tpu_custom_call.1} parent=11 // pred_check_branch
          %270 = sbr.rel (%p268) target = $region36
        $region35: #{tpu_custom_call.1} parent=11 // pred_region
          _
        $region36: #{tpu_custom_call.1} parent=11 // pred_fallthru
          _
        // Predicated region
        $region37: #{tpu_custom_call.1} parent=11 // pred_check
          %p271 = pneg %p191
        $region38: #{tpu_custom_call.1} parent=11 // pred_check_branch
          %273 = sbr.rel (%p271) target = $region40
        $region39: #{tpu_custom_call.1} parent=11 // pred_region
          _
        $region40: #{tpu_custom_call.1} parent=11 // pred_fallthru
          _
        // Predicated region
        $region41: #{tpu_custom_call.1} parent=11 // pred_check
          %p274 = pneg %p212
        $region42: #{tpu_custom_call.1} parent=11 // pred_check_branch
          %276 = sbr.rel (%p274) target = $region44
        $region43: #{tpu_custom_call.1} parent=11 // pred_region
          _
        $region44: #{tpu_custom_call.1} parent=11 // pred_fallthru
          _
      $region12: #{tpu_custom_call.1} parent=5 // pred_fallthru
        _
      %p277 = scmp.lt.s32.totalorder %s18, 2
      // Predicated region
      $region45: #{tpu_custom_call.1} parent=5 // pred_check
        %p278 = pneg %p277
      $region46: #{tpu_custom_call.1} parent=5 // pred_check_branch
        %280 = sbr.rel (%p278) target = $region48
      $region47: #{tpu_custom_call.1} parent=5 // pred_region
        // Predicated region
        $region49: #{tpu_custom_call.1} parent=47 // pred_check
          %p281 = pneg %p38
        $region50: #{tpu_custom_call.1} parent=47 // pred_check_branch
          %283 = sbr.rel (%p281) target = $region52
        $region51: #{tpu_custom_call.1} parent=47 // pred_region
          %s284 = smul.u32 10, %s18
          %p285 = scmp.lt.s32.totalorder %s284, 19
          %s286 = scalar_select %p285, %s284, 19
          %s287 = smul.addr %s286, 4
          %s288 = scalar_lea.vmem %s0, %s287
          %s289 = smul.u32 10, %s18
        $region52: #{tpu_custom_call.1} parent=47 // pred_fallthru
          _
      $region48: #{tpu_custom_call.1} parent=5 // pred_fallthru
        _
      %p290 = scmp.le.s32.totalorder 1, %s18
      %p291 = scmp.lt.s32.totalorder %s18, 3
      %p292 = pnand %p290, %p291
      %p293 = pneg %p292
      // Predicated region
      $region53: #{tpu_custom_call.1} parent=5 // pred_check
        _
      $region54: #{tpu_custom_call.1} parent=5 // pred_check_branch
        %295 = sbr.rel (%p292) target = $region56
      $region55: #{tpu_custom_call.1} parent=5 // pred_region
        %s296 = ssub.s32 %s18, 1
        %s297 = smul.u32 10, %s23
        %p298 = scmp.lt.s32.totalorder %s297, 19
        %s299 = scalar_select %p298, %s297, 19
        %s300 = smul.addr %s299, 4
        %s301 = scalar_lea.vmem %s0, %s300
        %p302 = pneg %p44
        %p303 = pneg %p41
        %p304 = pneg %p65
        %p305 = pneg %p62
        %p306 = pneg %p86
        %p307 = pneg %p83
        %p308 = pneg %p107
        %p309 = pneg %p104
        %p310 = pneg %p128
        %p311 = pneg %p125
        %p312 = pneg %p149
        %p313 = pneg %p146
        %p314 = pneg %p170
        %p315 = pneg %p167
        %p316 = pneg %p191
        %p317 = pneg %p188
        %p318 = pneg %p212
        %p319 = pneg %p209
        %p320 = pneg %p238
        %p321 = pneg %p235
        %s322 = sand.u32 %s225, 1
        %s323 = scalar_lea.sflag [#allocation3], %s322
        %s324 = sand.u32 %s225, 1
        %s325 = smul.addr %s324, 80
        %s326 = scalar_lea.vmem [#allocation2], %s325
        %s327 = smul.u32 10, %s23
        %p328 = scmp.lt.s32.totalorder %s327, 19
        %s329 = scalar_select %p328, %s327, 19
        %s330 = smul.addr %s329, 4
        %s331 = scalar_lea.vmem %s0, %s330
        %s332 = smul.u32 10, %s23
        %s333 = smul.u32 10, %s23
        %v335 = vld [vmem:[%s331] sm:$0xff]
        %v336 = vld [vmem:[%s331 + $0x8] sm:$0xff]
        %v337 = vld [vmem:[%s331 + $0x10] sm:$0xff]
        %v338 = vld [vmem:[%s331 + $0x18] sm:$0xff]
        %v339 = vld [vmem:[%s331 + $0x20] sm:$0xff]
        %v340 = vld [vmem:[%s1] sm:$0xff]
        %v341 = vld [vmem:[%s1 + $0x8] sm:$0xff]
        %v342 = vld [vmem:[%s1 + $0x10] sm:$0xff]
        %v343 = vld [vmem:[%s1 + $0x18] sm:$0xff]
        %v344 = vld [vmem:[%s1 + $0x20] sm:$0xff]
        %v345 = vld [vmem:[%s1 + $0x28] sm:$0xff]
        %v346 = vld [vmem:[%s1 + $0x30] sm:$0xff]
        %v347 = vld [vmem:[%s1 + $0x38] sm:$0xff]
        %v348 = vld [vmem:[%s1 + $0x40] sm:$0xff]
        %v349 = vld [vmem:[%s1 + $0x48] sm:$0xff]
        %v350 = vld [vmem:[%s1 + $0x50] sm:$0xff]
        %v351 = vld [vmem:[%s1 + $0x58] sm:$0xff]
        %v352 = vld [vmem:[%s1 + $0x60] sm:$0xff]
        %v353 = vld [vmem:[%s1 + $0x68] sm:$0xff]
        %v354 = vld [vmem:[%s1 + $0x70] sm:$0xff]
        %v355 = vld [vmem:[%s1 + $0x78] sm:$0xff]
        %v356 = vld [vmem:[%s2] sm:$0xff]
        %v357 = vld [vmem:[%s2 + $0x8] sm:$0xff]
        %v358 = vld [vmem:[%s2 + $0x10] sm:$0xff]
        %v359 = vld [vmem:[%s2 + $0x18] sm:$0xff]
        %v360 = vld [vmem:[%s2 + $0x20] sm:$0xff]
        %v361 = vld [vmem:[%s2 + $0x28] sm:$0xff]
        %v362 = vld [vmem:[%s2 + $0x30] sm:$0xff]
        %v363 = vld [vmem:[%s2 + $0x38] sm:$0xff]
        %v364 = vld [vmem:[%s2 + $0x40] sm:$0xff]
        %v365 = vld [vmem:[%s2 + $0x48] sm:$0xff]
        %v366 = vld [vmem:[%s2 + $0x50] sm:$0xff]
        %v367 = vld [vmem:[%s2 + $0x58] sm:$0xff]
        %v368 = vld [vmem:[%s2 + $0x60] sm:$0xff]
        %v369 = vld [vmem:[%s2 + $0x68] sm:$0xff]
        %v370 = vld [vmem:[%s2 + $0x70] sm:$0xff]
        %v371 = vld [vmem:[%s2 + $0x78] sm:$0xff]
        %373 = vset.pattern.permute.xlu0 0
        %374 = vperm.xlu0 %373, %v340
        %v375 = vpop.permute.xlu0 %374
        %378 = vset.pattern.permute.xlu0 0
        %379 = vperm.xlu0 %378, %v341
        %v380 = vpop.permute.xlu0 %379
        %383 = vset.pattern.permute.xlu0 0
        %384 = vperm.xlu0 %383, %v342
        %v385 = vpop.permute.xlu0 %384
        %388 = vset.pattern.permute.xlu0 0
        %389 = vperm.xlu0 %388, %v343
        %v390 = vpop.permute.xlu0 %389
        %393 = vset.pattern.permute.xlu0 0
        %394 = vperm.xlu0 %393, %v344
        %v395 = vpop.permute.xlu0 %394
        %398 = vset.pattern.permute.xlu0 0
        %399 = vperm.xlu0 %398, %v345
        %v400 = vpop.permute.xlu0 %399
        %403 = vset.pattern.permute.xlu0 0
        %404 = vperm.xlu0 %403, %v346
        %v405 = vpop.permute.xlu0 %404
        %408 = vset.pattern.permute.xlu0 0
        %409 = vperm.xlu0 %408, %v347
        %v410 = vpop.permute.xlu0 %409
        %413 = vset.pattern.permute.xlu0 0
        %414 = vperm.xlu0 %413, %v348
        %v415 = vpop.permute.xlu0 %414
        %418 = vset.pattern.permute.xlu0 0
        %419 = vperm.xlu0 %418, %v349
        %v420 = vpop.permute.xlu0 %419
        %423 = vset.pattern.permute.xlu0 0
        %424 = vperm.xlu0 %423, %v350
        %v425 = vpop.permute.xlu0 %424
        %428 = vset.pattern.permute.xlu0 0
        %429 = vperm.xlu0 %428, %v351
        %v430 = vpop.permute.xlu0 %429
        %433 = vset.pattern.permute.xlu0 0
        %434 = vperm.xlu0 %433, %v352
        %v435 = vpop.permute.xlu0 %434
        %438 = vset.pattern.permute.xlu0 0
        %439 = vperm.xlu0 %438, %v353
        %v440 = vpop.permute.xlu0 %439
        %443 = vset.pattern.permute.xlu0 0
        %444 = vperm.xlu0 %443, %v354
        %v445 = vpop.permute.xlu0 %444
        %448 = vset.pattern.permute.xlu0 0
        %449 = vperm.xlu0 %448, %v355
        %v450 = vpop.permute.xlu0 %449
        %v457 = vlaneseq
        %v458 = vshrl.u32 %v457, 7
        %v459 = vsub.s32 0, %v458
        %v460 = vrot.slane %v335, %v459
        %v461 = vlaneseq
        %v462 = vshrl.u32 %v461, 7
        %v463 = vsub.s32 4, %v462
        %v464 = vrot.slane %v335, %v463
        %v465 = vlaneseq
        %v466 = vshrl.u32 %v465, 7
        %v467 = vsub.s32 0, %v466
        %v468 = vrot.slane %v336, %v467
        %v469 = vlaneseq
        %v470 = vshrl.u32 %v469, 7
        %v471 = vsub.s32 4, %v470
        %v472 = vrot.slane %v336, %v471
        %v473 = vlaneseq
        %v474 = vshrl.u32 %v473, 7
        %v475 = vsub.s32 0, %v474
        %v476 = vrot.slane %v337, %v475
        %v477 = vlaneseq
        %v478 = vshrl.u32 %v477, 7
        %v479 = vsub.s32 4, %v478
        %v480 = vrot.slane %v337, %v479
        %v481 = vlaneseq
        %v482 = vshrl.u32 %v481, 7
        %v483 = vsub.s32 0, %v482
        %v484 = vrot.slane %v338, %v483
        %v485 = vlaneseq
        %v486 = vshrl.u32 %v485, 7
        %v487 = vsub.s32 4, %v486
        %v488 = vrot.slane %v338, %v487
        %v489 = vlaneseq
        %v490 = vshrl.u32 %v489, 7
        %v491 = vsub.s32 0, %v490
        %v492 = vrot.slane %v339, %v491
        %v493 = vlaneseq
        %v494 = vshrl.u32 %v493, 7
        %v495 = vsub.s32 4, %v494
        %v496 = vrot.slane %v339, %v495
        %v507 = vlaneseq
        %v508 = vshrl.u32 %v507, 7
        %v509 = vsub.s32 0, %v508
        %v510 = vrot.slane %v460, %v509
        %v511 = vlaneseq
        %v512 = vshrl.u32 %v511, 7
        %v513 = vsub.s32 0, %v512
        %v514 = vrot.slane %v464, %v513
        %v515 = vlaneseq
        %v516 = vshrl.u32 %v515, 7
        %v517 = vsub.s32 0, %v516
        %v518 = vrot.slane %v468, %v517
        %v519 = vlaneseq
        %v520 = vshrl.u32 %v519, 7
        %v521 = vsub.s32 0, %v520
        %v522 = vrot.slane %v472, %v521
        %v523 = vlaneseq
        %v524 = vshrl.u32 %v523, 7
        %v525 = vsub.s32 0, %v524
        %v526 = vrot.slane %v476, %v525
        %v527 = vlaneseq
        %v528 = vshrl.u32 %v527, 7
        %v529 = vsub.s32 0, %v528
        %v530 = vrot.slane %v480, %v529
        %v531 = vlaneseq
        %v532 = vshrl.u32 %v531, 7
        %v533 = vsub.s32 0, %v532
        %v534 = vrot.slane %v484, %v533
        %v535 = vlaneseq
        %v536 = vshrl.u32 %v535, 7
        %v537 = vsub.s32 0, %v536
        %v538 = vrot.slane %v488, %v537
        %v539 = vlaneseq
        %v540 = vshrl.u32 %v539, 7
        %v541 = vsub.s32 0, %v540
        %v542 = vrot.slane %v492, %v541
        %v543 = vlaneseq
        %v544 = vshrl.u32 %v543, 7
        %v545 = vsub.s32 0, %v544
        %v546 = vrot.slane %v496, %v545
        %v547 = vmul.f32 %v375, %v510
        %v548 = vmul.f32 %v375, %v514
        %v549 = vmul.f32 %v375, %v518
        %v550 = vmul.f32 %v375, %v522
        %v551 = vmul.f32 %v375, %v526
        %v552 = vmul.f32 %v375, %v530
        %v553 = vmul.f32 %v375, %v534
        %v554 = vmul.f32 %v375, %v538
        %v555 = vmul.f32 %v375, %v542
        %v556 = vmul.f32 %v375, %v546
        %v557 = vmul.f32 %v380, %v510
        %v558 = vmul.f32 %v380, %v514
        %v559 = vmul.f32 %v380, %v518
        %v560 = vmul.f32 %v380, %v522
        %v561 = vmul.f32 %v380, %v526
        %v562 = vmul.f32 %v380, %v530
        %v563 = vmul.f32 %v380, %v534
        %v564 = vmul.f32 %v380, %v538
        %v565 = vmul.f32 %v380, %v542
        %v566 = vmul.f32 %v380, %v546
        %v567 = vmul.f32 %v385, %v510
        %v568 = vmul.f32 %v385, %v514
        %v569 = vmul.f32 %v385, %v518
        %v570 = vmul.f32 %v385, %v522
        %v571 = vmul.f32 %v385, %v526
        %v572 = vmul.f32 %v385, %v530
        %v573 = vmul.f32 %v385, %v534
        %v574 = vmul.f32 %v385, %v538
        %v575 = vmul.f32 %v385, %v542
        %v576 = vmul.f32 %v385, %v546
        %v577 = vmul.f32 %v390, %v510
        %v578 = vmul.f32 %v390, %v514
        %v579 = vmul.f32 %v390, %v518
        %v580 = vmul.f32 %v390, %v522
        %v581 = vmul.f32 %v390, %v526
        %v582 = vmul.f32 %v390, %v530
        %v583 = vmul.f32 %v390, %v534
        %v584 = vmul.f32 %v390, %v538
        %v585 = vmul.f32 %v390, %v542
        %v586 = vmul.f32 %v390, %v546
        %v587 = vmul.f32 %v395, %v510
        %v588 = vmul.f32 %v395, %v514
        %v589 = vmul.f32 %v395, %v518
        %v590 = vmul.f32 %v395, %v522
        %v591 = vmul.f32 %v395, %v526
        %v592 = vmul.f32 %v395, %v530
        %v593 = vmul.f32 %v395, %v534
        %v594 = vmul.f32 %v395, %v538
        %v595 = vmul.f32 %v395, %v542
        %v596 = vmul.f32 %v395, %v546
        %v597 = vmul.f32 %v400, %v510
        %v598 = vmul.f32 %v400, %v514
        %v599 = vmul.f32 %v400, %v518
        %v600 = vmul.f32 %v400, %v522
        %v601 = vmul.f32 %v400, %v526
        %v602 = vmul.f32 %v400, %v530
        %v603 = vmul.f32 %v400, %v534
        %v604 = vmul.f32 %v400, %v538
        %v605 = vmul.f32 %v400, %v542
        %v606 = vmul.f32 %v400, %v546
        %v607 = vmul.f32 %v405, %v510
        %v608 = vmul.f32 %v405, %v514
        %v609 = vmul.f32 %v405, %v518
        %v610 = vmul.f32 %v405, %v522
        %v611 = vmul.f32 %v405, %v526
        %v612 = vmul.f32 %v405, %v530
        %v613 = vmul.f32 %v405, %v534
        %v614 = vmul.f32 %v405, %v538
        %v615 = vmul.f32 %v405, %v542
        %v616 = vmul.f32 %v405, %v546
        %v617 = vmul.f32 %v410, %v510
        %v618 = vmul.f32 %v410, %v514
        %v619 = vmul.f32 %v410, %v518
        %v620 = vmul.f32 %v410, %v522
        %v621 = vmul.f32 %v410, %v526
        %v622 = vmul.f32 %v410, %v530
        %v623 = vmul.f32 %v410, %v534
        %v624 = vmul.f32 %v410, %v538
        %v625 = vmul.f32 %v410, %v542
        %v626 = vmul.f32 %v410, %v546
        %v627 = vmul.f32 %v415, %v510
        %v628 = vmul.f32 %v415, %v514
        %v629 = vmul.f32 %v415, %v518
        %v630 = vmul.f32 %v415, %v522
        %v631 = vmul.f32 %v415, %v526
        %v632 = vmul.f32 %v415, %v530
        %v633 = vmul.f32 %v415, %v534
        %v634 = vmul.f32 %v415, %v538
        %v635 = vmul.f32 %v415, %v542
        %v636 = vmul.f32 %v415, %v546
        %v637 = vmul.f32 %v420, %v510
        %v638 = vmul.f32 %v420, %v514
        %v639 = vmul.f32 %v420, %v518
        %v640 = vmul.f32 %v420, %v522
        %v641 = vmul.f32 %v420, %v526
        %v642 = vmul.f32 %v420, %v530
        %v643 = vmul.f32 %v420, %v534
        %v644 = vmul.f32 %v420, %v538
        %v645 = vmul.f32 %v420, %v542
        %v646 = vmul.f32 %v420, %v546
        %v647 = vmul.f32 %v425, %v510
        %v648 = vmul.f32 %v425, %v514
        %v649 = vmul.f32 %v425, %v518
        %v650 = vmul.f32 %v425, %v522
        %v651 = vmul.f32 %v425, %v526
        %v652 = vmul.f32 %v425, %v530
        %v653 = vmul.f32 %v425, %v534
        %v654 = vmul.f32 %v425, %v538
        %v655 = vmul.f32 %v425, %v542
        %v656 = vmul.f32 %v425, %v546
        %v657 = vmul.f32 %v430, %v510
        %v658 = vmul.f32 %v430, %v514
        %v659 = vmul.f32 %v430, %v518
        %v660 = vmul.f32 %v430, %v522
        %v661 = vmul.f32 %v430, %v526
        %v662 = vmul.f32 %v430, %v530
        %v663 = vmul.f32 %v430, %v534
        %v664 = vmul.f32 %v430, %v538
        %v665 = vmul.f32 %v430, %v542
        %v666 = vmul.f32 %v430, %v546
        %v667 = vmul.f32 %v435, %v510
        %v668 = vmul.f32 %v435, %v514
        %v669 = vmul.f32 %v435, %v518
        %v670 = vmul.f32 %v435, %v522
        %v671 = vmul.f32 %v435, %v526
        %v672 = vmul.f32 %v435, %v530
        %v673 = vmul.f32 %v435, %v534
        %v674 = vmul.f32 %v435, %v538
        %v675 = vmul.f32 %v435, %v542
        %v676 = vmul.f32 %v435, %v546
        %v677 = vmul.f32 %v440, %v510
        %v678 = vmul.f32 %v440, %v514
        %v679 = vmul.f32 %v440, %v518
        %v680 = vmul.f32 %v440, %v522
        %v681 = vmul.f32 %v440, %v526
        %v682 = vmul.f32 %v440, %v530
        %v683 = vmul.f32 %v440, %v534
        %v684 = vmul.f32 %v440, %v538
        %v685 = vmul.f32 %v440, %v542
        %v686 = vmul.f32 %v440, %v546
        %v687 = vmul.f32 %v445, %v510
        %v688 = vmul.f32 %v445, %v514
        %v689 = vmul.f32 %v445, %v518
        %v690 = vmul.f32 %v445, %v522
        %v691 = vmul.f32 %v445, %v526
        %v692 = vmul.f32 %v445, %v530
        %v693 = vmul.f32 %v445, %v534
        %v694 = vmul.f32 %v445, %v538
        %v695 = vmul.f32 %v445, %v542
        %v696 = vmul.f32 %v445, %v546
        %v697 = vmul.f32 %v450, %v510
        %v698 = vmul.f32 %v450, %v514
        %v699 = vmul.f32 %v450, %v518
        %v700 = vmul.f32 %v450, %v522
        %v701 = vmul.f32 %v450, %v526
        %v702 = vmul.f32 %v450, %v530
        %v703 = vmul.f32 %v450, %v534
        %v704 = vmul.f32 %v450, %v538
        %v705 = vmul.f32 %v450, %v542
        %v706 = vmul.f32 %v450, %v546
        %708 = vset.pattern.permute.xlu0 0
        %709 = vperm.xlu0 %708, %v356
        %v710 = vpop.permute.xlu0 %709
        %713 = vset.pattern.permute.xlu0 0
        %714 = vperm.xlu0 %713, %v357
        %v715 = vpop.permute.xlu0 %714
        %718 = vset.pattern.permute.xlu0 0
        %719 = vperm.xlu0 %718, %v358
        %v720 = vpop.permute.xlu0 %719
        %723 = vset.pattern.permute.xlu0 0
        %724 = vperm.xlu0 %723, %v359
        %v725 = vpop.permute.xlu0 %724
        %728 = vset.pattern.permute.xlu0 0
        %729 = vperm.xlu0 %728, %v360
        %v730 = vpop.permute.xlu0 %729
        %733 = vset.pattern.permute.xlu0 0
        %734 = vperm.xlu0 %733, %v361
        %v735 = vpop.permute.xlu0 %734
        %738 = vset.pattern.permute.xlu0 0
        %739 = vperm.xlu0 %738, %v362
        %v740 = vpop.permute.xlu0 %739
        %743 = vset.pattern.permute.xlu0 0
        %744 = vperm.xlu0 %743, %v363
        %v745 = vpop.permute.xlu0 %744
        %748 = vset.pattern.permute.xlu0 0
        %749 = vperm.xlu0 %748, %v364
        %v750 = vpop.permute.xlu0 %749
        %753 = vset.pattern.permute.xlu0 0
        %754 = vperm.xlu0 %753, %v365
        %v755 = vpop.permute.xlu0 %754
        %758 = vset.pattern.permute.xlu0 0
        %759 = vperm.xlu0 %758, %v366
        %v760 = vpop.permute.xlu0 %759
        %763 = vset.pattern.permute.xlu0 0
        %764 = vperm.xlu0 %763, %v367
        %v765 = vpop.permute.xlu0 %764
        %768 = vset.pattern.permute.xlu0 0
        %769 = vperm.xlu0 %768, %v368
        %v770 = vpop.permute.xlu0 %769
        %773 = vset.pattern.permute.xlu0 0
        %774 = vperm.xlu0 %773, %v369
        %v775 = vpop.permute.xlu0 %774
        %778 = vset.pattern.permute.xlu0 0
        %779 = vperm.xlu0 %778, %v370
        %v780 = vpop.permute.xlu0 %779
        %783 = vset.pattern.permute.xlu0 0
        %784 = vperm.xlu0 %783, %v371
        %v785 = vpop.permute.xlu0 %784
        %v787 = vadd.f32 %v710, %v547
        %v788 = vadd.f32 %v710, %v548
        %v789 = vadd.f32 %v710, %v549
        %v790 = vadd.f32 %v710, %v550
        %v791 = vadd.f32 %v710, %v551
        %v792 = vadd.f32 %v710, %v552
        %v793 = vadd.f32 %v710, %v553
        %v794 = vadd.f32 %v710, %v554
        %v795 = vadd.f32 %v710, %v555
        %v796 = vadd.f32 %v710, %v556
        %v797 = vadd.f32 %v715, %v557
        %v798 = vadd.f32 %v715, %v558
        %v799 = vadd.f32 %v715, %v559
        %v800 = vadd.f32 %v715, %v560
        %v801 = vadd.f32 %v715, %v561
        %v802 = vadd.f32 %v715, %v562
        %v803 = vadd.f32 %v715, %v563
        %v804 = vadd.f32 %v715, %v564
        %v805 = vadd.f32 %v715, %v565
        %v806 = vadd.f32 %v715, %v566
        %v807 = vadd.f32 %v720, %v567
        %v808 = vadd.f32 %v720, %v568
        %v809 = vadd.f32 %v720, %v569
        %v810 = vadd.f32 %v720, %v570
        %v811 = vadd.f32 %v720, %v571
        %v812 = vadd.f32 %v720, %v572
        %v813 = vadd.f32 %v720, %v573
        %v814 = vadd.f32 %v720, %v574
        %v815 = vadd.f32 %v720, %v575
        %v816 = vadd.f32 %v720, %v576
        %v817 = vadd.f32 %v725, %v577
        %v818 = vadd.f32 %v725, %v578
        %v819 = vadd.f32 %v725, %v579
        %v820 = vadd.f32 %v725, %v580
        %v821 = vadd.f32 %v725, %v581
        %v822 = vadd.f32 %v725, %v582
        %v823 = vadd.f32 %v725, %v583
        %v824 = vadd.f32 %v725, %v584
        %v825 = vadd.f32 %v725, %v585
        %v826 = vadd.f32 %v725, %v586
        %v827 = vadd.f32 %v730, %v587
        %v828 = vadd.f32 %v730, %v588
        %v829 = vadd.f32 %v730, %v589
        %v830 = vadd.f32 %v730, %v590
        %v831 = vadd.f32 %v730, %v591
        %v832 = vadd.f32 %v730, %v592
        %v833 = vadd.f32 %v730, %v593
        %v834 = vadd.f32 %v730, %v594
        %v835 = vadd.f32 %v730, %v595
        %v836 = vadd.f32 %v730, %v596
        %v837 = vadd.f32 %v735, %v597
        %v838 = vadd.f32 %v735, %v598
        %v839 = vadd.f32 %v735, %v599
        %v840 = vadd.f32 %v735, %v600
        %v841 = vadd.f32 %v735, %v601
        %v842 = vadd.f32 %v735, %v602
        %v843 = vadd.f32 %v735, %v603
        %v844 = vadd.f32 %v735, %v604
        %v845 = vadd.f32 %v735, %v605
        %v846 = vadd.f32 %v735, %v606
        %v847 = vadd.f32 %v740, %v607
        %v848 = vadd.f32 %v740, %v608
        %v849 = vadd.f32 %v740, %v609
        %v850 = vadd.f32 %v740, %v610
        %v851 = vadd.f32 %v740, %v611
        %v852 = vadd.f32 %v740, %v612
        %v853 = vadd.f32 %v740, %v613
        %v854 = vadd.f32 %v740, %v614
        %v855 = vadd.f32 %v740, %v615
        %v856 = vadd.f32 %v740, %v616
        %v857 = vadd.f32 %v745, %v617
        %v858 = vadd.f32 %v745, %v618
        %v859 = vadd.f32 %v745, %v619
        %v860 = vadd.f32 %v745, %v620
        %v861 = vadd.f32 %v745, %v621
        %v862 = vadd.f32 %v745, %v622
        %v863 = vadd.f32 %v745, %v623
        %v864 = vadd.f32 %v745, %v624
        %v865 = vadd.f32 %v745, %v625
        %v866 = vadd.f32 %v745, %v626
        %v867 = vadd.f32 %v750, %v627
        %v868 = vadd.f32 %v750, %v628
        %v869 = vadd.f32 %v750, %v629
        %v870 = vadd.f32 %v750, %v630
        %v871 = vadd.f32 %v750, %v631
        %v872 = vadd.f32 %v750, %v632
        %v873 = vadd.f32 %v750, %v633
        %v874 = vadd.f32 %v750, %v634
        %v875 = vadd.f32 %v750, %v635
        %v876 = vadd.f32 %v750, %v636
        %v877 = vadd.f32 %v755, %v637
        %v878 = vadd.f32 %v755, %v638
        %v879 = vadd.f32 %v755, %v639
        %v880 = vadd.f32 %v755, %v640
        %v881 = vadd.f32 %v755, %v641
        %v882 = vadd.f32 %v755, %v642
        %v883 = vadd.f32 %v755, %v643
        %v884 = vadd.f32 %v755, %v644
        %v885 = vadd.f32 %v755, %v645
        %v886 = vadd.f32 %v755, %v646
        %v887 = vadd.f32 %v760, %v647
        %v888 = vadd.f32 %v760, %v648
        %v889 = vadd.f32 %v760, %v649
        %v890 = vadd.f32 %v760, %v650
        %v891 = vadd.f32 %v760, %v651
        %v892 = vadd.f32 %v760, %v652
        %v893 = vadd.f32 %v760, %v653
        %v894 = vadd.f32 %v760, %v654
        %v895 = vadd.f32 %v760, %v655
        %v896 = vadd.f32 %v760, %v656
        %v897 = vadd.f32 %v765, %v657
        %v898 = vadd.f32 %v765, %v658
        %v899 = vadd.f32 %v765, %v659
        %v900 = vadd.f32 %v765, %v660
        %v901 = vadd.f32 %v765, %v661
        %v902 = vadd.f32 %v765, %v662
        %v903 = vadd.f32 %v765, %v663
        %v904 = vadd.f32 %v765, %v664
        %v905 = vadd.f32 %v765, %v665
        %v906 = vadd.f32 %v765, %v666
        %v907 = vadd.f32 %v770, %v667
        %v908 = vadd.f32 %v770, %v668
        %v909 = vadd.f32 %v770, %v669
        %v910 = vadd.f32 %v770, %v670
        %v911 = vadd.f32 %v770, %v671
        %v912 = vadd.f32 %v770, %v672
        %v913 = vadd.f32 %v770, %v673
        %v914 = vadd.f32 %v770, %v674
        %v915 = vadd.f32 %v770, %v675
        %v916 = vadd.f32 %v770, %v676
        %v917 = vadd.f32 %v775, %v677
        %v918 = vadd.f32 %v775, %v678
        %v919 = vadd.f32 %v775, %v679
        %v920 = vadd.f32 %v775, %v680
        %v921 = vadd.f32 %v775, %v681
        %v922 = vadd.f32 %v775, %v682
        %v923 = vadd.f32 %v775, %v683
        %v924 = vadd.f32 %v775, %v684
        %v925 = vadd.f32 %v775, %v685
        %v926 = vadd.f32 %v775, %v686
        %v927 = vadd.f32 %v780, %v687
        %v928 = vadd.f32 %v780, %v688
        %v929 = vadd.f32 %v780, %v689
        %v930 = vadd.f32 %v780, %v690
        %v931 = vadd.f32 %v780, %v691
        %v932 = vadd.f32 %v780, %v692
        %v933 = vadd.f32 %v780, %v693
        %v934 = vadd.f32 %v780, %v694
        %v935 = vadd.f32 %v780, %v695
        %v936 = vadd.f32 %v780, %v696
        %v937 = vadd.f32 %v785, %v697
        %v938 = vadd.f32 %v785, %v698
        %v939 = vadd.f32 %v785, %v699
        %v940 = vadd.f32 %v785, %v700
        %v941 = vadd.f32 %v785, %v701
        %v942 = vadd.f32 %v785, %v702
        %v943 = vadd.f32 %v785, %v703
        %v944 = vadd.f32 %v785, %v704
        %v945 = vadd.f32 %v785, %v705
        %v946 = vadd.f32 %v785, %v706
        %947 = vset.pattern.permute.xlu0 1
        %948 = vperm.xlu0 %947, %v340
        %v949 = vpop.permute.xlu0 %948
        %951 = vset.pattern.permute.xlu0 1
        %952 = vperm.xlu0 %951, %v341
        %v953 = vpop.permute.xlu0 %952
        %955 = vset.pattern.permute.xlu0 1
        %956 = vperm.xlu0 %955, %v342
        %v957 = vpop.permute.xlu0 %956
        %959 = vset.pattern.permute.xlu0 1
        %960 = vperm.xlu0 %959, %v343
        %v961 = vpop.permute.xlu0 %960
        %963 = vset.pattern.permute.xlu0 1
        %964 = vperm.xlu0 %963, %v344
        %v965 = vpop.permute.xlu0 %964
        %967 = vset.pattern.permute.xlu0 1
        %968 = vperm.xlu0 %967, %v345
        %v969 = vpop.permute.xlu0 %968
        %971 = vset.pattern.permute.xlu0 1
        %972 = vperm.xlu0 %971, %v346
        %v973 = vpop.permute.xlu0 %972
        %975 = vset.pattern.permute.xlu0 1
        %976 = vperm.xlu0 %975, %v347
        %v977 = vpop.permute.xlu0 %976
        %979 = vset.pattern.permute.xlu0 1
        %980 = vperm.xlu0 %979, %v348
        %v981 = vpop.permute.xlu0 %980
        %983 = vset.pattern.permute.xlu0 1
        %984 = vperm.xlu0 %983, %v349
        %v985 = vpop.permute.xlu0 %984
        %987 = vset.pattern.permute.xlu0 1
        %988 = vperm.xlu0 %987, %v350
        %v989 = vpop.permute.xlu0 %988
        %991 = vset.pattern.permute.xlu0 1
        %992 = vperm.xlu0 %991, %v351
        %v993 = vpop.permute.xlu0 %992
        %995 = vset.pattern.permute.xlu0 1
        %996 = vperm.xlu0 %995, %v352
        %v997 = vpop.permute.xlu0 %996
        %999 = vset.pattern.permute.xlu0 1
        %1000 = vperm.xlu0 %999, %v353
        %v1001 = vpop.permute.xlu0 %1000
        %1003 = vset.pattern.permute.xlu0 1
        %1004 = vperm.xlu0 %1003, %v354
        %v1005 = vpop.permute.xlu0 %1004
        %1007 = vset.pattern.permute.xlu0 1
        %1008 = vperm.xlu0 %1007, %v355
        %v1009 = vpop.permute.xlu0 %1008
        %v1011 = vlaneseq
        %v1012 = vshrl.u32 %v1011, 7
        %v1013 = vsub.s32 1, %v1012
        %v1014 = vrot.slane %v335, %v1013
        %v1015 = vlaneseq
        %v1016 = vshrl.u32 %v1015, 7
        %v1017 = vsub.s32 5, %v1016
        %v1018 = vrot.slane %v335, %v1017
        %v1019 = vlaneseq
        %v1020 = vshrl.u32 %v1019, 7
        %v1021 = vsub.s32 1, %v1020
        %v1022 = vrot.slane %v336, %v1021
        %v1023 = vlaneseq
        %v1024 = vshrl.u32 %v1023, 7
        %v1025 = vsub.s32 5, %v1024
        %v1026 = vrot.slane %v336, %v1025
        %v1027 = vlaneseq
        %v1028 = vshrl.u32 %v1027, 7
        %v1029 = vsub.s32 1, %v1028
        %v1030 = vrot.slane %v337, %v1029
        %v1031 = vlaneseq
        %v1032 = vshrl.u32 %v1031, 7
        %v1033 = vsub.s32 5, %v1032
        %v1034 = vrot.slane %v337, %v1033
        %v1035 = vlaneseq
        %v1036 = vshrl.u32 %v1035, 7
        %v1037 = vsub.s32 1, %v1036
        %v1038 = vrot.slane %v338, %v1037
        %v1039 = vlaneseq
        %v1040 = vshrl.u32 %v1039, 7
        %v1041 = vsub.s32 5, %v1040
        %v1042 = vrot.slane %v338, %v1041
        %v1043 = vlaneseq
        %v1044 = vshrl.u32 %v1043, 7
        %v1045 = vsub.s32 1, %v1044
        %v1046 = vrot.slane %v339, %v1045
        %v1047 = vlaneseq
        %v1048 = vshrl.u32 %v1047, 7
        %v1049 = vsub.s32 5, %v1048
        %v1050 = vrot.slane %v339, %v1049
        %v1061 = vlaneseq
        %v1062 = vshrl.u32 %v1061, 7
        %v1063 = vsub.s32 1, %v1062
        %v1064 = vrot.slane %v1014, %v1063
        %v1065 = vlaneseq
        %v1066 = vshrl.u32 %v1065, 7
        %v1067 = vsub.s32 1, %v1066
        %v1068 = vrot.slane %v1018, %v1067
        %v1069 = vlaneseq
        %v1070 = vshrl.u32 %v1069, 7
        %v1071 = vsub.s32 1, %v1070
        %v1072 = vrot.slane %v1022, %v1071
        %v1073 = vlaneseq
        %v1074 = vshrl.u32 %v1073, 7
        %v1075 = vsub.s32 1, %v1074
        %v1076 = vrot.slane %v1026, %v1075
        %v1077 = vlaneseq
        %v1078 = vshrl.u32 %v1077, 7
        %v1079 = vsub.s32 1, %v1078
        %v1080 = vrot.slane %v1030, %v1079
        %v1081 = vlaneseq
        %v1082 = vshrl.u32 %v1081, 7
        %v1083 = vsub.s32 1, %v1082
        %v1084 = vrot.slane %v1034, %v1083
        %v1085 = vlaneseq
        %v1086 = vshrl.u32 %v1085, 7
        %v1087 = vsub.s32 1, %v1086
        %v1088 = vrot.slane %v1038, %v1087
        %v1089 = vlaneseq
        %v1090 = vshrl.u32 %v1089, 7
        %v1091 = vsub.s32 1, %v1090
        %v1092 = vrot.slane %v1042, %v1091
        %v1093 = vlaneseq
        %v1094 = vshrl.u32 %v1093, 7
        %v1095 = vsub.s32 1, %v1094
        %v1096 = vrot.slane %v1046, %v1095
        %v1097 = vlaneseq
        %v1098 = vshrl.u32 %v1097, 7
        %v1099 = vsub.s32 1, %v1098
        %v1100 = vrot.slane %v1050, %v1099
        %v1101 = vmul.f32 %v949, %v1064
        %v1102 = vmul.f32 %v949, %v1068
        %v1103 = vmul.f32 %v949, %v1072
        %v1104 = vmul.f32 %v949, %v1076
        %v1105 = vmul.f32 %v949, %v1080
        %v1106 = vmul.f32 %v949, %v1084
        %v1107 = vmul.f32 %v949, %v1088
        %v1108 = vmul.f32 %v949, %v1092
        %v1109 = vmul.f32 %v949, %v1096
        %v1110 = vmul.f32 %v949, %v1100
        %v1111 = vmul.f32 %v953, %v1064
        %v1112 = vmul.f32 %v953, %v1068
        %v1113 = vmul.f32 %v953, %v1072
        %v1114 = vmul.f32 %v953, %v1076
        %v1115 = vmul.f32 %v953, %v1080
        %v1116 = vmul.f32 %v953, %v1084
        %v1117 = vmul.f32 %v953, %v1088
        %v1118 = vmul.f32 %v953, %v1092
        %v1119 = vmul.f32 %v953, %v1096
        %v1120 = vmul.f32 %v953, %v1100
        %v1121 = vmul.f32 %v957, %v1064
        %v1122 = vmul.f32 %v957, %v1068
        %v1123 = vmul.f32 %v957, %v1072
        %v1124 = vmul.f32 %v957, %v1076
        %v1125 = vmul.f32 %v957, %v1080
        %v1126 = vmul.f32 %v957, %v1084
        %v1127 = vmul.f32 %v957, %v1088
        %v1128 = vmul.f32 %v957, %v1092
        %v1129 = vmul.f32 %v957, %v1096
        %v1130 = vmul.f32 %v957, %v1100
        %v1131 = vmul.f32 %v961, %v1064
        %v1132 = vmul.f32 %v961, %v1068
        %v1133 = vmul.f32 %v961, %v1072
        %v1134 = vmul.f32 %v961, %v1076
        %v1135 = vmul.f32 %v961, %v1080
        %v1136 = vmul.f32 %v961, %v1084
        %v1137 = vmul.f32 %v961, %v1088
        %v1138 = vmul.f32 %v961, %v1092
        %v1139 = vmul.f32 %v961, %v1096
        %v1140 = vmul.f32 %v961, %v1100
        %v1141 = vmul.f32 %v965, %v1064
        %v1142 = vmul.f32 %v965, %v1068
        %v1143 = vmul.f32 %v965, %v1072
        %v1144 = vmul.f32 %v965, %v1076
        %v1145 = vmul.f32 %v965, %v1080
        %v1146 = vmul.f32 %v965, %v1084
        %v1147 = vmul.f32 %v965, %v1088
        %v1148 = vmul.f32 %v965, %v1092
        %v1149 = vmul.f32 %v965, %v1096
        %v1150 = vmul.f32 %v965, %v1100
        %v1151 = vmul.f32 %v969, %v1064
        %v1152 = vmul.f32 %v969, %v1068
        %v1153 = vmul.f32 %v969, %v1072
        %v1154 = vmul.f32 %v969, %v1076
        %v1155 = vmul.f32 %v969, %v1080
        %v1156 = vmul.f32 %v969, %v1084
        %v1157 = vmul.f32 %v969, %v1088
        %v1158 = vmul.f32 %v969, %v1092
        %v1159 = vmul.f32 %v969, %v1096
        %v1160 = vmul.f32 %v969, %v1100
        %v1161 = vmul.f32 %v973, %v1064
        %v1162 = vmul.f32 %v973, %v1068
        %v1163 = vmul.f32 %v973, %v1072
        %v1164 = vmul.f32 %v973, %v1076
        %v1165 = vmul.f32 %v973, %v1080
        %v1166 = vmul.f32 %v973, %v1084
        %v1167 = vmul.f32 %v973, %v1088
        %v1168 = vmul.f32 %v973, %v1092
        %v1169 = vmul.f32 %v973, %v1096
        %v1170 = vmul.f32 %v973, %v1100
        %v1171 = vmul.f32 %v977, %v1064
        %v1172 = vmul.f32 %v977, %v1068
        %v1173 = vmul.f32 %v977, %v1072
        %v1174 = vmul.f32 %v977, %v1076
        %v1175 = vmul.f32 %v977, %v1080
        %v1176 = vmul.f32 %v977, %v1084
        %v1177 = vmul.f32 %v977, %v1088
        %v1178 = vmul.f32 %v977, %v1092
        %v1179 = vmul.f32 %v977, %v1096
        %v1180 = vmul.f32 %v977, %v1100
        %v1181 = vmul.f32 %v981, %v1064
        %v1182 = vmul.f32 %v981, %v1068
        %v1183 = vmul.f32 %v981, %v1072
        %v1184 = vmul.f32 %v981, %v1076
        %v1185 = vmul.f32 %v981, %v1080
        %v1186 = vmul.f32 %v981, %v1084
        %v1187 = vmul.f32 %v981, %v1088
        %v1188 = vmul.f32 %v981, %v1092
        %v1189 = vmul.f32 %v981, %v1096
        %v1190 = vmul.f32 %v981, %v1100
        %v1191 = vmul.f32 %v985, %v1064
        %v1192 = vmul.f32 %v985, %v1068
        %v1193 = vmul.f32 %v985, %v1072
        %v1194 = vmul.f32 %v985, %v1076
        %v1195 = vmul.f32 %v985, %v1080
        %v1196 = vmul.f32 %v985, %v1084
        %v1197 = vmul.f32 %v985, %v1088
        %v1198 = vmul.f32 %v985, %v1092
        %v1199 = vmul.f32 %v985, %v1096
        %v1200 = vmul.f32 %v985, %v1100
        %v1201 = vmul.f32 %v989, %v1064
        %v1202 = vmul.f32 %v989, %v1068
        %v1203 = vmul.f32 %v989, %v1072
        %v1204 = vmul.f32 %v989, %v1076
        %v1205 = vmul.f32 %v989, %v1080
        %v1206 = vmul.f32 %v989, %v1084
        %v1207 = vmul.f32 %v989, %v1088
        %v1208 = vmul.f32 %v989, %v1092
        %v1209 = vmul.f32 %v989, %v1096
        %v1210 = vmul.f32 %v989, %v1100
        %v1211 = vmul.f32 %v993, %v1064
        %v1212 = vmul.f32 %v993, %v1068
        %v1213 = vmul.f32 %v993, %v1072
        %v1214 = vmul.f32 %v993, %v1076
        %v1215 = vmul.f32 %v993, %v1080
        %v1216 = vmul.f32 %v993, %v1084
        %v1217 = vmul.f32 %v993, %v1088
        %v1218 = vmul.f32 %v993, %v1092
        %v1219 = vmul.f32 %v993, %v1096
        %v1220 = vmul.f32 %v993, %v1100
        %v1221 = vmul.f32 %v997, %v1064
        %v1222 = vmul.f32 %v997, %v1068
        %v1223 = vmul.f32 %v997, %v1072
        %v1224 = vmul.f32 %v997, %v1076
        %v1225 = vmul.f32 %v997, %v1080
        %v1226 = vmul.f32 %v997, %v1084
        %v1227 = vmul.f32 %v997, %v1088
        %v1228 = vmul.f32 %v997, %v1092
        %v1229 = vmul.f32 %v997, %v1096
        %v1230 = vmul.f32 %v997, %v1100
        %v1231 = vmul.f32 %v1001, %v1064
        %v1232 = vmul.f32 %v1001, %v1068
        %v1233 = vmul.f32 %v1001, %v1072
        %v1234 = vmul.f32 %v1001, %v1076
        %v1235 = vmul.f32 %v1001, %v1080
        %v1236 = vmul.f32 %v1001, %v1084
        %v1237 = vmul.f32 %v1001, %v1088
        %v1238 = vmul.f32 %v1001, %v1092
        %v1239 = vmul.f32 %v1001, %v1096
        %v1240 = vmul.f32 %v1001, %v1100
        %v1241 = vmul.f32 %v1005, %v1064
        %v1242 = vmul.f32 %v1005, %v1068
        %v1243 = vmul.f32 %v1005, %v1072
        %v1244 = vmul.f32 %v1005, %v1076
        %v1245 = vmul.f32 %v1005, %v1080
        %v1246 = vmul.f32 %v1005, %v1084
        %v1247 = vmul.f32 %v1005, %v1088
        %v1248 = vmul.f32 %v1005, %v1092
        %v1249 = vmul.f32 %v1005, %v1096
        %v1250 = vmul.f32 %v1005, %v1100
        %v1251 = vmul.f32 %v1009, %v1064
        %v1252 = vmul.f32 %v1009, %v1068
        %v1253 = vmul.f32 %v1009, %v1072
        %v1254 = vmul.f32 %v1009, %v1076
        %v1255 = vmul.f32 %v1009, %v1080
        %v1256 = vmul.f32 %v1009, %v1084
        %v1257 = vmul.f32 %v1009, %v1088
        %v1258 = vmul.f32 %v1009, %v1092
        %v1259 = vmul.f32 %v1009, %v1096
        %v1260 = vmul.f32 %v1009, %v1100
        %v1261 = vadd.f32 %v787, %v1101
        %v1262 = vadd.f32 %v788, %v1102
        %v1263 = vadd.f32 %v789, %v1103
        %v1264 = vadd.f32 %v790, %v1104
        %v1265 = vadd.f32 %v791, %v1105
        %v1266 = vadd.f32 %v792, %v1106
        %v1267 = vadd.f32 %v793, %v1107
        %v1268 = vadd.f32 %v794, %v1108
        %v1269 = vadd.f32 %v795, %v1109
        %v1270 = vadd.f32 %v796, %v1110
        %v1271 = vadd.f32 %v797, %v1111
        %v1272 = vadd.f32 %v798, %v1112
        %v1273 = vadd.f32 %v799, %v1113
        %v1274 = vadd.f32 %v800, %v1114
        %v1275 = vadd.f32 %v801, %v1115
        %v1276 = vadd.f32 %v802, %v1116
        %v1277 = vadd.f32 %v803, %v1117
        %v1278 = vadd.f32 %v804, %v1118
        %v1279 = vadd.f32 %v805, %v1119
        %v1280 = vadd.f32 %v806, %v1120
        %v1281 = vadd.f32 %v807, %v1121
        %v1282 = vadd.f32 %v808, %v1122
        %v1283 = vadd.f32 %v809, %v1123
        %v1284 = vadd.f32 %v810, %v1124
        %v1285 = vadd.f32 %v811, %v1125
        %v1286 = vadd.f32 %v812, %v1126
        %v1287 = vadd.f32 %v813, %v1127
        %v1288 = vadd.f32 %v814, %v1128
        %v1289 = vadd.f32 %v815, %v1129
        %v1290 = vadd.f32 %v816, %v1130
        %v1291 = vadd.f32 %v817, %v1131
        %v1292 = vadd.f32 %v818, %v1132
        %v1293 = vadd.f32 %v819, %v1133
        %v1294 = vadd.f32 %v820, %v1134
        %v1295 = vadd.f32 %v821, %v1135
        %v1296 = vadd.f32 %v822, %v1136
        %v1297 = vadd.f32 %v823, %v1137
        %v1298 = vadd.f32 %v824, %v1138
        %v1299 = vadd.f32 %v825, %v1139
        %v1300 = vadd.f32 %v826, %v1140
        %v1301 = vadd.f32 %v827, %v1141
        %v1302 = vadd.f32 %v828, %v1142
        %v1303 = vadd.f32 %v829, %v1143
        %v1304 = vadd.f32 %v830, %v1144
        %v1305 = vadd.f32 %v831, %v1145
        %v1306 = vadd.f32 %v832, %v1146
        %v1307 = vadd.f32 %v833, %v1147
        %v1308 = vadd.f32 %v834, %v1148
        %v1309 = vadd.f32 %v835, %v1149
        %v1310 = vadd.f32 %v836, %v1150
        %v1311 = vadd.f32 %v837, %v1151
        %v1312 = vadd.f32 %v838, %v1152
        %v1313 = vadd.f32 %v839, %v1153
        %v1314 = vadd.f32 %v840, %v1154
        %v1315 = vadd.f32 %v841, %v1155
        %v1316 = vadd.f32 %v842, %v1156
        %v1317 = vadd.f32 %v843, %v1157
        %v1318 = vadd.f32 %v844, %v1158
        %v1319 = vadd.f32 %v845, %v1159
        %v1320 = vadd.f32 %v846, %v1160
        %v1321 = vadd.f32 %v847, %v1161
        %v1322 = vadd.f32 %v848, %v1162
        %v1323 = vadd.f32 %v849, %v1163
        %v1324 = vadd.f32 %v850, %v1164
        %v1325 = vadd.f32 %v851, %v1165
        %v1326 = vadd.f32 %v852, %v1166
        %v1327 = vadd.f32 %v853, %v1167
        %v1328 = vadd.f32 %v854, %v1168
        %v1329 = vadd.f32 %v855, %v1169
        %v1330 = vadd.f32 %v856, %v1170
        %v1331 = vadd.f32 %v857, %v1171
        %v1332 = vadd.f32 %v858, %v1172
        %v1333 = vadd.f32 %v859, %v1173
        %v1334 = vadd.f32 %v860, %v1174
        %v1335 = vadd.f32 %v861, %v1175
        %v1336 = vadd.f32 %v862, %v1176
        %v1337 = vadd.f32 %v863, %v1177
        %v1338 = vadd.f32 %v864, %v1178
        %v1339 = vadd.f32 %v865, %v1179
        %v1340 = vadd.f32 %v866, %v1180
        %v1341 = vadd.f32 %v867, %v1181
        %v1342 = vadd.f32 %v868, %v1182
        %v1343 = vadd.f32 %v869, %v1183
        %v1344 = vadd.f32 %v870, %v1184
        %v1345 = vadd.f32 %v871, %v1185
        %v1346 = vadd.f32 %v872, %v1186
        %v1347 = vadd.f32 %v873, %v1187
        %v1348 = vadd.f32 %v874, %v1188
        %v1349 = vadd.f32 %v875, %v1189
        %v1350 = vadd.f32 %v876, %v1190
        %v1351 = vadd.f32 %v877, %v1191
        %v1352 = vadd.f32 %v878, %v1192
        %v1353 = vadd.f32 %v879, %v1193
        %v1354 = vadd.f32 %v880, %v1194
        %v1355 = vadd.f32 %v881, %v1195
        %v1356 = vadd.f32 %v882, %v1196
        %v1357 = vadd.f32 %v883, %v1197
        %v1358 = vadd.f32 %v884, %v1198
        %v1359 = vadd.f32 %v885, %v1199
        %v1360 = vadd.f32 %v886, %v1200
        %v1361 = vadd.f32 %v887, %v1201
        %v1362 = vadd.f32 %v888, %v1202
        %v1363 = vadd.f32 %v889, %v1203
        %v1364 = vadd.f32 %v890, %v1204
        %v1365 = vadd.f32 %v891, %v1205
        %v1366 = vadd.f32 %v892, %v1206
        %v1367 = vadd.f32 %v893, %v1207
        %v1368 = vadd.f32 %v894, %v1208
        %v1369 = vadd.f32 %v895, %v1209
        %v1370 = vadd.f32 %v896, %v1210
        %v1371 = vadd.f32 %v897, %v1211
        %v1372 = vadd.f32 %v898, %v1212
        %v1373 = vadd.f32 %v899, %v1213
        %v1374 = vadd.f32 %v900, %v1214
        %v1375 = vadd.f32 %v901, %v1215
        %v1376 = vadd.f32 %v902, %v1216
        %v1377 = vadd.f32 %v903, %v1217
        %v1378 = vadd.f32 %v904, %v1218
        %v1379 = vadd.f32 %v905, %v1219
        %v1380 = vadd.f32 %v906, %v1220
        %v1381 = vadd.f32 %v907, %v1221
        %v1382 = vadd.f32 %v908, %v1222
        %v1383 = vadd.f32 %v909, %v1223
        %v1384 = vadd.f32 %v910, %v1224
        %v1385 = vadd.f32 %v911, %v1225
        %v1386 = vadd.f32 %v912, %v1226
        %v1387 = vadd.f32 %v913, %v1227
        %v1388 = vadd.f32 %v914, %v1228
        %v1389 = vadd.f32 %v915, %v1229
        %v1390 = vadd.f32 %v916, %v1230
        %v1391 = vadd.f32 %v917, %v1231
        %v1392 = vadd.f32 %v918, %v1232
        %v1393 = vadd.f32 %v919, %v1233
        %v1394 = vadd.f32 %v920, %v1234
        %v1395 = vadd.f32 %v921, %v1235
        %v1396 = vadd.f32 %v922, %v1236
        %v1397 = vadd.f32 %v923, %v1237
        %v1398 = vadd.f32 %v924, %v1238
        %v1399 = vadd.f32 %v925, %v1239
        %v1400 = vadd.f32 %v926, %v1240
        %v1401 = vadd.f32 %v927, %v1241
        %v1402 = vadd.f32 %v928, %v1242
        %v1403 = vadd.f32 %v929, %v1243
        %v1404 = vadd.f32 %v930, %v1244
        %v1405 = vadd.f32 %v931, %v1245
        %v1406 = vadd.f32 %v932, %v1246
        %v1407 = vadd.f32 %v933, %v1247
        %v1408 = vadd.f32 %v934, %v1248
        %v1409 = vadd.f32 %v935, %v1249
        %v1410 = vadd.f32 %v936, %v1250
        %v1411 = vadd.f32 %v937, %v1251
        %v1412 = vadd.f32 %v938, %v1252
        %v1413 = vadd.f32 %v939, %v1253
        %v1414 = vadd.f32 %v940, %v1254
        %v1415 = vadd.f32 %v941, %v1255
        %v1416 = vadd.f32 %v942, %v1256
        %v1417 = vadd.f32 %v943, %v1257
        %v1418 = vadd.f32 %v944, %v1258
        %v1419 = vadd.f32 %v945, %v1259
        %v1420 = vadd.f32 %v946, %v1260
        %1421 = vset.pattern.permute.xlu0 2
        %1422 = vperm.xlu0 %1421, %v340
        %v1423 = vpop.permute.xlu0 %1422
        %1425 = vset.pattern.permute.xlu0 2
        %1426 = vperm.xlu0 %1425, %v341
        %v1427 = vpop.permute.xlu0 %1426
        %1429 = vset.pattern.permute.xlu0 2
        %1430 = vperm.xlu0 %1429, %v342
        %v1431 = vpop.permute.xlu0 %1430
        %1433 = vset.pattern.permute.xlu0 2
        %1434 = vperm.xlu0 %1433, %v343
        %v1435 = vpop.permute.xlu0 %1434
        %1437 = vset.pattern.permute.xlu0 2
        %1438 = vperm.xlu0 %1437, %v344
        %v1439 = vpop.permute.xlu0 %1438
        %1441 = vset.pattern.permute.xlu0 2
        %1442 = vperm.xlu0 %1441, %v345
        %v1443 = vpop.permute.xlu0 %1442
        %1445 = vset.pattern.permute.xlu0 2
        %1446 = vperm.xlu0 %1445, %v346
        %v1447 = vpop.permute.xlu0 %1446
        %1449 = vset.pattern.permute.xlu0 2
        %1450 = vperm.xlu0 %1449, %v347
        %v1451 = vpop.permute.xlu0 %1450
        %1453 = vset.pattern.permute.xlu0 2
        %1454 = vperm.xlu0 %1453, %v348
        %v1455 = vpop.permute.xlu0 %1454
        %1457 = vset.pattern.permute.xlu0 2
        %1458 = vperm.xlu0 %1457, %v349
        %v1459 = vpop.permute.xlu0 %1458
        %1461 = vset.pattern.permute.xlu0 2
        %1462 = vperm.xlu0 %1461, %v350
        %v1463 = vpop.permute.xlu0 %1462
        %1465 = vset.pattern.permute.xlu0 2
        %1466 = vperm.xlu0 %1465, %v351
        %v1467 = vpop.permute.xlu0 %1466
        %1469 = vset.pattern.permute.xlu0 2
        %1470 = vperm.xlu0 %1469, %v352
        %v1471 = vpop.permute.xlu0 %1470
        %1473 = vset.pattern.permute.xlu0 2
        %1474 = vperm.xlu0 %1473, %v353
        %v1475 = vpop.permute.xlu0 %1474
        %1477 = vset.pattern.permute.xlu0 2
        %1478 = vperm.xlu0 %1477, %v354
        %v1479 = vpop.permute.xlu0 %1478
        %1481 = vset.pattern.permute.xlu0 2
        %1482 = vperm.xlu0 %1481, %v355
        %v1483 = vpop.permute.xlu0 %1482
        %v1485 = vlaneseq
        %v1486 = vshrl.u32 %v1485, 7
        %v1487 = vsub.s32 2, %v1486
        %v1488 = vrot.slane %v335, %v1487
        %v1489 = vlaneseq
        %v1490 = vshrl.u32 %v1489, 7
        %v1491 = vsub.s32 6, %v1490
        %v1492 = vrot.slane %v335, %v1491
        %v1493 = vlaneseq
        %v1494 = vshrl.u32 %v1493, 7
        %v1495 = vsub.s32 2, %v1494
        %v1496 = vrot.slane %v336, %v1495
        %v1497 = vlaneseq
        %v1498 = vshrl.u32 %v1497, 7
        %v1499 = vsub.s32 6, %v1498
        %v1500 = vrot.slane %v336, %v1499
        %v1501 = vlaneseq
        %v1502 = vshrl.u32 %v1501, 7
        %v1503 = vsub.s32 2, %v1502
        %v1504 = vrot.slane %v337, %v1503
        %v1505 = vlaneseq
        %v1506 = vshrl.u32 %v1505, 7
        %v1507 = vsub.s32 6, %v1506
        %v1508 = vrot.slane %v337, %v1507
        %v1509 = vlaneseq
        %v1510 = vshrl.u32 %v1509, 7
        %v1511 = vsub.s32 2, %v1510
        %v1512 = vrot.slane %v338, %v1511
        %v1513 = vlaneseq
        %v1514 = vshrl.u32 %v1513, 7
        %v1515 = vsub.s32 6, %v1514
        %v1516 = vrot.slane %v338, %v1515
        %v1517 = vlaneseq
        %v1518 = vshrl.u32 %v1517, 7
        %v1519 = vsub.s32 2, %v1518
        %v1520 = vrot.slane %v339, %v1519
        %v1521 = vlaneseq
        %v1522 = vshrl.u32 %v1521, 7
        %v1523 = vsub.s32 6, %v1522
        %v1524 = vrot.slane %v339, %v1523
        %v1535 = vlaneseq
        %v1536 = vshrl.u32 %v1535, 7
        %v1537 = vsub.s32 2, %v1536
        %v1538 = vrot.slane %v1488, %v1537
        %v1539 = vlaneseq
        %v1540 = vshrl.u32 %v1539, 7
        %v1541 = vsub.s32 2, %v1540
        %v1542 = vrot.slane %v1492, %v1541
        %v1543 = vlaneseq
        %v1544 = vshrl.u32 %v1543, 7
        %v1545 = vsub.s32 2, %v1544
        %v1546 = vrot.slane %v1496, %v1545
        %v1547 = vlaneseq
        %v1548 = vshrl.u32 %v1547, 7
        %v1549 = vsub.s32 2, %v1548
        %v1550 = vrot.slane %v1500, %v1549
        %v1551 = vlaneseq
        %v1552 = vshrl.u32 %v1551, 7
        %v1553 = vsub.s32 2, %v1552
        %v1554 = vrot.slane %v1504, %v1553
        %v1555 = vlaneseq
        %v1556 = vshrl.u32 %v1555, 7
        %v1557 = vsub.s32 2, %v1556
        %v1558 = vrot.slane %v1508, %v1557
        %v1559 = vlaneseq
        %v1560 = vshrl.u32 %v1559, 7
        %v1561 = vsub.s32 2, %v1560
        %v1562 = vrot.slane %v1512, %v1561
        %v1563 = vlaneseq
        %v1564 = vshrl.u32 %v1563, 7
        %v1565 = vsub.s32 2, %v1564
        %v1566 = vrot.slane %v1516, %v1565
        %v1567 = vlaneseq
        %v1568 = vshrl.u32 %v1567, 7
        %v1569 = vsub.s32 2, %v1568
        %v1570 = vrot.slane %v1520, %v1569
        %v1571 = vlaneseq
        %v1572 = vshrl.u32 %v1571, 7
        %v1573 = vsub.s32 2, %v1572
        %v1574 = vrot.slane %v1524, %v1573
        %v1575 = vmul.f32 %v1423, %v1538
        %v1576 = vmul.f32 %v1423, %v1542
        %v1577 = vmul.f32 %v1423, %v1546
        %v1578 = vmul.f32 %v1423, %v1550
        %v1579 = vmul.f32 %v1423, %v1554
        %v1580 = vmul.f32 %v1423, %v1558
        %v1581 = vmul.f32 %v1423, %v1562
        %v1582 = vmul.f32 %v1423, %v1566
        %v1583 = vmul.f32 %v1423, %v1570
        %v1584 = vmul.f32 %v1423, %v1574
        %v1585 = vmul.f32 %v1427, %v1538
        %v1586 = vmul.f32 %v1427, %v1542
        %v1587 = vmul.f32 %v1427, %v1546
        %v1588 = vmul.f32 %v1427, %v1550
        %v1589 = vmul.f32 %v1427, %v1554
        %v1590 = vmul.f32 %v1427, %v1558
        %v1591 = vmul.f32 %v1427, %v1562
        %v1592 = vmul.f32 %v1427, %v1566
        %v1593 = vmul.f32 %v1427, %v1570
        %v1594 = vmul.f32 %v1427, %v1574
        %v1595 = vmul.f32 %v1431, %v1538
        %v1596 = vmul.f32 %v1431, %v1542
        %v1597 = vmul.f32 %v1431, %v1546
        %v1598 = vmul.f32 %v1431, %v1550
        %v1599 = vmul.f32 %v1431, %v1554
        %v1600 = vmul.f32 %v1431, %v1558
        %v1601 = vmul.f32 %v1431, %v1562
        %v1602 = vmul.f32 %v1431, %v1566
        %v1603 = vmul.f32 %v1431, %v1570
        %v1604 = vmul.f32 %v1431, %v1574
        %v1605 = vmul.f32 %v1435, %v1538
        %v1606 = vmul.f32 %v1435, %v1542
        %v1607 = vmul.f32 %v1435, %v1546
        %v1608 = vmul.f32 %v1435, %v1550
        %v1609 = vmul.f32 %v1435, %v1554
        %v1610 = vmul.f32 %v1435, %v1558
        %v1611 = vmul.f32 %v1435, %v1562
        %v1612 = vmul.f32 %v1435, %v1566
        %v1613 = vmul.f32 %v1435, %v1570
        %v1614 = vmul.f32 %v1435, %v1574
        %v1615 = vmul.f32 %v1439, %v1538
        %v1616 = vmul.f32 %v1439, %v1542
        %v1617 = vmul.f32 %v1439, %v1546
        %v1618 = vmul.f32 %v1439, %v1550
        %v1619 = vmul.f32 %v1439, %v1554
        %v1620 = vmul.f32 %v1439, %v1558
        %v1621 = vmul.f32 %v1439, %v1562
        %v1622 = vmul.f32 %v1439, %v1566
        %v1623 = vmul.f32 %v1439, %v1570
        %v1624 = vmul.f32 %v1439, %v1574
        %v1625 = vmul.f32 %v1443, %v1538
        %v1626 = vmul.f32 %v1443, %v1542
        %v1627 = vmul.f32 %v1443, %v1546
        %v1628 = vmul.f32 %v1443, %v1550
        %v1629 = vmul.f32 %v1443, %v1554
        %v1630 = vmul.f32 %v1443, %v1558
        %v1631 = vmul.f32 %v1443, %v1562
        %v1632 = vmul.f32 %v1443, %v1566
        %v1633 = vmul.f32 %v1443, %v1570
        %v1634 = vmul.f32 %v1443, %v1574
        %v1635 = vmul.f32 %v1447, %v1538
        %v1636 = vmul.f32 %v1447, %v1542
        %v1637 = vmul.f32 %v1447, %v1546
        %v1638 = vmul.f32 %v1447, %v1550
        %v1639 = vmul.f32 %v1447, %v1554
        %v1640 = vmul.f32 %v1447, %v1558
        %v1641 = vmul.f32 %v1447, %v1562
        %v1642 = vmul.f32 %v1447, %v1566
        %v1643 = vmul.f32 %v1447, %v1570
        %v1644 = vmul.f32 %v1447, %v1574
        %v1645 = vmul.f32 %v1451, %v1538
        %v1646 = vmul.f32 %v1451, %v1542
        %v1647 = vmul.f32 %v1451, %v1546
        %v1648 = vmul.f32 %v1451, %v1550
        %v1649 = vmul.f32 %v1451, %v1554
        %v1650 = vmul.f32 %v1451, %v1558
        %v1651 = vmul.f32 %v1451, %v1562
        %v1652 = vmul.f32 %v1451, %v1566
        %v1653 = vmul.f32 %v1451, %v1570
        %v1654 = vmul.f32 %v1451, %v1574
        %v1655 = vmul.f32 %v1455, %v1538
        %v1656 = vmul.f32 %v1455, %v1542
        %v1657 = vmul.f32 %v1455, %v1546
        %v1658 = vmul.f32 %v1455, %v1550
        %v1659 = vmul.f32 %v1455, %v1554
        %v1660 = vmul.f32 %v1455, %v1558
        %v1661 = vmul.f32 %v1455, %v1562
        %v1662 = vmul.f32 %v1455, %v1566
        %v1663 = vmul.f32 %v1455, %v1570
        %v1664 = vmul.f32 %v1455, %v1574
        %v1665 = vmul.f32 %v1459, %v1538
        %v1666 = vmul.f32 %v1459, %v1542
        %v1667 = vmul.f32 %v1459, %v1546
        %v1668 = vmul.f32 %v1459, %v1550
        %v1669 = vmul.f32 %v1459, %v1554
        %v1670 = vmul.f32 %v1459, %v1558
        %v1671 = vmul.f32 %v1459, %v1562
        %v1672 = vmul.f32 %v1459, %v1566
        %v1673 = vmul.f32 %v1459, %v1570
        %v1674 = vmul.f32 %v1459, %v1574
        %v1675 = vmul.f32 %v1463, %v1538
        %v1676 = vmul.f32 %v1463, %v1542
        %v1677 = vmul.f32 %v1463, %v1546
        %v1678 = vmul.f32 %v1463, %v1550
        %v1679 = vmul.f32 %v1463, %v1554
        %v1680 = vmul.f32 %v1463, %v1558
        %v1681 = vmul.f32 %v1463, %v1562
        %v1682 = vmul.f32 %v1463, %v1566
        %v1683 = vmul.f32 %v1463, %v1570
        %v1684 = vmul.f32 %v1463, %v1574
        %v1685 = vmul.f32 %v1467, %v1538
        %v1686 = vmul.f32 %v1467, %v1542
        %v1687 = vmul.f32 %v1467, %v1546
        %v1688 = vmul.f32 %v1467, %v1550
        %v1689 = vmul.f32 %v1467, %v1554
        %v1690 = vmul.f32 %v1467, %v1558
        %v1691 = vmul.f32 %v1467, %v1562
        %v1692 = vmul.f32 %v1467, %v1566
        %v1693 = vmul.f32 %v1467, %v1570
        %v1694 = vmul.f32 %v1467, %v1574
        %v1695 = vmul.f32 %v1471, %v1538
        %v1696 = vmul.f32 %v1471, %v1542
        %v1697 = vmul.f32 %v1471, %v1546
        %v1698 = vmul.f32 %v1471, %v1550
        %v1699 = vmul.f32 %v1471, %v1554
        %v1700 = vmul.f32 %v1471, %v1558
        %v1701 = vmul.f32 %v1471, %v1562
        %v1702 = vmul.f32 %v1471, %v1566
        %v1703 = vmul.f32 %v1471, %v1570
        %v1704 = vmul.f32 %v1471, %v1574
        %v1705 = vmul.f32 %v1475, %v1538
        %v1706 = vmul.f32 %v1475, %v1542
        %v1707 = vmul.f32 %v1475, %v1546
        %v1708 = vmul.f32 %v1475, %v1550
        %v1709 = vmul.f32 %v1475, %v1554
        %v1710 = vmul.f32 %v1475, %v1558
        %v1711 = vmul.f32 %v1475, %v1562
        %v1712 = vmul.f32 %v1475, %v1566
        %v1713 = vmul.f32 %v1475, %v1570
        %v1714 = vmul.f32 %v1475, %v1574
        %v1715 = vmul.f32 %v1479, %v1538
        %v1716 = vmul.f32 %v1479, %v1542
        %v1717 = vmul.f32 %v1479, %v1546
        %v1718 = vmul.f32 %v1479, %v1550
        %v1719 = vmul.f32 %v1479, %v1554
        %v1720 = vmul.f32 %v1479, %v1558
        %v1721 = vmul.f32 %v1479, %v1562
        %v1722 = vmul.f32 %v1479, %v1566
        %v1723 = vmul.f32 %v1479, %v1570
        %v1724 = vmul.f32 %v1479, %v1574
        %v1725 = vmul.f32 %v1483, %v1538
        %v1726 = vmul.f32 %v1483, %v1542
        %v1727 = vmul.f32 %v1483, %v1546
        %v1728 = vmul.f32 %v1483, %v1550
        %v1729 = vmul.f32 %v1483, %v1554
        %v1730 = vmul.f32 %v1483, %v1558
        %v1731 = vmul.f32 %v1483, %v1562
        %v1732 = vmul.f32 %v1483, %v1566
        %v1733 = vmul.f32 %v1483, %v1570
        %v1734 = vmul.f32 %v1483, %v1574
        %v1735 = vadd.f32 %v1261, %v1575
        %v1736 = vadd.f32 %v1262, %v1576
        %v1737 = vadd.f32 %v1263, %v1577
        %v1738 = vadd.f32 %v1264, %v1578
        %v1739 = vadd.f32 %v1265, %v1579
        %v1740 = vadd.f32 %v1266, %v1580
        %v1741 = vadd.f32 %v1267, %v1581
        %v1742 = vadd.f32 %v1268, %v1582
        %v1743 = vadd.f32 %v1269, %v1583
        %v1744 = vadd.f32 %v1270, %v1584
        %v1745 = vadd.f32 %v1271, %v1585
        %v1746 = vadd.f32 %v1272, %v1586
        %v1747 = vadd.f32 %v1273, %v1587
        %v1748 = vadd.f32 %v1274, %v1588
        %v1749 = vadd.f32 %v1275, %v1589
        %v1750 = vadd.f32 %v1276, %v1590
        %v1751 = vadd.f32 %v1277, %v1591
        %v1752 = vadd.f32 %v1278, %v1592
        %v1753 = vadd.f32 %v1279, %v1593
        %v1754 = vadd.f32 %v1280, %v1594
        %v1755 = vadd.f32 %v1281, %v1595
        %v1756 = vadd.f32 %v1282, %v1596
        %v1757 = vadd.f32 %v1283, %v1597
        %v1758 = vadd.f32 %v1284, %v1598
        %v1759 = vadd.f32 %v1285, %v1599
        %v1760 = vadd.f32 %v1286, %v1600
        %v1761 = vadd.f32 %v1287, %v1601
        %v1762 = vadd.f32 %v1288, %v1602
        %v1763 = vadd.f32 %v1289, %v1603
        %v1764 = vadd.f32 %v1290, %v1604
        %v1765 = vadd.f32 %v1291, %v1605
        %v1766 = vadd.f32 %v1292, %v1606
        %v1767 = vadd.f32 %v1293, %v1607
        %v1768 = vadd.f32 %v1294, %v1608
        %v1769 = vadd.f32 %v1295, %v1609
        %v1770 = vadd.f32 %v1296, %v1610
        %v1771 = vadd.f32 %v1297, %v1611
        %v1772 = vadd.f32 %v1298, %v1612
        %v1773 = vadd.f32 %v1299, %v1613
        %v1774 = vadd.f32 %v1300, %v1614
        %v1775 = vadd.f32 %v1301, %v1615
        %v1776 = vadd.f32 %v1302, %v1616
        %v1777 = vadd.f32 %v1303, %v1617
        %v1778 = vadd.f32 %v1304, %v1618
        %v1779 = vadd.f32 %v1305, %v1619
        %v1780 = vadd.f32 %v1306, %v1620
        %v1781 = vadd.f32 %v1307, %v1621
        %v1782 = vadd.f32 %v1308, %v1622
        %v1783 = vadd.f32 %v1309, %v1623
        %v1784 = vadd.f32 %v1310, %v1624
        %v1785 = vadd.f32 %v1311, %v1625
        %v1786 = vadd.f32 %v1312, %v1626
        %v1787 = vadd.f32 %v1313, %v1627
        %v1788 = vadd.f32 %v1314, %v1628
        %v1789 = vadd.f32 %v1315, %v1629
        %v1790 = vadd.f32 %v1316, %v1630
        %v1791 = vadd.f32 %v1317, %v1631
        %v1792 = vadd.f32 %v1318, %v1632
        %v1793 = vadd.f32 %v1319, %v1633
        %v1794 = vadd.f32 %v1320, %v1634
        %v1795 = vadd.f32 %v1321, %v1635
        %v1796 = vadd.f32 %v1322, %v1636
        %v1797 = vadd.f32 %v1323, %v1637
        %v1798 = vadd.f32 %v1324, %v1638
        %v1799 = vadd.f32 %v1325, %v1639
        %v1800 = vadd.f32 %v1326, %v1640
        %v1801 = vadd.f32 %v1327, %v1641
        %v1802 = vadd.f32 %v1328, %v1642
        %v1803 = vadd.f32 %v1329, %v1643
        %v1804 = vadd.f32 %v1330, %v1644
        %v1805 = vadd.f32 %v1331, %v1645
        %v1806 = vadd.f32 %v1332, %v1646
        %v1807 = vadd.f32 %v1333, %v1647
        %v1808 = vadd.f32 %v1334, %v1648
        %v1809 = vadd.f32 %v1335, %v1649
        %v1810 = vadd.f32 %v1336, %v1650
        %v1811 = vadd.f32 %v1337, %v1651
        %v1812 = vadd.f32 %v1338, %v1652
        %v1813 = vadd.f32 %v1339, %v1653
        %v1814 = vadd.f32 %v1340, %v1654
        %v1815 = vadd.f32 %v1341, %v1655
        %v1816 = vadd.f32 %v1342, %v1656
        %v1817 = vadd.f32 %v1343, %v1657
        %v1818 = vadd.f32 %v1344, %v1658
        %v1819 = vadd.f32 %v1345, %v1659
        %v1820 = vadd.f32 %v1346, %v1660
        %v1821 = vadd.f32 %v1347, %v1661
        %v1822 = vadd.f32 %v1348, %v1662
        %v1823 = vadd.f32 %v1349, %v1663
        %v1824 = vadd.f32 %v1350, %v1664
        %v1825 = vadd.f32 %v1351, %v1665
        %v1826 = vadd.f32 %v1352, %v1666
        %v1827 = vadd.f32 %v1353, %v1667
        %v1828 = vadd.f32 %v1354, %v1668
        %v1829 = vadd.f32 %v1355, %v1669
        %v1830 = vadd.f32 %v1356, %v1670
        %v1831 = vadd.f32 %v1357, %v1671
        %v1832 = vadd.f32 %v1358, %v1672
        %v1833 = vadd.f32 %v1359, %v1673
        %v1834 = vadd.f32 %v1360, %v1674
        %v1835 = vadd.f32 %v1361, %v1675
        %v1836 = vadd.f32 %v1362, %v1676
        %v1837 = vadd.f32 %v1363, %v1677
        %v1838 = vadd.f32 %v1364, %v1678
        %v1839 = vadd.f32 %v1365, %v1679
        %v1840 = vadd.f32 %v1366, %v1680
        %v1841 = vadd.f32 %v1367, %v1681
        %v1842 = vadd.f32 %v1368, %v1682
        %v1843 = vadd.f32 %v1369, %v1683
        %v1844 = vadd.f32 %v1370, %v1684
        %v1845 = vadd.f32 %v1371, %v1685
        %v1846 = vadd.f32 %v1372, %v1686
        %v1847 = vadd.f32 %v1373, %v1687
        %v1848 = vadd.f32 %v1374, %v1688
        %v1849 = vadd.f32 %v1375, %v1689
        %v1850 = vadd.f32 %v1376, %v1690
        %v1851 = vadd.f32 %v1377, %v1691
        %v1852 = vadd.f32 %v1378, %v1692
        %v1853 = vadd.f32 %v1379, %v1693
        %v1854 = vadd.f32 %v1380, %v1694
        %v1855 = vadd.f32 %v1381, %v1695
        %v1856 = vadd.f32 %v1382, %v1696
        %v1857 = vadd.f32 %v1383, %v1697
        %v1858 = vadd.f32 %v1384, %v1698
        %v1859 = vadd.f32 %v1385, %v1699
        %v1860 = vadd.f32 %v1386, %v1700
        %v1861 = vadd.f32 %v1387, %v1701
        %v1862 = vadd.f32 %v1388, %v1702
        %v1863 = vadd.f32 %v1389, %v1703
        %v1864 = vadd.f32 %v1390, %v1704
        %v1865 = vadd.f32 %v1391, %v1705
        %v1866 = vadd.f32 %v1392, %v1706
        %v1867 = vadd.f32 %v1393, %v1707
        %v1868 = vadd.f32 %v1394, %v1708
        %v1869 = vadd.f32 %v1395, %v1709
        %v1870 = vadd.f32 %v1396, %v1710
        %v1871 = vadd.f32 %v1397, %v1711
        %v1872 = vadd.f32 %v1398, %v1712
        %v1873 = vadd.f32 %v1399, %v1713
        %v1874 = vadd.f32 %v1400, %v1714
        %v1875 = vadd.f32 %v1401, %v1715
        %v1876 = vadd.f32 %v1402, %v1716
        %v1877 = vadd.f32 %v1403, %v1717
        %v1878 = vadd.f32 %v1404, %v1718
        %v1879 = vadd.f32 %v1405, %v1719
        %v1880 = vadd.f32 %v1406, %v1720
        %v1881 = vadd.f32 %v1407, %v1721
        %v1882 = vadd.f32 %v1408, %v1722
        %v1883 = vadd.f32 %v1409, %v1723
        %v1884 = vadd.f32 %v1410, %v1724
        %v1885 = vadd.f32 %v1411, %v1725
        %v1886 = vadd.f32 %v1412, %v1726
        %v1887 = vadd.f32 %v1413, %v1727
        %v1888 = vadd.f32 %v1414, %v1728
        %v1889 = vadd.f32 %v1415, %v1729
        %v1890 = vadd.f32 %v1416, %v1730
        %v1891 = vadd.f32 %v1417, %v1731
        %v1892 = vadd.f32 %v1418, %v1732
        %v1893 = vadd.f32 %v1419, %v1733
        %v1894 = vadd.f32 %v1420, %v1734
        %1895 = vset.pattern.permute.xlu0 3
        %1896 = vperm.xlu0 %1895, %v340
        %v1897 = vpop.permute.xlu0 %1896
        %1899 = vset.pattern.permute.xlu0 3
        %1900 = vperm.xlu0 %1899, %v341
        %v1901 = vpop.permute.xlu0 %1900
        %1903 = vset.pattern.permute.xlu0 3
        %1904 = vperm.xlu0 %1903, %v342
        %v1905 = vpop.permute.xlu0 %1904
        %1907 = vset.pattern.permute.xlu0 3
        %1908 = vperm.xlu0 %1907, %v343
        %v1909 = vpop.permute.xlu0 %1908
        %1911 = vset.pattern.permute.xlu0 3
        %1912 = vperm.xlu0 %1911, %v344
        %v1913 = vpop.permute.xlu0 %1912
        %1915 = vset.pattern.permute.xlu0 3
        %1916 = vperm.xlu0 %1915, %v345
        %v1917 = vpop.permute.xlu0 %1916
        %1919 = vset.pattern.permute.xlu0 3
        %1920 = vperm.xlu0 %1919, %v346
        %v1921 = vpop.permute.xlu0 %1920
        %1923 = vset.pattern.permute.xlu0 3
        %1924 = vperm.xlu0 %1923, %v347
        %v1925 = vpop.permute.xlu0 %1924
        %1927 = vset.pattern.permute.xlu0 3
        %1928 = vperm.xlu0 %1927, %v348
        %v1929 = vpop.permute.xlu0 %1928
        %1931 = vset.pattern.permute.xlu0 3
        %1932 = vperm.xlu0 %1931, %v349
        %v1933 = vpop.permute.xlu0 %1932
        %1935 = vset.pattern.permute.xlu0 3
        %1936 = vperm.xlu0 %1935, %v350
        %v1937 = vpop.permute.xlu0 %1936
        %1939 = vset.pattern.permute.xlu0 3
        %1940 = vperm.xlu0 %1939, %v351
        %v1941 = vpop.permute.xlu0 %1940
        %1943 = vset.pattern.permute.xlu0 3
        %1944 = vperm.xlu0 %1943, %v352
        %v1945 = vpop.permute.xlu0 %1944
        %1947 = vset.pattern.permute.xlu0 3
        %1948 = vperm.xlu0 %1947, %v353
        %v1949 = vpop.permute.xlu0 %1948
        %1951 = vset.pattern.permute.xlu0 3
        %1952 = vperm.xlu0 %1951, %v354
        %v1953 = vpop.permute.xlu0 %1952
        %1955 = vset.pattern.permute.xlu0 3
        %1956 = vperm.xlu0 %1955, %v355
        %v1957 = vpop.permute.xlu0 %1956
        %v1959 = vlaneseq
        %v1960 = vshrl.u32 %v1959, 7
        %v1961 = vsub.s32 3, %v1960
        %v1962 = vrot.slane %v335, %v1961
        %v1963 = vlaneseq
        %v1964 = vshrl.u32 %v1963, 7
        %v1965 = vsub.s32 7, %v1964
        %v1966 = vrot.slane %v335, %v1965
        %v1967 = vlaneseq
        %v1968 = vshrl.u32 %v1967, 7
        %v1969 = vsub.s32 3, %v1968
        %v1970 = vrot.slane %v336, %v1969
        %v1971 = vlaneseq
        %v1972 = vshrl.u32 %v1971, 7
        %v1973 = vsub.s32 7, %v1972
        %v1974 = vrot.slane %v336, %v1973
        %v1975 = vlaneseq
        %v1976 = vshrl.u32 %v1975, 7
        %v1977 = vsub.s32 3, %v1976
        %v1978 = vrot.slane %v337, %v1977
        %v1979 = vlaneseq
        %v1980 = vshrl.u32 %v1979, 7
        %v1981 = vsub.s32 7, %v1980
        %v1982 = vrot.slane %v337, %v1981
        %v1983 = vlaneseq
        %v1984 = vshrl.u32 %v1983, 7
        %v1985 = vsub.s32 3, %v1984
        %v1986 = vrot.slane %v338, %v1985
        %v1987 = vlaneseq
        %v1988 = vshrl.u32 %v1987, 7
        %v1989 = vsub.s32 7, %v1988
        %v1990 = vrot.slane %v338, %v1989
        %v1991 = vlaneseq
        %v1992 = vshrl.u32 %v1991, 7
        %v1993 = vsub.s32 3, %v1992
        %v1994 = vrot.slane %v339, %v1993
        %v1995 = vlaneseq
        %v1996 = vshrl.u32 %v1995, 7
        %v1997 = vsub.s32 7, %v1996
        %v1998 = vrot.slane %v339, %v1997
        %v2009 = vlaneseq
        %v2010 = vshrl.u32 %v2009, 7
        %v2011 = vsub.s32 3, %v2010
        %v2012 = vrot.slane %v1962, %v2011
        %v2013 = vlaneseq
        %v2014 = vshrl.u32 %v2013, 7
        %v2015 = vsub.s32 3, %v2014
        %v2016 = vrot.slane %v1966, %v2015
        %v2017 = vlaneseq
        %v2018 = vshrl.u32 %v2017, 7
        %v2019 = vsub.s32 3, %v2018
        %v2020 = vrot.slane %v1970, %v2019
        %v2021 = vlaneseq
        %v2022 = vshrl.u32 %v2021, 7
        %v2023 = vsub.s32 3, %v2022
        %v2024 = vrot.slane %v1974, %v2023
        %v2025 = vlaneseq
        %v2026 = vshrl.u32 %v2025, 7
        %v2027 = vsub.s32 3, %v2026
        %v2028 = vrot.slane %v1978, %v2027
        %v2029 = vlaneseq
        %v2030 = vshrl.u32 %v2029, 7
        %v2031 = vsub.s32 3, %v2030
        %v2032 = vrot.slane %v1982, %v2031
        %v2033 = vlaneseq
        %v2034 = vshrl.u32 %v2033, 7
        %v2035 = vsub.s32 3, %v2034
        %v2036 = vrot.slane %v1986, %v2035
        %v2037 = vlaneseq
        %v2038 = vshrl.u32 %v2037, 7
        %v2039 = vsub.s32 3, %v2038
        %v2040 = vrot.slane %v1990, %v2039
        %v2041 = vlaneseq
        %v2042 = vshrl.u32 %v2041, 7
        %v2043 = vsub.s32 3, %v2042
        %v2044 = vrot.slane %v1994, %v2043
        %v2045 = vlaneseq
        %v2046 = vshrl.u32 %v2045, 7
        %v2047 = vsub.s32 3, %v2046
        %v2048 = vrot.slane %v1998, %v2047
        %v2049 = vmul.f32 %v1897, %v2012
        %v2050 = vmul.f32 %v1897, %v2016
        %v2051 = vmul.f32 %v1897, %v2020
        %v2052 = vmul.f32 %v1897, %v2024
        %v2053 = vmul.f32 %v1897, %v2028
        %v2054 = vmul.f32 %v1897, %v2032
        %v2055 = vmul.f32 %v1897, %v2036
        %v2056 = vmul.f32 %v1897, %v2040
        %v2057 = vmul.f32 %v1897, %v2044
        %v2058 = vmul.f32 %v1897, %v2048
        %v2059 = vmul.f32 %v1901, %v2012
        %v2060 = vmul.f32 %v1901, %v2016
        %v2061 = vmul.f32 %v1901, %v2020
        %v2062 = vmul.f32 %v1901, %v2024
        %v2063 = vmul.f32 %v1901, %v2028
        %v2064 = vmul.f32 %v1901, %v2032
        %v2065 = vmul.f32 %v1901, %v2036
        %v2066 = vmul.f32 %v1901, %v2040
        %v2067 = vmul.f32 %v1901, %v2044
        %v2068 = vmul.f32 %v1901, %v2048
        %v2069 = vmul.f32 %v1905, %v2012
        %v2070 = vmul.f32 %v1905, %v2016
        %v2071 = vmul.f32 %v1905, %v2020
        %v2072 = vmul.f32 %v1905, %v2024
        %v2073 = vmul.f32 %v1905, %v2028
        %v2074 = vmul.f32 %v1905, %v2032
        %v2075 = vmul.f32 %v1905, %v2036
        %v2076 = vmul.f32 %v1905, %v2040
        %v2077 = vmul.f32 %v1905, %v2044
        %v2078 = vmul.f32 %v1905, %v2048
        %v2079 = vmul.f32 %v1909, %v2012
        %v2080 = vmul.f32 %v1909, %v2016
        %v2081 = vmul.f32 %v1909, %v2020
        %v2082 = vmul.f32 %v1909, %v2024
        %v2083 = vmul.f32 %v1909, %v2028
        %v2084 = vmul.f32 %v1909, %v2032
        %v2085 = vmul.f32 %v1909, %v2036
        %v2086 = vmul.f32 %v1909, %v2040
        %v2087 = vmul.f32 %v1909, %v2044
        %v2088 = vmul.f32 %v1909, %v2048
        %v2089 = vmul.f32 %v1913, %v2012
        %v2090 = vmul.f32 %v1913, %v2016
        %v2091 = vmul.f32 %v1913, %v2020
        %v2092 = vmul.f32 %v1913, %v2024
        %v2093 = vmul.f32 %v1913, %v2028
        %v2094 = vmul.f32 %v1913, %v2032
        %v2095 = vmul.f32 %v1913, %v2036
        %v2096 = vmul.f32 %v1913, %v2040
        %v2097 = vmul.f32 %v1913, %v2044
        %v2098 = vmul.f32 %v1913, %v2048
        %v2099 = vmul.f32 %v1917, %v2012
        %v2100 = vmul.f32 %v1917, %v2016
        %v2101 = vmul.f32 %v1917, %v2020
        %v2102 = vmul.f32 %v1917, %v2024
        %v2103 = vmul.f32 %v1917, %v2028
        %v2104 = vmul.f32 %v1917, %v2032
        %v2105 = vmul.f32 %v1917, %v2036
        %v2106 = vmul.f32 %v1917, %v2040
        %v2107 = vmul.f32 %v1917, %v2044
        %v2108 = vmul.f32 %v1917, %v2048
        %v2109 = vmul.f32 %v1921, %v2012
        %v2110 = vmul.f32 %v1921, %v2016
        %v2111 = vmul.f32 %v1921, %v2020
        %v2112 = vmul.f32 %v1921, %v2024
        %v2113 = vmul.f32 %v1921, %v2028
        %v2114 = vmul.f32 %v1921, %v2032
        %v2115 = vmul.f32 %v1921, %v2036
        %v2116 = vmul.f32 %v1921, %v2040
        %v2117 = vmul.f32 %v1921, %v2044
        %v2118 = vmul.f32 %v1921, %v2048
        %v2119 = vmul.f32 %v1925, %v2012
        %v2120 = vmul.f32 %v1925, %v2016
        %v2121 = vmul.f32 %v1925, %v2020
        %v2122 = vmul.f32 %v1925, %v2024
        %v2123 = vmul.f32 %v1925, %v2028
        %v2124 = vmul.f32 %v1925, %v2032
        %v2125 = vmul.f32 %v1925, %v2036
        %v2126 = vmul.f32 %v1925, %v2040
        %v2127 = vmul.f32 %v1925, %v2044
        %v2128 = vmul.f32 %v1925, %v2048
        %v2129 = vmul.f32 %v1929, %v2012
        %v2130 = vmul.f32 %v1929, %v2016
        %v2131 = vmul.f32 %v1929, %v2020
        %v2132 = vmul.f32 %v1929, %v2024
        %v2133 = vmul.f32 %v1929, %v2028
        %v2134 = vmul.f32 %v1929, %v2032
        %v2135 = vmul.f32 %v1929, %v2036
        %v2136 = vmul.f32 %v1929, %v2040
        %v2137 = vmul.f32 %v1929, %v2044
        %v2138 = vmul.f32 %v1929, %v2048
        %v2139 = vmul.f32 %v1933, %v2012
        %v2140 = vmul.f32 %v1933, %v2016
        %v2141 = vmul.f32 %v1933, %v2020
        %v2142 = vmul.f32 %v1933, %v2024
        %v2143 = vmul.f32 %v1933, %v2028
        %v2144 = vmul.f32 %v1933, %v2032
        %v2145 = vmul.f32 %v1933, %v2036
        %v2146 = vmul.f32 %v1933, %v2040
        %v2147 = vmul.f32 %v1933, %v2044
        %v2148 = vmul.f32 %v1933, %v2048
        %v2149 = vmul.f32 %v1937, %v2012
        %v2150 = vmul.f32 %v1937, %v2016
        %v2151 = vmul.f32 %v1937, %v2020
        %v2152 = vmul.f32 %v1937, %v2024
        %v2153 = vmul.f32 %v1937, %v2028
        %v2154 = vmul.f32 %v1937, %v2032
        %v2155 = vmul.f32 %v1937, %v2036
        %v2156 = vmul.f32 %v1937, %v2040
        %v2157 = vmul.f32 %v1937, %v2044
        %v2158 = vmul.f32 %v1937, %v2048
        %v2159 = vmul.f32 %v1941, %v2012
        %v2160 = vmul.f32 %v1941, %v2016
        %v2161 = vmul.f32 %v1941, %v2020
        %v2162 = vmul.f32 %v1941, %v2024
        %v2163 = vmul.f32 %v1941, %v2028
        %v2164 = vmul.f32 %v1941, %v2032
        %v2165 = vmul.f32 %v1941, %v2036
        %v2166 = vmul.f32 %v1941, %v2040
        %v2167 = vmul.f32 %v1941, %v2044
        %v2168 = vmul.f32 %v1941, %v2048
        %v2169 = vmul.f32 %v1945, %v2012
        %v2170 = vmul.f32 %v1945, %v2016
        %v2171 = vmul.f32 %v1945, %v2020
        %v2172 = vmul.f32 %v1945, %v2024
        %v2173 = vmul.f32 %v1945, %v2028
        %v2174 = vmul.f32 %v1945, %v2032
        %v2175 = vmul.f32 %v1945, %v2036
        %v2176 = vmul.f32 %v1945, %v2040
        %v2177 = vmul.f32 %v1945, %v2044
        %v2178 = vmul.f32 %v1945, %v2048
        %v2179 = vmul.f32 %v1949, %v2012
        %v2180 = vmul.f32 %v1949, %v2016
        %v2181 = vmul.f32 %v1949, %v2020
        %v2182 = vmul.f32 %v1949, %v2024
        %v2183 = vmul.f32 %v1949, %v2028
        %v2184 = vmul.f32 %v1949, %v2032
        %v2185 = vmul.f32 %v1949, %v2036
        %v2186 = vmul.f32 %v1949, %v2040
        %v2187 = vmul.f32 %v1949, %v2044
        %v2188 = vmul.f32 %v1949, %v2048
        %v2189 = vmul.f32 %v1953, %v2012
        %v2190 = vmul.f32 %v1953, %v2016
        %v2191 = vmul.f32 %v1953, %v2020
        %v2192 = vmul.f32 %v1953, %v2024
        %v2193 = vmul.f32 %v1953, %v2028
        %v2194 = vmul.f32 %v1953, %v2032
        %v2195 = vmul.f32 %v1953, %v2036
        %v2196 = vmul.f32 %v1953, %v2040
        %v2197 = vmul.f32 %v1953, %v2044
        %v2198 = vmul.f32 %v1953, %v2048
        %v2199 = vmul.f32 %v1957, %v2012
        %v2200 = vmul.f32 %v1957, %v2016
        %v2201 = vmul.f32 %v1957, %v2020
        %v2202 = vmul.f32 %v1957, %v2024
        %v2203 = vmul.f32 %v1957, %v2028
        %v2204 = vmul.f32 %v1957, %v2032
        %v2205 = vmul.f32 %v1957, %v2036
        %v2206 = vmul.f32 %v1957, %v2040
        %v2207 = vmul.f32 %v1957, %v2044
        %v2208 = vmul.f32 %v1957, %v2048
        %v2209 = vadd.f32 %v1735, %v2049
        %v2210 = vadd.f32 %v1736, %v2050
        %v2211 = vadd.f32 %v1737, %v2051
        %v2212 = vadd.f32 %v1738, %v2052
        %v2213 = vadd.f32 %v1739, %v2053
        %v2214 = vadd.f32 %v1740, %v2054
        %v2215 = vadd.f32 %v1741, %v2055
        %v2216 = vadd.f32 %v1742, %v2056
        %v2217 = vadd.f32 %v1743, %v2057
        %v2218 = vadd.f32 %v1744, %v2058
        %v2219 = vadd.f32 %v1745, %v2059
        %v2220 = vadd.f32 %v1746, %v2060
        %v2221 = vadd.f32 %v1747, %v2061
        %v2222 = vadd.f32 %v1748, %v2062
        %v2223 = vadd.f32 %v1749, %v2063
        %v2224 = vadd.f32 %v1750, %v2064
        %v2225 = vadd.f32 %v1751, %v2065
        %v2226 = vadd.f32 %v1752, %v2066
        %v2227 = vadd.f32 %v1753, %v2067
        %v2228 = vadd.f32 %v1754, %v2068
        %v2229 = vadd.f32 %v1755, %v2069
        %v2230 = vadd.f32 %v1756, %v2070
        %v2231 = vadd.f32 %v1757, %v2071
        %v2232 = vadd.f32 %v1758, %v2072
        %v2233 = vadd.f32 %v1759, %v2073
        %v2234 = vadd.f32 %v1760, %v2074
        %v2235 = vadd.f32 %v1761, %v2075
        %v2236 = vadd.f32 %v1762, %v2076
        %v2237 = vadd.f32 %v1763, %v2077
        %v2238 = vadd.f32 %v1764, %v2078
        %v2239 = vadd.f32 %v1765, %v2079
        %v2240 = vadd.f32 %v1766, %v2080
        %v2241 = vadd.f32 %v1767, %v2081
        %v2242 = vadd.f32 %v1768, %v2082
        %v2243 = vadd.f32 %v1769, %v2083
        %v2244 = vadd.f32 %v1770, %v2084
        %v2245 = vadd.f32 %v1771, %v2085
        %v2246 = vadd.f32 %v1772, %v2086
        %v2247 = vadd.f32 %v1773, %v2087
        %v2248 = vadd.f32 %v1774, %v2088
        %v2249 = vadd.f32 %v1775, %v2089
        %v2250 = vadd.f32 %v1776, %v2090
        %v2251 = vadd.f32 %v1777, %v2091
        %v2252 = vadd.f32 %v1778, %v2092
        %v2253 = vadd.f32 %v1779, %v2093
        %v2254 = vadd.f32 %v1780, %v2094
        %v2255 = vadd.f32 %v1781, %v2095
        %v2256 = vadd.f32 %v1782, %v2096
        %v2257 = vadd.f32 %v1783, %v2097
        %v2258 = vadd.f32 %v1784, %v2098
        %v2259 = vadd.f32 %v1785, %v2099
        %v2260 = vadd.f32 %v1786, %v2100
        %v2261 = vadd.f32 %v1787, %v2101
        %v2262 = vadd.f32 %v1788, %v2102
        %v2263 = vadd.f32 %v1789, %v2103
        %v2264 = vadd.f32 %v1790, %v2104
        %v2265 = vadd.f32 %v1791, %v2105
        %v2266 = vadd.f32 %v1792, %v2106
        %v2267 = vadd.f32 %v1793, %v2107
        %v2268 = vadd.f32 %v1794, %v2108
        %v2269 = vadd.f32 %v1795, %v2109
        %v2270 = vadd.f32 %v1796, %v2110
        %v2271 = vadd.f32 %v1797, %v2111
        %v2272 = vadd.f32 %v1798, %v2112
        %v2273 = vadd.f32 %v1799, %v2113
        %v2274 = vadd.f32 %v1800, %v2114
        %v2275 = vadd.f32 %v1801, %v2115
        %v2276 = vadd.f32 %v1802, %v2116
        %v2277 = vadd.f32 %v1803, %v2117
        %v2278 = vadd.f32 %v1804, %v2118
        %v2279 = vadd.f32 %v1805, %v2119
        %v2280 = vadd.f32 %v1806, %v2120
        %v2281 = vadd.f32 %v1807, %v2121
        %v2282 = vadd.f32 %v1808, %v2122
        %v2283 = vadd.f32 %v1809, %v2123
        %v2284 = vadd.f32 %v1810, %v2124
        %v2285 = vadd.f32 %v1811, %v2125
        %v2286 = vadd.f32 %v1812, %v2126
        %v2287 = vadd.f32 %v1813, %v2127
        %v2288 = vadd.f32 %v1814, %v2128
        %v2289 = vadd.f32 %v1815, %v2129
        %v2290 = vadd.f32 %v1816, %v2130
        %v2291 = vadd.f32 %v1817, %v2131
        %v2292 = vadd.f32 %v1818, %v2132
        %v2293 = vadd.f32 %v1819, %v2133
        %v2294 = vadd.f32 %v1820, %v2134
        %v2295 = vadd.f32 %v1821, %v2135
        %v2296 = vadd.f32 %v1822, %v2136
        %v2297 = vadd.f32 %v1823, %v2137
        %v2298 = vadd.f32 %v1824, %v2138
        %v2299 = vadd.f32 %v1825, %v2139
        %v2300 = vadd.f32 %v1826, %v2140
        %v2301 = vadd.f32 %v1827, %v2141
        %v2302 = vadd.f32 %v1828, %v2142
        %v2303 = vadd.f32 %v1829, %v2143
        %v2304 = vadd.f32 %v1830, %v2144
        %v2305 = vadd.f32 %v1831, %v2145
        %v2306 = vadd.f32 %v1832, %v2146
        %v2307 = vadd.f32 %v1833, %v2147
        %v2308 = vadd.f32 %v1834, %v2148
        %v2309 = vadd.f32 %v1835, %v2149
        %v2310 = vadd.f32 %v1836, %v2150
        %v2311 = vadd.f32 %v1837, %v2151
        %v2312 = vadd.f32 %v1838, %v2152
        %v2313 = vadd.f32 %v1839, %v2153
        %v2314 = vadd.f32 %v1840, %v2154
        %v2315 = vadd.f32 %v1841, %v2155
        %v2316 = vadd.f32 %v1842, %v2156
        %v2317 = vadd.f32 %v1843, %v2157
        %v2318 = vadd.f32 %v1844, %v2158
        %v2319 = vadd.f32 %v1845, %v2159
        %v2320 = vadd.f32 %v1846, %v2160
        %v2321 = vadd.f32 %v1847, %v2161
        %v2322 = vadd.f32 %v1848, %v2162
        %v2323 = vadd.f32 %v1849, %v2163
        %v2324 = vadd.f32 %v1850, %v2164
        %v2325 = vadd.f32 %v1851, %v2165
        %v2326 = vadd.f32 %v1852, %v2166
        %v2327 = vadd.f32 %v1853, %v2167
        %v2328 = vadd.f32 %v1854, %v2168
        %v2329 = vadd.f32 %v1855, %v2169
        %v2330 = vadd.f32 %v1856, %v2170
        %v2331 = vadd.f32 %v1857, %v2171
        %v2332 = vadd.f32 %v1858, %v2172
        %v2333 = vadd.f32 %v1859, %v2173
        %v2334 = vadd.f32 %v1860, %v2174
        %v2335 = vadd.f32 %v1861, %v2175
        %v2336 = vadd.f32 %v1862, %v2176
        %v2337 = vadd.f32 %v1863, %v2177
        %v2338 = vadd.f32 %v1864, %v2178
        %v2339 = vadd.f32 %v1865, %v2179
        %v2340 = vadd.f32 %v1866, %v2180
        %v2341 = vadd.f32 %v1867, %v2181
        %v2342 = vadd.f32 %v1868, %v2182
        %v2343 = vadd.f32 %v1869, %v2183
        %v2344 = vadd.f32 %v1870, %v2184
        %v2345 = vadd.f32 %v1871, %v2185
        %v2346 = vadd.f32 %v1872, %v2186
        %v2347 = vadd.f32 %v1873, %v2187
        %v2348 = vadd.f32 %v1874, %v2188
        %v2349 = vadd.f32 %v1875, %v2189
        %v2350 = vadd.f32 %v1876, %v2190
        %v2351 = vadd.f32 %v1877, %v2191
        %v2352 = vadd.f32 %v1878, %v2192
        %v2353 = vadd.f32 %v1879, %v2193
        %v2354 = vadd.f32 %v1880, %v2194
        %v2355 = vadd.f32 %v1881, %v2195
        %v2356 = vadd.f32 %v1882, %v2196
        %v2357 = vadd.f32 %v1883, %v2197
        %v2358 = vadd.f32 %v1884, %v2198
        %v2359 = vadd.f32 %v1885, %v2199
        %v2360 = vadd.f32 %v1886, %v2200
        %v2361 = vadd.f32 %v1887, %v2201
        %v2362 = vadd.f32 %v1888, %v2202
        %v2363 = vadd.f32 %v1889, %v2203
        %v2364 = vadd.f32 %v1890, %v2204
        %v2365 = vadd.f32 %v1891, %v2205
        %v2366 = vadd.f32 %v1892, %v2206
        %v2367 = vadd.f32 %v1893, %v2207
        %v2368 = vadd.f32 %v1894, %v2208
        %v2369 = vmax.f32 %v2209, 0.0
        %v2370 = vmax.f32 %v2210, 0.0
        %v2371 = vmax.f32 %v2211, 0.0
        %v2372 = vmax.f32 %v2212, 0.0
        %v2373 = vmax.f32 %v2213, 0.0
        %v2374 = vmax.f32 %v2214, 0.0
        %v2375 = vmax.f32 %v2215, 0.0
        %v2376 = vmax.f32 %v2216, 0.0
        %v2377 = vmax.f32 %v2217, 0.0
        %v2378 = vmax.f32 %v2218, 0.0
        %v2379 = vmax.f32 %v2219, 0.0
        %v2380 = vmax.f32 %v2220, 0.0
        %v2381 = vmax.f32 %v2221, 0.0
        %v2382 = vmax.f32 %v2222, 0.0
        %v2383 = vmax.f32 %v2223, 0.0
        %v2384 = vmax.f32 %v2224, 0.0
        %v2385 = vmax.f32 %v2225, 0.0
        %v2386 = vmax.f32 %v2226, 0.0
        %v2387 = vmax.f32 %v2227, 0.0
        %v2388 = vmax.f32 %v2228, 0.0
        %v2389 = vmax.f32 %v2229, 0.0
        %v2390 = vmax.f32 %v2230, 0.0
        %v2391 = vmax.f32 %v2231, 0.0
        %v2392 = vmax.f32 %v2232, 0.0
        %v2393 = vmax.f32 %v2233, 0.0
        %v2394 = vmax.f32 %v2234, 0.0
        %v2395 = vmax.f32 %v2235, 0.0
        %v2396 = vmax.f32 %v2236, 0.0
        %v2397 = vmax.f32 %v2237, 0.0
        %v2398 = vmax.f32 %v2238, 0.0
        %v2399 = vmax.f32 %v2239, 0.0
        %v2400 = vmax.f32 %v2240, 0.0
        %v2401 = vmax.f32 %v2241, 0.0
        %v2402 = vmax.f32 %v2242, 0.0
        %v2403 = vmax.f32 %v2243, 0.0
        %v2404 = vmax.f32 %v2244, 0.0
        %v2405 = vmax.f32 %v2245, 0.0
        %v2406 = vmax.f32 %v2246, 0.0
        %v2407 = vmax.f32 %v2247, 0.0
        %v2408 = vmax.f32 %v2248, 0.0
        %v2409 = vmax.f32 %v2249, 0.0
        %v2410 = vmax.f32 %v2250, 0.0
        %v2411 = vmax.f32 %v2251, 0.0
        %v2412 = vmax.f32 %v2252, 0.0
        %v2413 = vmax.f32 %v2253, 0.0
        %v2414 = vmax.f32 %v2254, 0.0
        %v2415 = vmax.f32 %v2255, 0.0
        %v2416 = vmax.f32 %v2256, 0.0
        %v2417 = vmax.f32 %v2257, 0.0
        %v2418 = vmax.f32 %v2258, 0.0
        %v2419 = vmax.f32 %v2259, 0.0
        %v2420 = vmax.f32 %v2260, 0.0
        %v2421 = vmax.f32 %v2261, 0.0
        %v2422 = vmax.f32 %v2262, 0.0
        %v2423 = vmax.f32 %v2263, 0.0
        %v2424 = vmax.f32 %v2264, 0.0
        %v2425 = vmax.f32 %v2265, 0.0
        %v2426 = vmax.f32 %v2266, 0.0
        %v2427 = vmax.f32 %v2267, 0.0
        %v2428 = vmax.f32 %v2268, 0.0
        %v2429 = vmax.f32 %v2269, 0.0
        %v2430 = vmax.f32 %v2270, 0.0
        %v2431 = vmax.f32 %v2271, 0.0
        %v2432 = vmax.f32 %v2272, 0.0
        %v2433 = vmax.f32 %v2273, 0.0
        %v2434 = vmax.f32 %v2274, 0.0
        %v2435 = vmax.f32 %v2275, 0.0
        %v2436 = vmax.f32 %v2276, 0.0
        %v2437 = vmax.f32 %v2277, 0.0
        %v2438 = vmax.f32 %v2278, 0.0
        %v2439 = vmax.f32 %v2279, 0.0
        %v2440 = vmax.f32 %v2280, 0.0
        %v2441 = vmax.f32 %v2281, 0.0
        %v2442 = vmax.f32 %v2282, 0.0
        %v2443 = vmax.f32 %v2283, 0.0
        %v2444 = vmax.f32 %v2284, 0.0
        %v2445 = vmax.f32 %v2285, 0.0
        %v2446 = vmax.f32 %v2286, 0.0
        %v2447 = vmax.f32 %v2287, 0.0
        %v2448 = vmax.f32 %v2288, 0.0
        %v2449 = vmax.f32 %v2289, 0.0
        %v2450 = vmax.f32 %v2290, 0.0
        %v2451 = vmax.f32 %v2291, 0.0
        %v2452 = vmax.f32 %v2292, 0.0
        %v2453 = vmax.f32 %v2293, 0.0
        %v2454 = vmax.f32 %v2294, 0.0
        %v2455 = vmax.f32 %v2295, 0.0
        %v2456 = vmax.f32 %v2296, 0.0
        %v2457 = vmax.f32 %v2297, 0.0
        %v2458 = vmax.f32 %v2298, 0.0
        %v2459 = vmax.f32 %v2299, 0.0
        %v2460 = vmax.f32 %v2300, 0.0
        %v2461 = vmax.f32 %v2301, 0.0
        %v2462 = vmax.f32 %v2302, 0.0
        %v2463 = vmax.f32 %v2303, 0.0
        %v2464 = vmax.f32 %v2304, 0.0
        %v2465 = vmax.f32 %v2305, 0.0
        %v2466 = vmax.f32 %v2306, 0.0
        %v2467 = vmax.f32 %v2307, 0.0
        %v2468 = vmax.f32 %v2308, 0.0
        %v2469 = vmax.f32 %v2309, 0.0
        %v2470 = vmax.f32 %v2310, 0.0
        %v2471 = vmax.f32 %v2311, 0.0
        %v2472 = vmax.f32 %v2312, 0.0
        %v2473 = vmax.f32 %v2313, 0.0
        %v2474 = vmax.f32 %v2314, 0.0
        %v2475 = vmax.f32 %v2315, 0.0
        %v2476 = vmax.f32 %v2316, 0.0
        %v2477 = vmax.f32 %v2317, 0.0
        %v2478 = vmax.f32 %v2318, 0.0
        %v2479 = vmax.f32 %v2319, 0.0
        %v2480 = vmax.f32 %v2320, 0.0
        %v2481 = vmax.f32 %v2321, 0.0
        %v2482 = vmax.f32 %v2322, 0.0
        %v2483 = vmax.f32 %v2323, 0.0
        %v2484 = vmax.f32 %v2324, 0.0
        %v2485 = vmax.f32 %v2325, 0.0
        %v2486 = vmax.f32 %v2326, 0.0
        %v2487 = vmax.f32 %v2327, 0.0
        %v2488 = vmax.f32 %v2328, 0.0
        %v2489 = vmax.f32 %v2329, 0.0
        %v2490 = vmax.f32 %v2330, 0.0
        %v2491 = vmax.f32 %v2331, 0.0
        %v2492 = vmax.f32 %v2332, 0.0
        %v2493 = vmax.f32 %v2333, 0.0
        %v2494 = vmax.f32 %v2334, 0.0
        %v2495 = vmax.f32 %v2335, 0.0
        %v2496 = vmax.f32 %v2336, 0.0
        %v2497 = vmax.f32 %v2337, 0.0
        %v2498 = vmax.f32 %v2338, 0.0
        %v2499 = vmax.f32 %v2339, 0.0
        %v2500 = vmax.f32 %v2340, 0.0
        %v2501 = vmax.f32 %v2341, 0.0
        %v2502 = vmax.f32 %v2342, 0.0
        %v2503 = vmax.f32 %v2343, 0.0
        %v2504 = vmax.f32 %v2344, 0.0
        %v2505 = vmax.f32 %v2345, 0.0
        %v2506 = vmax.f32 %v2346, 0.0
        %v2507 = vmax.f32 %v2347, 0.0
        %v2508 = vmax.f32 %v2348, 0.0
        %v2509 = vmax.f32 %v2349, 0.0
        %v2510 = vmax.f32 %v2350, 0.0
        %v2511 = vmax.f32 %v2351, 0.0
        %v2512 = vmax.f32 %v2352, 0.0
        %v2513 = vmax.f32 %v2353, 0.0
        %v2514 = vmax.f32 %v2354, 0.0
        %v2515 = vmax.f32 %v2355, 0.0
        %v2516 = vmax.f32 %v2356, 0.0
        %v2517 = vmax.f32 %v2357, 0.0
        %v2518 = vmax.f32 %v2358, 0.0
        %v2519 = vmax.f32 %v2359, 0.0
        %v2520 = vmax.f32 %v2360, 0.0
        %v2521 = vmax.f32 %v2361, 0.0
        %v2522 = vmax.f32 %v2362, 0.0
        %v2523 = vmax.f32 %v2363, 0.0
        %v2524 = vmax.f32 %v2364, 0.0
        %v2525 = vmax.f32 %v2365, 0.0
        %v2526 = vmax.f32 %v2366, 0.0
        %v2527 = vmax.f32 %v2367, 0.0
        %v2528 = vmax.f32 %v2368, 0.0
        %v2529 = vld [vmem:[%s3] sm:$0xf]
        %v2530 = vld [vmem:[%s3 + $0x4] sm:$0xf]
        %v2531 = vld [vmem:[%s3 + $0x8] sm:$0xf]
        %v2532 = vld [vmem:[%s3 + $0xc] sm:$0xf]
        %v2533 = vld [vmem:[%s3 + $0x10] sm:$0xf]
        %v2534 = vld [vmem:[%s3 + $0x14] sm:$0xf]
        %v2535 = vld [vmem:[%s3 + $0x18] sm:$0xf]
        %v2536 = vld [vmem:[%s3 + $0x1c] sm:$0xf]
        %v2537 = vpack.c.bf16 %v2379, %v2369
        %v2538 = vpack.c.bf16 %v2380, %v2370
        %v2539 = vpack.c.bf16 %v2381, %v2371
        %v2540 = vpack.c.bf16 %v2382, %v2372
        %v2541 = vpack.c.bf16 %v2383, %v2373
        %v2542 = vpack.c.bf16 %v2384, %v2374
        %v2543 = vpack.c.bf16 %v2385, %v2375
        %v2544 = vpack.c.bf16 %v2386, %v2376
        %v2545 = vpack.c.bf16 %v2387, %v2377
        %v2546 = vpack.c.bf16 %v2388, %v2378
        %v2547 = vpack.c.bf16 %v2399, %v2389
        %v2548 = vpack.c.bf16 %v2400, %v2390
        %v2549 = vpack.c.bf16 %v2401, %v2391
        %v2550 = vpack.c.bf16 %v2402, %v2392
        %v2551 = vpack.c.bf16 %v2403, %v2393
        %v2552 = vpack.c.bf16 %v2404, %v2394
        %v2553 = vpack.c.bf16 %v2405, %v2395
        %v2554 = vpack.c.bf16 %v2406, %v2396
        %v2555 = vpack.c.bf16 %v2407, %v2397
        %v2556 = vpack.c.bf16 %v2408, %v2398
        %v2557 = vpack.c.bf16 %v2419, %v2409
        %v2558 = vpack.c.bf16 %v2420, %v2410
        %v2559 = vpack.c.bf16 %v2421, %v2411
        %v2560 = vpack.c.bf16 %v2422, %v2412
        %v2561 = vpack.c.bf16 %v2423, %v2413
        %v2562 = vpack.c.bf16 %v2424, %v2414
        %v2563 = vpack.c.bf16 %v2425, %v2415
        %v2564 = vpack.c.bf16 %v2426, %v2416
        %v2565 = vpack.c.bf16 %v2427, %v2417
        %v2566 = vpack.c.bf16 %v2428, %v2418
        %v2567 = vpack.c.bf16 %v2439, %v2429
        %v2568 = vpack.c.bf16 %v2440, %v2430
        %v2569 = vpack.c.bf16 %v2441, %v2431
        %v2570 = vpack.c.bf16 %v2442, %v2432
        %v2571 = vpack.c.bf16 %v2443, %v2433
        %v2572 = vpack.c.bf16 %v2444, %v2434
        %v2573 = vpack.c.bf16 %v2445, %v2435
        %v2574 = vpack.c.bf16 %v2446, %v2436
        %v2575 = vpack.c.bf16 %v2447, %v2437
        %v2576 = vpack.c.bf16 %v2448, %v2438
        %v2577 = vpack.c.bf16 %v2459, %v2449
        %v2578 = vpack.c.bf16 %v2460, %v2450
        %v2579 = vpack.c.bf16 %v2461, %v2451
        %v2580 = vpack.c.bf16 %v2462, %v2452
        %v2581 = vpack.c.bf16 %v2463, %v2453
        %v2582 = vpack.c.bf16 %v2464, %v2454
        %v2583 = vpack.c.bf16 %v2465, %v2455
        %v2584 = vpack.c.bf16 %v2466, %v2456
        %v2585 = vpack.c.bf16 %v2467, %v2457
        %v2586 = vpack.c.bf16 %v2468, %v2458
        %v2587 = vpack.c.bf16 %v2479, %v2469
        %v2588 = vpack.c.bf16 %v2480, %v2470
        %v2589 = vpack.c.bf16 %v2481, %v2471
        %v2590 = vpack.c.bf16 %v2482, %v2472
        %v2591 = vpack.c.bf16 %v2483, %v2473
        %v2592 = vpack.c.bf16 %v2484, %v2474
        %v2593 = vpack.c.bf16 %v2485, %v2475
        %v2594 = vpack.c.bf16 %v2486, %v2476
        %v2595 = vpack.c.bf16 %v2487, %v2477
        %v2596 = vpack.c.bf16 %v2488, %v2478
        %v2597 = vpack.c.bf16 %v2499, %v2489
        %v2598 = vpack.c.bf16 %v2500, %v2490
        %v2599 = vpack.c.bf16 %v2501, %v2491
        %v2600 = vpack.c.bf16 %v2502, %v2492
        %v2601 = vpack.c.bf16 %v2503, %v2493
        %v2602 = vpack.c.bf16 %v2504, %v2494
        %v2603 = vpack.c.bf16 %v2505, %v2495
        %v2604 = vpack.c.bf16 %v2506, %v2496
        %v2605 = vpack.c.bf16 %v2507, %v2497
        %v2606 = vpack.c.bf16 %v2508, %v2498
        %v2607 = vpack.c.bf16 %v2519, %v2509
        %v2608 = vpack.c.bf16 %v2520, %v2510
        %v2609 = vpack.c.bf16 %v2521, %v2511
        %v2610 = vpack.c.bf16 %v2522, %v2512
        %v2611 = vpack.c.bf16 %v2523, %v2513
        %v2612 = vpack.c.bf16 %v2524, %v2514
        %v2613 = vpack.c.bf16 %v2525, %v2515
        %v2614 = vpack.c.bf16 %v2526, %v2516
        %v2615 = vpack.c.bf16 %v2527, %v2517
        %v2616 = vpack.c.bf16 %v2528, %v2518
        %v2617 = vld [vmem:[%s4] sm:$0xff]
        %v2618 = vld [vmem:[%s4 + $0x8] sm:$0xff]
        %v2619 = vld [vmem:[%s4 + $0x10] sm:$0xff]
        %v2620 = vld [vmem:[%s4 + $0x18] sm:$0xff]
        %v2621 = vld [vmem:[%s4 + $0x20] sm:$0xff]
        %v2622 = vld [vmem:[%s4 + $0x28] sm:$0xff]
        %v2623 = vld [vmem:[%s4 + $0x30] sm:$0xff]
        %v2624 = vld [vmem:[%s4 + $0x38] sm:$0xff]
        %2626 = vset.pattern.permute.xlu0 0
        %2627 = vperm.xlu0 %2626, %v2617
        %v2628 = vpop.permute.xlu0 %2627
        %2631 = vset.pattern.permute.xlu0 0
        %2632 = vperm.xlu0 %2631, %v2618
        %v2633 = vpop.permute.xlu0 %2632
        %2636 = vset.pattern.permute.xlu0 0
        %2637 = vperm.xlu0 %2636, %v2619
        %v2638 = vpop.permute.xlu0 %2637
        %2641 = vset.pattern.permute.xlu0 0
        %2642 = vperm.xlu0 %2641, %v2620
        %v2643 = vpop.permute.xlu0 %2642
        %2646 = vset.pattern.permute.xlu0 0
        %2647 = vperm.xlu0 %2646, %v2621
        %v2648 = vpop.permute.xlu0 %2647
        %2651 = vset.pattern.permute.xlu0 0
        %2652 = vperm.xlu0 %2651, %v2622
        %v2653 = vpop.permute.xlu0 %2652
        %2656 = vset.pattern.permute.xlu0 0
        %2657 = vperm.xlu0 %2656, %v2623
        %v2658 = vpop.permute.xlu0 %2657
        %2661 = vset.pattern.permute.xlu0 0
        %2662 = vperm.xlu0 %2661, %v2624
        %v2663 = vpop.permute.xlu0 %2662
        %v2673 = vunpack.c.l.b16 %v2529
        %v2674 = vunpack.c.l.b16 %v2530
        %v2675 = vunpack.c.l.b16 %v2531
        %v2676 = vunpack.c.l.b16 %v2532
        %v2677 = vunpack.c.l.b16 %v2533
        %v2678 = vunpack.c.l.b16 %v2534
        %v2679 = vunpack.c.l.b16 %v2535
        %v2680 = vunpack.c.l.b16 %v2536
        %v2681 = vpack.c.b16 %v2674, %v2673
        %v2682 = vpack.c.b16 %v2676, %v2675
        %v2683 = vpack.c.b16 %v2678, %v2677
        %v2684 = vpack.c.b16 %v2680, %v2679
        %2689 = vmatprep.subr.bf16.mxu0 %v2608
        %2690 = vmatpush1.bf16.msra.mxu0 %v2607
        %2691 = vmatprep.subr.bf16.mxu0 %v2598
        %2692 = vmatpush1.bf16.msra.mxu0 %v2597
        %2693 = vmatprep.subr.bf16.mxu0 %v2588
        %2694 = vmatpush1.bf16.msra.mxu0 %v2587
        %2695 = vmatprep.subr.bf16.mxu0 %v2578
        %2696 = vmatpush1.bf16.msra.mxu0 %v2577
        %2697 = vmatprep.subr.bf16.mxu0 %v2568
        %2698 = vmatpush1.bf16.msra.mxu0 %v2567
        %2699 = vmatprep.subr.bf16.mxu0 %v2558
        %2700 = vmatpush1.bf16.msra.mxu0 %v2557
        %2701 = vmatprep.subr.bf16.mxu0 %v2548
        %2702 = vmatpush1.bf16.msra.mxu0 %v2547
        %2703 = vmatprep.subr.bf16.mxu0 %v2538
        %2704 = vmatpush1.bf16.msra.mxu0 %v2537
        %2705 = vmatprep.subr.bf16.mxu0 0
        %2706 = vmatpush2.bf16.msra.mxu0 0
        %2707 = vmatprep.subr.bf16.mxu0 0
        %2708 = vmatpush2.bf16.msra.mxu0 0
        %2709 = vmatprep.subr.bf16.mxu0 0
        %2710 = vmatpush2.bf16.msra.mxu0 0
        %2711 = vmatprep.subr.bf16.mxu0 0
        %2712 = vmatpush2.bf16.msra.mxu0 0
        %2713 = vmatprep.subr.bf16.mxu0 0
        %2714 = vmatpush2.bf16.msra.mxu0 0
        %2715 = vmatprep.subr.bf16.mxu0 0
        %2716 = vmatpush2.bf16.msra.mxu0 0
        %2717 = vmatprep.subr.bf16.mxu0 0
        %2718 = vmatpush2.bf16.msra.mxu0 0
        %2719 = vmatprep.subr.bf16.mxu0 0
        %2720 = vmatpush2.bf16.msra.mxu0 0
        %2721 = vmatprep.mubr.bf16.mxu0 0
        %2722 = vmatmul.mubr.bf16.gmra.mxu0 %v2681
        %v2723 = vpop.f32.mrf.mxu0
        %v2724 = vadd.f32 %v2628, %v2723
        %v2725 = vpop.f32.mrf.mxu0
        %v2726 = vadd.f32 %v2628, %v2725
        %v2727 = vpop.f32.mrf.mxu0
        %v2728 = vadd.f32 %v2633, %v2727
        %v2729 = vpop.f32.mrf.mxu0
        %v2730 = vadd.f32 %v2633, %v2729
        %2731 = vmatprep.mubr.bf16.mxu0 0
        %2732 = vmatmul.mubr.bf16.gmra.mxu0 %v2682
        %v2733 = vpop.f32.mrf.mxu0
        %v2734 = vadd.f32 %v2638, %v2733
        %v2735 = vpop.f32.mrf.mxu0
        %v2736 = vadd.f32 %v2638, %v2735
        %v2737 = vpop.f32.mrf.mxu0
        %v2738 = vadd.f32 %v2643, %v2737
        %v2739 = vpop.f32.mrf.mxu0
        %v2740 = vadd.f32 %v2643, %v2739
        %2741 = vmatprep.mubr.bf16.mxu0 0
        %2742 = vmatmul.mubr.bf16.gmra.mxu0 %v2683
        %v2743 = vpop.f32.mrf.mxu0
        %v2744 = vadd.f32 %v2648, %v2743
        %v2745 = vpop.f32.mrf.mxu0
        %v2746 = vadd.f32 %v2648, %v2745
        %v2747 = vpop.f32.mrf.mxu0
        %v2748 = vadd.f32 %v2653, %v2747
        %v2749 = vpop.f32.mrf.mxu0
        %v2750 = vadd.f32 %v2653, %v2749
        %2751 = vmatprep.mubr.bf16.mxu0 0
        %2752 = vmatmul.mubr.bf16.gmra.mxu0 %v2684
        %v2753 = vpop.f32.mrf.mxu0
        %v2754 = vadd.f32 %v2658, %v2753
        %v2755 = vpop.f32.mrf.mxu0
        %v2756 = vadd.f32 %v2658, %v2755
        %v2757 = vpop.f32.mrf.mxu0
        %v2758 = vadd.f32 %v2663, %v2757
        %v2759 = vpop.f32.mrf.mxu0
        %v2760 = vadd.f32 %v2663, %v2759
        %2761 = vdwg.mxu0
        %2762 = vmatprep.subr.bf16.mxu0 %v2610
        %2763 = vmatpush1.bf16.msra.mxu0 %v2609
        %2764 = vmatprep.subr.bf16.mxu0 %v2600
        %2765 = vmatpush1.bf16.msra.mxu0 %v2599
        %2766 = vmatprep.subr.bf16.mxu0 %v2590
        %2767 = vmatpush1.bf16.msra.mxu0 %v2589
        %2768 = vmatprep.subr.bf16.mxu0 %v2580
        %2769 = vmatpush1.bf16.msra.mxu0 %v2579
        %2770 = vmatprep.subr.bf16.mxu0 %v2570
        %2771 = vmatpush1.bf16.msra.mxu0 %v2569
        %2772 = vmatprep.subr.bf16.mxu0 %v2560
        %2773 = vmatpush1.bf16.msra.mxu0 %v2559
        %2774 = vmatprep.subr.bf16.mxu0 %v2550
        %2775 = vmatpush1.bf16.msra.mxu0 %v2549
        %2776 = vmatprep.subr.bf16.mxu0 %v2540
        %2777 = vmatpush1.bf16.msra.mxu0 %v2539
        %2778 = vmatprep.subr.bf16.mxu0 0
        %2779 = vmatpush2.bf16.msra.mxu0 0
        %2780 = vmatprep.subr.bf16.mxu0 0
        %2781 = vmatpush2.bf16.msra.mxu0 0
        %2782 = vmatprep.subr.bf16.mxu0 0
        %2783 = vmatpush2.bf16.msra.mxu0 0
        %2784 = vmatprep.subr.bf16.mxu0 0
        %2785 = vmatpush2.bf16.msra.mxu0 0
        %2786 = vmatprep.subr.bf16.mxu0 0
        %2787 = vmatpush2.bf16.msra.mxu0 0
        %2788 = vmatprep.subr.bf16.mxu0 0
        %2789 = vmatpush2.bf16.msra.mxu0 0
        %2790 = vmatprep.subr.bf16.mxu0 0
        %2791 = vmatpush2.bf16.msra.mxu0 0
        %2792 = vmatprep.subr.bf16.mxu0 0
        %2793 = vmatpush2.bf16.msra.mxu0 0
        %2794 = vmatprep.mubr.bf16.mxu0 0
        %2795 = vmatmul.mubr.bf16.gmra.mxu0 %v2681
        %v2796 = vpop.f32.mrf.mxu0
        %v2797 = vadd.f32 %v2628, %v2796
        %v2798 = vpop.f32.mrf.mxu0
        %v2799 = vadd.f32 %v2628, %v2798
        %v2800 = vpop.f32.mrf.mxu0
        %v2801 = vadd.f32 %v2633, %v2800
        %v2802 = vpop.f32.mrf.mxu0
        %v2803 = vadd.f32 %v2633, %v2802
        %2804 = vmatprep.mubr.bf16.mxu0 0
        %2805 = vmatmul.mubr.bf16.gmra.mxu0 %v2682
        %v2806 = vpop.f32.mrf.mxu0
        %v2807 = vadd.f32 %v2638, %v2806
        %v2808 = vpop.f32.mrf.mxu0
        %v2809 = vadd.f32 %v2638, %v2808
        %v2810 = vpop.f32.mrf.mxu0
        %v2811 = vadd.f32 %v2643, %v2810
        %v2812 = vpop.f32.mrf.mxu0
        %v2813 = vadd.f32 %v2643, %v2812
        %2814 = vmatprep.mubr.bf16.mxu0 0
        %2815 = vmatmul.mubr.bf16.gmra.mxu0 %v2683
        %v2816 = vpop.f32.mrf.mxu0
        %v2817 = vadd.f32 %v2648, %v2816
        %v2818 = vpop.f32.mrf.mxu0
        %v2819 = vadd.f32 %v2648, %v2818
        %v2820 = vpop.f32.mrf.mxu0
        %v2821 = vadd.f32 %v2653, %v2820
        %v2822 = vpop.f32.mrf.mxu0
        %v2823 = vadd.f32 %v2653, %v2822
        %2824 = vmatprep.mubr.bf16.mxu0 0
        %2825 = vmatmul.mubr.bf16.gmra.mxu0 %v2684
        %v2826 = vpop.f32.mrf.mxu0
        %v2827 = vadd.f32 %v2658, %v2826
        %v2828 = vpop.f32.mrf.mxu0
        %v2829 = vadd.f32 %v2658, %v2828
        %v2830 = vpop.f32.mrf.mxu0
        %v2831 = vadd.f32 %v2663, %v2830
        %v2832 = vpop.f32.mrf.mxu0
        %v2833 = vadd.f32 %v2663, %v2832
        %2834 = vdwg.mxu0
        %2835 = vmatprep.subr.bf16.mxu0 %v2612
        %2836 = vmatpush1.bf16.msra.mxu0 %v2611
        %2837 = vmatprep.subr.bf16.mxu0 %v2602
        %2838 = vmatpush1.bf16.msra.mxu0 %v2601
        %2839 = vmatprep.subr.bf16.mxu0 %v2592
        %2840 = vmatpush1.bf16.msra.mxu0 %v2591
        %2841 = vmatprep.subr.bf16.mxu0 %v2582
        %2842 = vmatpush1.bf16.msra.mxu0 %v2581
        %2843 = vmatprep.subr.bf16.mxu0 %v2572
        %2844 = vmatpush1.bf16.msra.mxu0 %v2571
        %2845 = vmatprep.subr.bf16.mxu0 %v2562
        %2846 = vmatpush1.bf16.msra.mxu0 %v2561
        %2847 = vmatprep.subr.bf16.mxu0 %v2552
        %2848 = vmatpush1.bf16.msra.mxu0 %v2551
        %2849 = vmatprep.subr.bf16.mxu0 %v2542
        %2850 = vmatpush1.bf16.msra.mxu0 %v2541
        %2851 = vmatprep.subr.bf16.mxu0 0
        %2852 = vmatpush2.bf16.msra.mxu0 0
        %2853 = vmatprep.subr.bf16.mxu0 0
        %2854 = vmatpush2.bf16.msra.mxu0 0
        %2855 = vmatprep.subr.bf16.mxu0 0
        %2856 = vmatpush2.bf16.msra.mxu0 0
        %2857 = vmatprep.subr.bf16.mxu0 0
        %2858 = vmatpush2.bf16.msra.mxu0 0
        %2859 = vmatprep.subr.bf16.mxu0 0
        %2860 = vmatpush2.bf16.msra.mxu0 0
        %2861 = vmatprep.subr.bf16.mxu0 0
        %2862 = vmatpush2.bf16.msra.mxu0 0
        %2863 = vmatprep.subr.bf16.mxu0 0
        %2864 = vmatpush2.bf16.msra.mxu0 0
        %2865 = vmatprep.subr.bf16.mxu0 0
        %2866 = vmatpush2.bf16.msra.mxu0 0
        %2867 = vmatprep.mubr.bf16.mxu0 0
        %2868 = vmatmul.mubr.bf16.gmra.mxu0 %v2681
        %v2869 = vpop.f32.mrf.mxu0
        %v2870 = vadd.f32 %v2628, %v2869
        %v2871 = vpop.f32.mrf.mxu0
        %v2872 = vadd.f32 %v2628, %v2871
        %v2873 = vpop.f32.mrf.mxu0
        %v2874 = vadd.f32 %v2633, %v2873
        %v2875 = vpop.f32.mrf.mxu0
        %v2876 = vadd.f32 %v2633, %v2875
        %2877 = vmatprep.mubr.bf16.mxu0 0
        %2878 = vmatmul.mubr.bf16.gmra.mxu0 %v2682
        %v2879 = vpop.f32.mrf.mxu0
        %v2880 = vadd.f32 %v2638, %v2879
        %v2881 = vpop.f32.mrf.mxu0
        %v2882 = vadd.f32 %v2638, %v2881
        %v2883 = vpop.f32.mrf.mxu0
        %v2884 = vadd.f32 %v2643, %v2883
        %v2885 = vpop.f32.mrf.mxu0
        %v2886 = vadd.f32 %v2643, %v2885
        %2887 = vmatprep.mubr.bf16.mxu0 0
        %2888 = vmatmul.mubr.bf16.gmra.mxu0 %v2683
        %v2889 = vpop.f32.mrf.mxu0
        %v2890 = vadd.f32 %v2648, %v2889
        %v2891 = vpop.f32.mrf.mxu0
        %v2892 = vadd.f32 %v2648, %v2891
        %v2893 = vpop.f32.mrf.mxu0
        %v2894 = vadd.f32 %v2653, %v2893
        %v2895 = vpop.f32.mrf.mxu0
        %v2896 = vadd.f32 %v2653, %v2895
        %2897 = vmatprep.mubr.bf16.mxu0 0
        %2898 = vmatmul.mubr.bf16.gmra.mxu0 %v2684
        %v2899 = vpop.f32.mrf.mxu0
        %v2900 = vadd.f32 %v2658, %v2899
        %v2901 = vpop.f32.mrf.mxu0
        %v2902 = vadd.f32 %v2658, %v2901
        %v2903 = vpop.f32.mrf.mxu0
        %v2904 = vadd.f32 %v2663, %v2903
        %v2905 = vpop.f32.mrf.mxu0
        %v2906 = vadd.f32 %v2663, %v2905
        %2907 = vdwg.mxu0
        %2908 = vmatprep.subr.bf16.mxu0 %v2614
        %2909 = vmatpush1.bf16.msra.mxu0 %v2613
        %2910 = vmatprep.subr.bf16.mxu0 %v2604
        %2911 = vmatpush1.bf16.msra.mxu0 %v2603
        %2912 = vmatprep.subr.bf16.mxu0 %v2594
        %2913 = vmatpush1.bf16.msra.mxu0 %v2593
        %2914 = vmatprep.subr.bf16.mxu0 %v2584
        %2915 = vmatpush1.bf16.msra.mxu0 %v2583
        %2916 = vmatprep.subr.bf16.mxu0 %v2574
        %2917 = vmatpush1.bf16.msra.mxu0 %v2573
        %2918 = vmatprep.subr.bf16.mxu0 %v2564
        %2919 = vmatpush1.bf16.msra.mxu0 %v2563
        %2920 = vmatprep.subr.bf16.mxu0 %v2554
        %2921 = vmatpush1.bf16.msra.mxu0 %v2553
        %2922 = vmatprep.subr.bf16.mxu0 %v2544
        %2923 = vmatpush1.bf16.msra.mxu0 %v2543
        %2924 = vmatprep.subr.bf16.mxu0 0
        %2925 = vmatpush2.bf16.msra.mxu0 0
        %2926 = vmatprep.subr.bf16.mxu0 0
        %2927 = vmatpush2.bf16.msra.mxu0 0
        %2928 = vmatprep.subr.bf16.mxu0 0
        %2929 = vmatpush2.bf16.msra.mxu0 0
        %2930 = vmatprep.subr.bf16.mxu0 0
        %2931 = vmatpush2.bf16.msra.mxu0 0
        %2932 = vmatprep.subr.bf16.mxu0 0
        %2933 = vmatpush2.bf16.msra.mxu0 0
        %2934 = vmatprep.subr.bf16.mxu0 0
        %2935 = vmatpush2.bf16.msra.mxu0 0
        %2936 = vmatprep.subr.bf16.mxu0 0
        %2937 = vmatpush2.bf16.msra.mxu0 0
        %2938 = vmatprep.subr.bf16.mxu0 0
        %2939 = vmatpush2.bf16.msra.mxu0 0
        %2940 = vmatprep.mubr.bf16.mxu0 0
        %2941 = vmatmul.mubr.bf16.gmra.mxu0 %v2681
        %v2942 = vpop.f32.mrf.mxu0
        %v2943 = vadd.f32 %v2628, %v2942
        %v2944 = vpop.f32.mrf.mxu0
        %v2945 = vadd.f32 %v2628, %v2944
        %v2946 = vpop.f32.mrf.mxu0
        %v2947 = vadd.f32 %v2633, %v2946
        %v2948 = vpop.f32.mrf.mxu0
        %v2949 = vadd.f32 %v2633, %v2948
        %2950 = vmatprep.mubr.bf16.mxu0 0
        %2951 = vmatmul.mubr.bf16.gmra.mxu0 %v2682
        %v2952 = vpop.f32.mrf.mxu0
        %v2953 = vadd.f32 %v2638, %v2952
        %v2954 = vpop.f32.mrf.mxu0
        %v2955 = vadd.f32 %v2638, %v2954
        %v2956 = vpop.f32.mrf.mxu0
        %v2957 = vadd.f32 %v2643, %v2956
        %v2958 = vpop.f32.mrf.mxu0
        %v2959 = vadd.f32 %v2643, %v2958
        %2960 = vmatprep.mubr.bf16.mxu0 0
        %2961 = vmatmul.mubr.bf16.gmra.mxu0 %v2683
        %v2962 = vpop.f32.mrf.mxu0
        %v2963 = vadd.f32 %v2648, %v2962
        %v2964 = vpop.f32.mrf.mxu0
        %v2965 = vadd.f32 %v2648, %v2964
        %v2966 = vpop.f32.mrf.mxu0
        %v2967 = vadd.f32 %v2653, %v2966
        %v2968 = vpop.f32.mrf.mxu0
        %v2969 = vadd.f32 %v2653, %v2968
        %2970 = vmatprep.mubr.bf16.mxu0 0
        %2971 = vmatmul.mubr.bf16.gmra.mxu0 %v2684
        %v2972 = vpop.f32.mrf.mxu0
        %v2973 = vadd.f32 %v2658, %v2972
        %v2974 = vpop.f32.mrf.mxu0
        %v2975 = vadd.f32 %v2658, %v2974
        %v2976 = vpop.f32.mrf.mxu0
        %v2977 = vadd.f32 %v2663, %v2976
        %v2978 = vpop.f32.mrf.mxu0
        %v2979 = vadd.f32 %v2663, %v2978
        %2980 = vdwg.mxu0
        %2981 = vmatprep.subr.bf16.mxu0 %v2616
        %2982 = vmatpush1.bf16.msra.mxu0 %v2615
        %2983 = vmatprep.subr.bf16.mxu0 %v2606
        %2984 = vmatpush1.bf16.msra.mxu0 %v2605
        %2985 = vmatprep.subr.bf16.mxu0 %v2596
        %2986 = vmatpush1.bf16.msra.mxu0 %v2595
        %2987 = vmatprep.subr.bf16.mxu0 %v2586
        %2988 = vmatpush1.bf16.msra.mxu0 %v2585
        %2989 = vmatprep.subr.bf16.mxu0 %v2576
        %2990 = vmatpush1.bf16.msra.mxu0 %v2575
        %2991 = vmatprep.subr.bf16.mxu0 %v2566
        %2992 = vmatpush1.bf16.msra.mxu0 %v2565
        %2993 = vmatprep.subr.bf16.mxu0 %v2556
        %2994 = vmatpush1.bf16.msra.mxu0 %v2555
        %2995 = vmatprep.subr.bf16.mxu0 %v2546
        %2996 = vmatpush1.bf16.msra.mxu0 %v2545
        %2997 = vmatprep.subr.bf16.mxu0 0
        %2998 = vmatpush2.bf16.msra.mxu0 0
        %2999 = vmatprep.subr.bf16.mxu0 0
        %3000 = vmatpush2.bf16.msra.mxu0 0
        %3001 = vmatprep.subr.bf16.mxu0 0
        %3002 = vmatpush2.bf16.msra.mxu0 0
        %3003 = vmatprep.subr.bf16.mxu0 0
        %3004 = vmatpush2.bf16.msra.mxu0 0
        %3005 = vmatprep.subr.bf16.mxu0 0
        %3006 = vmatpush2.bf16.msra.mxu0 0
        %3007 = vmatprep.subr.bf16.mxu0 0
        %3008 = vmatpush2.bf16.msra.mxu0 0
        %3009 = vmatprep.subr.bf16.mxu0 0
        %3010 = vmatpush2.bf16.msra.mxu0 0
        %3011 = vmatprep.subr.bf16.mxu0 0
        %3012 = vmatpush2.bf16.msra.mxu0 0
        %3013 = vmatprep.mubr.bf16.mxu0 0
        %3014 = vmatmul.mubr.bf16.gmra.mxu0 %v2681
        %v3015 = vpop.f32.mrf.mxu0
        %v3016 = vadd.f32 %v2628, %v3015
        %v3017 = vpop.f32.mrf.mxu0
        %v3018 = vadd.f32 %v2628, %v3017
        %v3019 = vpop.f32.mrf.mxu0
        %v3020 = vadd.f32 %v2633, %v3019
        %v3021 = vpop.f32.mrf.mxu0
        %v3022 = vadd.f32 %v2633, %v3021
        %3023 = vmatprep.mubr.bf16.mxu0 0
        %3024 = vmatmul.mubr.bf16.gmra.mxu0 %v2682
        %v3025 = vpop.f32.mrf.mxu0
        %v3026 = vadd.f32 %v2638, %v3025
        %v3027 = vpop.f32.mrf.mxu0
        %v3028 = vadd.f32 %v2638, %v3027
        %v3029 = vpop.f32.mrf.mxu0
        %v3030 = vadd.f32 %v2643, %v3029
        %v3031 = vpop.f32.mrf.mxu0
        %v3032 = vadd.f32 %v2643, %v3031
        %3033 = vmatprep.mubr.bf16.mxu0 0
        %3034 = vmatmul.mubr.bf16.gmra.mxu0 %v2683
        %v3035 = vpop.f32.mrf.mxu0
        %v3036 = vadd.f32 %v2648, %v3035
        %v3037 = vpop.f32.mrf.mxu0
        %v3038 = vadd.f32 %v2648, %v3037
        %v3039 = vpop.f32.mrf.mxu0
        %v3040 = vadd.f32 %v2653, %v3039
        %v3041 = vpop.f32.mrf.mxu0
        %v3042 = vadd.f32 %v2653, %v3041
        %3043 = vmatprep.mubr.bf16.mxu0 0
        %3044 = vmatmul.mubr.bf16.gmra.mxu0 %v2684
        %v3045 = vpop.f32.mrf.mxu0
        %v3046 = vadd.f32 %v2658, %v3045
        %v3047 = vpop.f32.mrf.mxu0
        %v3048 = vadd.f32 %v2658, %v3047
        %v3049 = vpop.f32.mrf.mxu0
        %v3050 = vadd.f32 %v2663, %v3049
        %v3051 = vpop.f32.mrf.mxu0
        %v3052 = vadd.f32 %v2663, %v3051
        %3053 = vdwg.mxu0
        %v3054 = vmax.f32 %v2724, 0.0
        %v3055 = vmax.f32 %v2726, 0.0
        %v3056 = vmax.f32 %v2797, 0.0
        %v3057 = vmax.f32 %v2799, 0.0
        %v3058 = vmax.f32 %v2870, 0.0
        %v3059 = vmax.f32 %v2872, 0.0
        %v3060 = vmax.f32 %v2943, 0.0
        %v3061 = vmax.f32 %v2945, 0.0
        %v3062 = vmax.f32 %v3016, 0.0
        %v3063 = vmax.f32 %v3018, 0.0
        %v3064 = vmax.f32 %v2728, 0.0
        %v3065 = vmax.f32 %v2730, 0.0
        %v3066 = vmax.f32 %v2801, 0.0
        %v3067 = vmax.f32 %v2803, 0.0
        %v3068 = vmax.f32 %v2874, 0.0
        %v3069 = vmax.f32 %v2876, 0.0
        %v3070 = vmax.f32 %v2947, 0.0
        %v3071 = vmax.f32 %v2949, 0.0
        %v3072 = vmax.f32 %v3020, 0.0
        %v3073 = vmax.f32 %v3022, 0.0
        %v3074 = vmax.f32 %v2734, 0.0
        %v3075 = vmax.f32 %v2736, 0.0
        %v3076 = vmax.f32 %v2807, 0.0
        %v3077 = vmax.f32 %v2809, 0.0
        %v3078 = vmax.f32 %v2880, 0.0
        %v3079 = vmax.f32 %v2882, 0.0
        %v3080 = vmax.f32 %v2953, 0.0
        %v3081 = vmax.f32 %v2955, 0.0
        %v3082 = vmax.f32 %v3026, 0.0
        %v3083 = vmax.f32 %v3028, 0.0
        %v3084 = vmax.f32 %v2738, 0.0
        %v3085 = vmax.f32 %v2740, 0.0
        %v3086 = vmax.f32 %v2811, 0.0
        %v3087 = vmax.f32 %v2813, 0.0
        %v3088 = vmax.f32 %v2884, 0.0
        %v3089 = vmax.f32 %v2886, 0.0
        %v3090 = vmax.f32 %v2957, 0.0
        %v3091 = vmax.f32 %v2959, 0.0
        %v3092 = vmax.f32 %v3030, 0.0
        %v3093 = vmax.f32 %v3032, 0.0
        %v3094 = vmax.f32 %v2744, 0.0
        %v3095 = vmax.f32 %v2746, 0.0
        %v3096 = vmax.f32 %v2817, 0.0
        %v3097 = vmax.f32 %v2819, 0.0
        %v3098 = vmax.f32 %v2890, 0.0
        %v3099 = vmax.f32 %v2892, 0.0
        %v3100 = vmax.f32 %v2963, 0.0
        %v3101 = vmax.f32 %v2965, 0.0
        %v3102 = vmax.f32 %v3036, 0.0
        %v3103 = vmax.f32 %v3038, 0.0
        %v3104 = vmax.f32 %v2748, 0.0
        %v3105 = vmax.f32 %v2750, 0.0
        %v3106 = vmax.f32 %v2821, 0.0
        %v3107 = vmax.f32 %v2823, 0.0
        %v3108 = vmax.f32 %v2894, 0.0
        %v3109 = vmax.f32 %v2896, 0.0
        %v3110 = vmax.f32 %v2967, 0.0
        %v3111 = vmax.f32 %v2969, 0.0
        %v3112 = vmax.f32 %v3040, 0.0
        %v3113 = vmax.f32 %v3042, 0.0
        %v3114 = vmax.f32 %v2754, 0.0
        %v3115 = vmax.f32 %v2756, 0.0
        %v3116 = vmax.f32 %v2827, 0.0
        %v3117 = vmax.f32 %v2829, 0.0
        %v3118 = vmax.f32 %v2900, 0.0
        %v3119 = vmax.f32 %v2902, 0.0
        %v3120 = vmax.f32 %v2973, 0.0
        %v3121 = vmax.f32 %v2975, 0.0
        %v3122 = vmax.f32 %v3046, 0.0
        %v3123 = vmax.f32 %v3048, 0.0
        %v3124 = vmax.f32 %v2758, 0.0
        %v3125 = vmax.f32 %v2760, 0.0
        %v3126 = vmax.f32 %v2831, 0.0
        %v3127 = vmax.f32 %v2833, 0.0
        %v3128 = vmax.f32 %v2904, 0.0
        %v3129 = vmax.f32 %v2906, 0.0
        %v3130 = vmax.f32 %v2977, 0.0
        %v3131 = vmax.f32 %v2979, 0.0
        %v3132 = vmax.f32 %v3050, 0.0
        %v3133 = vmax.f32 %v3052, 0.0
        %v3134 = vld [vmem:[%s5] sm:$0xf]
        %v3135 = vld [vmem:[%s5 + $0x4] sm:$0xf]
        %v3136 = vld [vmem:[%s5 + $0x8] sm:$0xf]
        %v3137 = vld [vmem:[%s5 + $0xc] sm:$0xf]
        %v3138 = vpack.c.bf16 %v3064, %v3054
        %v3139 = vpack.c.bf16 %v3065, %v3055
        %v3140 = vpack.c.bf16 %v3066, %v3056
        %v3141 = vpack.c.bf16 %v3067, %v3057
        %v3142 = vpack.c.bf16 %v3068, %v3058
        %v3143 = vpack.c.bf16 %v3069, %v3059
        %v3144 = vpack.c.bf16 %v3070, %v3060
        %v3145 = vpack.c.bf16 %v3071, %v3061
        %v3146 = vpack.c.bf16 %v3072, %v3062
        %v3147 = vpack.c.bf16 %v3073, %v3063
        %v3148 = vpack.c.bf16 %v3084, %v3074
        %v3149 = vpack.c.bf16 %v3085, %v3075
        %v3150 = vpack.c.bf16 %v3086, %v3076
        %v3151 = vpack.c.bf16 %v3087, %v3077
        %v3152 = vpack.c.bf16 %v3088, %v3078
        %v3153 = vpack.c.bf16 %v3089, %v3079
        %v3154 = vpack.c.bf16 %v3090, %v3080
        %v3155 = vpack.c.bf16 %v3091, %v3081
        %v3156 = vpack.c.bf16 %v3092, %v3082
        %v3157 = vpack.c.bf16 %v3093, %v3083
        %v3158 = vpack.c.bf16 %v3104, %v3094
        %v3159 = vpack.c.bf16 %v3105, %v3095
        %v3160 = vpack.c.bf16 %v3106, %v3096
        %v3161 = vpack.c.bf16 %v3107, %v3097
        %v3162 = vpack.c.bf16 %v3108, %v3098
        %v3163 = vpack.c.bf16 %v3109, %v3099
        %v3164 = vpack.c.bf16 %v3110, %v3100
        %v3165 = vpack.c.bf16 %v3111, %v3101
        %v3166 = vpack.c.bf16 %v3112, %v3102
        %v3167 = vpack.c.bf16 %v3113, %v3103
        %v3168 = vpack.c.bf16 %v3124, %v3114
        %v3169 = vpack.c.bf16 %v3125, %v3115
        %v3170 = vpack.c.bf16 %v3126, %v3116
        %v3171 = vpack.c.bf16 %v3127, %v3117
        %v3172 = vpack.c.bf16 %v3128, %v3118
        %v3173 = vpack.c.bf16 %v3129, %v3119
        %v3174 = vpack.c.bf16 %v3130, %v3120
        %v3175 = vpack.c.bf16 %v3131, %v3121
        %v3176 = vpack.c.bf16 %v3132, %v3122
        %v3177 = vpack.c.bf16 %v3133, %v3123
        %v3178 = vld [vmem:[%s6] sm:$0xff]
        %v3179 = vld [vmem:[%s6 + $0x8] sm:$0xff]
        %v3180 = vld [vmem:[%s6 + $0x10] sm:$0xff]
        %v3181 = vld [vmem:[%s6 + $0x18] sm:$0xff]
        %3183 = vset.pattern.permute.xlu0 0
        %3184 = vperm.xlu0 %3183, %v3178
        %v3185 = vpop.permute.xlu0 %3184
        %3188 = vset.pattern.permute.xlu0 0
        %3189 = vperm.xlu0 %3188, %v3179
        %v3190 = vpop.permute.xlu0 %3189
        %3193 = vset.pattern.permute.xlu0 0
        %3194 = vperm.xlu0 %3193, %v3180
        %v3195 = vpop.permute.xlu0 %3194
        %3198 = vset.pattern.permute.xlu0 0
        %3199 = vperm.xlu0 %3198, %v3181
        %v3200 = vpop.permute.xlu0 %3199
        %v3206 = vunpack.c.l.b16 %v3134
        %v3207 = vunpack.c.l.b16 %v3135
        %v3208 = vunpack.c.l.b16 %v3136
        %v3209 = vunpack.c.l.b16 %v3137
        %v3210 = vpack.c.b16 %v3207, %v3206
        %v3211 = vpack.c.b16 %v3209, %v3208
        %vm3212 = vcmask 523264
        %v3214 = vsel %vm3212, %v3210, 0
        %v3217 = vsel %vm3212, %v3211, 0
        %3219 = vmatprep.subr.bf16.mxu0 0
        %3220 = vmatpush1.bf16.msra.mxu0 0
        %3221 = vmatprep.subr.bf16.mxu0 0
        %3222 = vmatpush1.bf16.msra.mxu0 0
        %3223 = vmatprep.subr.bf16.mxu0 0
        %3224 = vmatpush1.bf16.msra.mxu0 0
        %3225 = vmatprep.subr.bf16.mxu0 0
        %3226 = vmatpush1.bf16.msra.mxu0 0
        %3227 = vmatprep.subr.bf16.mxu0 %v3169
        %3228 = vmatpush1.bf16.msra.mxu0 %v3168
        %3229 = vmatprep.subr.bf16.mxu0 %v3159
        %3230 = vmatpush1.bf16.msra.mxu0 %v3158
        %3231 = vmatprep.subr.bf16.mxu0 %v3149
        %3232 = vmatpush1.bf16.msra.mxu0 %v3148
        %3233 = vmatprep.subr.bf16.mxu0 %v3139
        %3234 = vmatpush1.bf16.msra.mxu0 %v3138
        %3235 = vmatprep.subr.bf16.mxu0 0
        %3236 = vmatpush2.bf16.msra.mxu0 0
        %3237 = vmatprep.subr.bf16.mxu0 0
        %3238 = vmatpush2.bf16.msra.mxu0 0
        %3239 = vmatprep.subr.bf16.mxu0 0
        %3240 = vmatpush2.bf16.msra.mxu0 0
        %3241 = vmatprep.subr.bf16.mxu0 0
        %3242 = vmatpush2.bf16.msra.mxu0 0
        %3243 = vmatprep.subr.bf16.mxu0 0
        %3244 = vmatpush2.bf16.msra.mxu0 0
        %3245 = vmatprep.subr.bf16.mxu0 0
        %3246 = vmatpush2.bf16.msra.mxu0 0
        %3247 = vmatprep.subr.bf16.mxu0 0
        %3248 = vmatpush2.bf16.msra.mxu0 0
        %3249 = vmatprep.subr.bf16.mxu0 0
        %3250 = vmatpush2.bf16.msra.mxu0 0
        %3251 = vmatprep.mubr.bf16.mxu0 0
        %3252 = vmatmul.mubr.bf16.gmra.mxu0 %v3214
        %v3253 = vpop.f32.mrf.mxu0
        %v3254 = vadd.f32 %v3185, %v3253
        %v3255 = vpop.f32.mrf.mxu0
        %v3256 = vadd.f32 %v3185, %v3255
        %v3257 = vpop.f32.mrf.mxu0
        %v3258 = vadd.f32 %v3190, %v3257
        %v3259 = vpop.f32.mrf.mxu0
        %v3260 = vadd.f32 %v3190, %v3259
        %3261 = vmatprep.mubr.bf16.mxu0 0
        %3262 = vmatmul.mubr.bf16.gmra.mxu0 %v3217
        %v3263 = vpop.f32.mrf.mxu0
        %v3264 = vadd.f32 %v3195, %v3263
        %v3265 = vpop.f32.mrf.mxu0
        %v3266 = vadd.f32 %v3195, %v3265
        %v3267 = vpop.f32.mrf.mxu0
        %v3268 = vadd.f32 %v3200, %v3267
        %v3269 = vpop.f32.mrf.mxu0
        %v3270 = vadd.f32 %v3200, %v3269
        %3271 = vdwg.mxu0
        %3272 = vmatprep.subr.bf16.mxu0 0
        %3273 = vmatpush1.bf16.msra.mxu0 0
        %3274 = vmatprep.subr.bf16.mxu0 0
        %3275 = vmatpush1.bf16.msra.mxu0 0
        %3276 = vmatprep.subr.bf16.mxu0 0
        %3277 = vmatpush1.bf16.msra.mxu0 0
        %3278 = vmatprep.subr.bf16.mxu0 0
        %3279 = vmatpush1.bf16.msra.mxu0 0
        %3280 = vmatprep.subr.bf16.mxu0 %v3171
        %3281 = vmatpush1.bf16.msra.mxu0 %v3170
        %3282 = vmatprep.subr.bf16.mxu0 %v3161
        %3283 = vmatpush1.bf16.msra.mxu0 %v3160
        %3284 = vmatprep.subr.bf16.mxu0 %v3151
        %3285 = vmatpush1.bf16.msra.mxu0 %v3150
        %3286 = vmatprep.subr.bf16.mxu0 %v3141
        %3287 = vmatpush1.bf16.msra.mxu0 %v3140
        %3288 = vmatprep.subr.bf16.mxu0 0
        %3289 = vmatpush2.bf16.msra.mxu0 0
        %3290 = vmatprep.subr.bf16.mxu0 0
        %3291 = vmatpush2.bf16.msra.mxu0 0
        %3292 = vmatprep.subr.bf16.mxu0 0
        %3293 = vmatpush2.bf16.msra.mxu0 0
        %3294 = vmatprep.subr.bf16.mxu0 0
        %3295 = vmatpush2.bf16.msra.mxu0 0
        %3296 = vmatprep.subr.bf16.mxu0 0
        %3297 = vmatpush2.bf16.msra.mxu0 0
        %3298 = vmatprep.subr.bf16.mxu0 0
        %3299 = vmatpush2.bf16.msra.mxu0 0
        %3300 = vmatprep.subr.bf16.mxu0 0
        %3301 = vmatpush2.bf16.msra.mxu0 0
        %3302 = vmatprep.subr.bf16.mxu0 0
        %3303 = vmatpush2.bf16.msra.mxu0 0
        %3304 = vmatprep.mubr.bf16.mxu0 0
        %3305 = vmatmul.mubr.bf16.gmra.mxu0 %v3214
        %v3306 = vpop.f32.mrf.mxu0
        %v3307 = vadd.f32 %v3185, %v3306
        %v3308 = vpop.f32.mrf.mxu0
        %v3309 = vadd.f32 %v3185, %v3308
        %v3310 = vpop.f32.mrf.mxu0
        %v3311 = vadd.f32 %v3190, %v3310
        %v3312 = vpop.f32.mrf.mxu0
        %v3313 = vadd.f32 %v3190, %v3312
        %3314 = vmatprep.mubr.bf16.mxu0 0
        %3315 = vmatmul.mubr.bf16.gmra.mxu0 %v3217
        %v3316 = vpop.f32.mrf.mxu0
        %v3317 = vadd.f32 %v3195, %v3316
        %v3318 = vpop.f32.mrf.mxu0
        %v3319 = vadd.f32 %v3195, %v3318
        %v3320 = vpop.f32.mrf.mxu0
        %v3321 = vadd.f32 %v3200, %v3320
        %v3322 = vpop.f32.mrf.mxu0
        %v3323 = vadd.f32 %v3200, %v3322
        %3324 = vdwg.mxu0
        %3325 = vmatprep.subr.bf16.mxu0 0
        %3326 = vmatpush1.bf16.msra.mxu0 0
        %3327 = vmatprep.subr.bf16.mxu0 0
        %3328 = vmatpush1.bf16.msra.mxu0 0
        %3329 = vmatprep.subr.bf16.mxu0 0
        %3330 = vmatpush1.bf16.msra.mxu0 0
        %3331 = vmatprep.subr.bf16.mxu0 0
        %3332 = vmatpush1.bf16.msra.mxu0 0
        %3333 = vmatprep.subr.bf16.mxu0 %v3173
        %3334 = vmatpush1.bf16.msra.mxu0 %v3172
        %3335 = vmatprep.subr.bf16.mxu0 %v3163
        %3336 = vmatpush1.bf16.msra.mxu0 %v3162
        %3337 = vmatprep.subr.bf16.mxu0 %v3153
        %3338 = vmatpush1.bf16.msra.mxu0 %v3152
        %3339 = vmatprep.subr.bf16.mxu0 %v3143
        %3340 = vmatpush1.bf16.msra.mxu0 %v3142
        %3341 = vmatprep.subr.bf16.mxu0 0
        %3342 = vmatpush2.bf16.msra.mxu0 0
        %3343 = vmatprep.subr.bf16.mxu0 0
        %3344 = vmatpush2.bf16.msra.mxu0 0
        %3345 = vmatprep.subr.bf16.mxu0 0
        %3346 = vmatpush2.bf16.msra.mxu0 0
        %3347 = vmatprep.subr.bf16.mxu0 0
        %3348 = vmatpush2.bf16.msra.mxu0 0
        %3349 = vmatprep.subr.bf16.mxu0 0
        %3350 = vmatpush2.bf16.msra.mxu0 0
        %3351 = vmatprep.subr.bf16.mxu0 0
        %3352 = vmatpush2.bf16.msra.mxu0 0
        %3353 = vmatprep.subr.bf16.mxu0 0
        %3354 = vmatpush2.bf16.msra.mxu0 0
        %3355 = vmatprep.subr.bf16.mxu0 0
        %3356 = vmatpush2.bf16.msra.mxu0 0
        %3357 = vmatprep.mubr.bf16.mxu0 0
        %3358 = vmatmul.mubr.bf16.gmra.mxu0 %v3214
        %v3359 = vpop.f32.mrf.mxu0
        %v3360 = vadd.f32 %v3185, %v3359
        %v3361 = vpop.f32.mrf.mxu0
        %v3362 = vadd.f32 %v3185, %v3361
        %v3363 = vpop.f32.mrf.mxu0
        %v3364 = vadd.f32 %v3190, %v3363
        %v3365 = vpop.f32.mrf.mxu0
        %v3366 = vadd.f32 %v3190, %v3365
        %3367 = vmatprep.mubr.bf16.mxu0 0
        %3368 = vmatmul.mubr.bf16.gmra.mxu0 %v3217
        %v3369 = vpop.f32.mrf.mxu0
        %v3370 = vadd.f32 %v3195, %v3369
        %v3371 = vpop.f32.mrf.mxu0
        %v3372 = vadd.f32 %v3195, %v3371
        %v3373 = vpop.f32.mrf.mxu0
        %v3374 = vadd.f32 %v3200, %v3373
        %v3375 = vpop.f32.mrf.mxu0
        %v3376 = vadd.f32 %v3200, %v3375
        %3377 = vdwg.mxu0
        %3378 = vmatprep.subr.bf16.mxu0 0
        %3379 = vmatpush1.bf16.msra.mxu0 0
        %3380 = vmatprep.subr.bf16.mxu0 0
        %3381 = vmatpush1.bf16.msra.mxu0 0
        %3382 = vmatprep.subr.bf16.mxu0 0
        %3383 = vmatpush1.bf16.msra.mxu0 0
        %3384 = vmatprep.subr.bf16.mxu0 0
        %3385 = vmatpush1.bf16.msra.mxu0 0
        %3386 = vmatprep.subr.bf16.mxu0 %v3175
        %3387 = vmatpush1.bf16.msra.mxu0 %v3174
        %3388 = vmatprep.subr.bf16.mxu0 %v3165
        %3389 = vmatpush1.bf16.msra.mxu0 %v3164
        %3390 = vmatprep.subr.bf16.mxu0 %v3155
        %3391 = vmatpush1.bf16.msra.mxu0 %v3154
        %3392 = vmatprep.subr.bf16.mxu0 %v3145
        %3393 = vmatpush1.bf16.msra.mxu0 %v3144
        %3394 = vmatprep.subr.bf16.mxu0 0
        %3395 = vmatpush2.bf16.msra.mxu0 0
        %3396 = vmatprep.subr.bf16.mxu0 0
        %3397 = vmatpush2.bf16.msra.mxu0 0
        %3398 = vmatprep.subr.bf16.mxu0 0
        %3399 = vmatpush2.bf16.msra.mxu0 0
        %3400 = vmatprep.subr.bf16.mxu0 0
        %3401 = vmatpush2.bf16.msra.mxu0 0
        %3402 = vmatprep.subr.bf16.mxu0 0
        %3403 = vmatpush2.bf16.msra.mxu0 0
        %3404 = vmatprep.subr.bf16.mxu0 0
        %3405 = vmatpush2.bf16.msra.mxu0 0
        %3406 = vmatprep.subr.bf16.mxu0 0
        %3407 = vmatpush2.bf16.msra.mxu0 0
        %3408 = vmatprep.subr.bf16.mxu0 0
        %3409 = vmatpush2.bf16.msra.mxu0 0
        %3410 = vmatprep.mubr.bf16.mxu0 0
        %3411 = vmatmul.mubr.bf16.gmra.mxu0 %v3214
        %v3412 = vpop.f32.mrf.mxu0
        %v3413 = vadd.f32 %v3185, %v3412
        %v3414 = vpop.f32.mrf.mxu0
        %v3415 = vadd.f32 %v3185, %v3414
        %v3416 = vpop.f32.mrf.mxu0
        %v3417 = vadd.f32 %v3190, %v3416
        %v3418 = vpop.f32.mrf.mxu0
        %v3419 = vadd.f32 %v3190, %v3418
        %3420 = vmatprep.mubr.bf16.mxu0 0
        %3421 = vmatmul.mubr.bf16.gmra.mxu0 %v3217
        %v3422 = vpop.f32.mrf.mxu0
        %v3423 = vadd.f32 %v3195, %v3422
        %v3424 = vpop.f32.mrf.mxu0
        %v3425 = vadd.f32 %v3195, %v3424
        %v3426 = vpop.f32.mrf.mxu0
        %v3427 = vadd.f32 %v3200, %v3426
        %v3428 = vpop.f32.mrf.mxu0
        %v3429 = vadd.f32 %v3200, %v3428
        %3430 = vdwg.mxu0
        %3431 = vmatprep.subr.bf16.mxu0 0
        %3432 = vmatpush1.bf16.msra.mxu0 0
        %3433 = vmatprep.subr.bf16.mxu0 0
        %3434 = vmatpush1.bf16.msra.mxu0 0
        %3435 = vmatprep.subr.bf16.mxu0 0
        %3436 = vmatpush1.bf16.msra.mxu0 0
        %3437 = vmatprep.subr.bf16.mxu0 0
        %3438 = vmatpush1.bf16.msra.mxu0 0
        %3439 = vmatprep.subr.bf16.mxu0 %v3177
        %3440 = vmatpush1.bf16.msra.mxu0 %v3176
        %3441 = vmatprep.subr.bf16.mxu0 %v3167
        %3442 = vmatpush1.bf16.msra.mxu0 %v3166
        %3443 = vmatprep.subr.bf16.mxu0 %v3157
        %3444 = vmatpush1.bf16.msra.mxu0 %v3156
        %3445 = vmatprep.subr.bf16.mxu0 %v3147
        %3446 = vmatpush1.bf16.msra.mxu0 %v3146
        %3447 = vmatprep.subr.bf16.mxu0 0
        %3448 = vmatpush2.bf16.msra.mxu0 0
        %3449 = vmatprep.subr.bf16.mxu0 0
        %3450 = vmatpush2.bf16.msra.mxu0 0
        %3451 = vmatprep.subr.bf16.mxu0 0
        %3452 = vmatpush2.bf16.msra.mxu0 0
        %3453 = vmatprep.subr.bf16.mxu0 0
        %3454 = vmatpush2.bf16.msra.mxu0 0
        %3455 = vmatprep.subr.bf16.mxu0 0
        %3456 = vmatpush2.bf16.msra.mxu0 0
        %3457 = vmatprep.subr.bf16.mxu0 0
        %3458 = vmatpush2.bf16.msra.mxu0 0
        %3459 = vmatprep.subr.bf16.mxu0 0
        %3460 = vmatpush2.bf16.msra.mxu0 0
        %3461 = vmatprep.subr.bf16.mxu0 0
        %3462 = vmatpush2.bf16.msra.mxu0 0
        %3463 = vmatprep.mubr.bf16.mxu0 0
        %3464 = vmatmul.mubr.bf16.gmra.mxu0 %v3214
        %v3465 = vpop.f32.mrf.mxu0
        %v3466 = vadd.f32 %v3185, %v3465
        %v3467 = vpop.f32.mrf.mxu0
        %v3468 = vadd.f32 %v3185, %v3467
        %v3469 = vpop.f32.mrf.mxu0
        %v3470 = vadd.f32 %v3190, %v3469
        %v3471 = vpop.f32.mrf.mxu0
        %v3472 = vadd.f32 %v3190, %v3471
        %3473 = vmatprep.mubr.bf16.mxu0 0
        %3474 = vmatmul.mubr.bf16.gmra.mxu0 %v3217
        %v3475 = vpop.f32.mrf.mxu0
        %v3476 = vadd.f32 %v3195, %v3475
        %v3477 = vpop.f32.mrf.mxu0
        %v3478 = vadd.f32 %v3195, %v3477
        %v3479 = vpop.f32.mrf.mxu0
        %v3480 = vadd.f32 %v3200, %v3479
        %v3481 = vpop.f32.mrf.mxu0
        %v3482 = vadd.f32 %v3200, %v3481
        %3483 = vdwg.mxu0
        %v3484 = vmax.f32 %v3254, 0.0
        %v3485 = vmax.f32 %v3256, 0.0
        %v3486 = vmax.f32 %v3307, 0.0
        %v3487 = vmax.f32 %v3309, 0.0
        %v3488 = vmax.f32 %v3360, 0.0
        %v3489 = vmax.f32 %v3362, 0.0
        %v3490 = vmax.f32 %v3413, 0.0
        %v3491 = vmax.f32 %v3415, 0.0
        %v3492 = vmax.f32 %v3466, 0.0
        %v3493 = vmax.f32 %v3468, 0.0
        %v3494 = vmax.f32 %v3258, 0.0
        %v3495 = vmax.f32 %v3260, 0.0
        %v3496 = vmax.f32 %v3311, 0.0
        %v3497 = vmax.f32 %v3313, 0.0
        %v3498 = vmax.f32 %v3364, 0.0
        %v3499 = vmax.f32 %v3366, 0.0
        %v3500 = vmax.f32 %v3417, 0.0
        %v3501 = vmax.f32 %v3419, 0.0
        %v3502 = vmax.f32 %v3470, 0.0
        %v3503 = vmax.f32 %v3472, 0.0
        %v3504 = vmax.f32 %v3264, 0.0
        %v3505 = vmax.f32 %v3266, 0.0
        %v3506 = vmax.f32 %v3317, 0.0
        %v3507 = vmax.f32 %v3319, 0.0
        %v3508 = vmax.f32 %v3370, 0.0
        %v3509 = vmax.f32 %v3372, 0.0
        %v3510 = vmax.f32 %v3423, 0.0
        %v3511 = vmax.f32 %v3425, 0.0
        %v3512 = vmax.f32 %v3476, 0.0
        %v3513 = vmax.f32 %v3478, 0.0
        %v3514 = vmax.f32 %v3268, 0.0
        %v3515 = vmax.f32 %v3270, 0.0
        %v3516 = vmax.f32 %v3321, 0.0
        %v3517 = vmax.f32 %v3323, 0.0
        %v3518 = vmax.f32 %v3374, 0.0
        %v3519 = vmax.f32 %v3376, 0.0
        %v3520 = vmax.f32 %v3427, 0.0
        %v3521 = vmax.f32 %v3429, 0.0
        %v3522 = vmax.f32 %v3480, 0.0
        %v3523 = vmax.f32 %v3482, 0.0
        %v3524 = vld [vmem:[%s7] sm:$0xf]
        %v3525 = vpack.c.bf16 %v3494, %v3484
        %v3526 = vpack.c.bf16 %v3495, %v3485
        %v3527 = vpack.c.bf16 %v3496, %v3486
        %v3528 = vpack.c.bf16 %v3497, %v3487
        %v3529 = vpack.c.bf16 %v3498, %v3488
        %v3530 = vpack.c.bf16 %v3499, %v3489
        %v3531 = vpack.c.bf16 %v3500, %v3490
        %v3532 = vpack.c.bf16 %v3501, %v3491
        %v3533 = vpack.c.bf16 %v3502, %v3492
        %v3534 = vpack.c.bf16 %v3503, %v3493
        %v3535 = vpack.c.bf16 %v3514, %v3504
        %v3536 = vpack.c.bf16 %v3515, %v3505
        %v3537 = vpack.c.bf16 %v3516, %v3506
        %v3538 = vpack.c.bf16 %v3517, %v3507
        %v3539 = vpack.c.bf16 %v3518, %v3508
        %v3540 = vpack.c.bf16 %v3519, %v3509
        %v3541 = vpack.c.bf16 %v3520, %v3510
        %v3542 = vpack.c.bf16 %v3521, %v3511
        %v3543 = vpack.c.bf16 %v3522, %v3512
        %v3544 = vpack.c.bf16 %v3523, %v3513
        %v3545 = vld [vmem:[%s8] sm:$0xff]
        %3547 = vset.pattern.permute.xlu0 0
        %3548 = vperm.xlu0 %3547, %v3545
        %v3549 = vpop.permute.xlu0 %3548
        %vm3551 = vcmask 261120
        %v3553 = vsel %vm3551, %v3524, 0
        %3555 = vmatprep.subr.bf16.mxu0 0
        %3556 = vmatpush1.bf16.msra.mxu0 0
        %3557 = vmatprep.subr.bf16.mxu0 0
        %3558 = vmatpush1.bf16.msra.mxu0 0
        %3559 = vmatprep.subr.bf16.mxu0 0
        %3560 = vmatpush1.bf16.msra.mxu0 0
        %3561 = vmatprep.subr.bf16.mxu0 0
        %3562 = vmatpush1.bf16.msra.mxu0 0
        %3563 = vmatprep.subr.bf16.mxu0 0
        %3564 = vmatpush1.bf16.msra.mxu0 0
        %3565 = vmatprep.subr.bf16.mxu0 0
        %3566 = vmatpush1.bf16.msra.mxu0 0
        %3567 = vmatprep.subr.bf16.mxu0 %v3536
        %3568 = vmatpush1.bf16.msra.mxu0 %v3535
        %3569 = vmatprep.subr.bf16.mxu0 %v3526
        %3570 = vmatpush1.bf16.msra.mxu0 %v3525
        %3571 = vmatprep.subr.bf16.mxu0 0
        %3572 = vmatpush2.bf16.msra.mxu0 0
        %3573 = vmatprep.subr.bf16.mxu0 0
        %3574 = vmatpush2.bf16.msra.mxu0 0
        %3575 = vmatprep.subr.bf16.mxu0 0
        %3576 = vmatpush2.bf16.msra.mxu0 0
        %3577 = vmatprep.subr.bf16.mxu0 0
        %3578 = vmatpush2.bf16.msra.mxu0 0
        %3579 = vmatprep.subr.bf16.mxu0 0
        %3580 = vmatpush2.bf16.msra.mxu0 0
        %3581 = vmatprep.subr.bf16.mxu0 0
        %3582 = vmatpush2.bf16.msra.mxu0 0
        %3583 = vmatprep.subr.bf16.mxu0 0
        %3584 = vmatpush2.bf16.msra.mxu0 0
        %3585 = vmatprep.subr.bf16.mxu0 0
        %3586 = vmatpush2.bf16.msra.mxu0 0
        %3587 = vmatprep.mubr.bf16.mxu0 0
        %3588 = vmatmul.mubr.bf16.gmra.mxu0 %v3553
        %v3589 = vpop.f32.mrf.mxu0
        %v3590 = vadd.f32 %v3549, %v3589
        %v3591 = vpop.f32.mrf.mxu0
        %v3592 = vadd.f32 %v3549, %v3591
        %v3593 = vpop.f32.mrf.mxu0
        %v3594 = vpop.f32.mrf.mxu0
        %3595 = vdwg.mxu0
        %3596 = vmatprep.subr.bf16.mxu0 0
        %3597 = vmatpush1.bf16.msra.mxu0 0
        %3598 = vmatprep.subr.bf16.mxu0 0
        %3599 = vmatpush1.bf16.msra.mxu0 0
        %3600 = vmatprep.subr.bf16.mxu0 0
        %3601 = vmatpush1.bf16.msra.mxu0 0
        %3602 = vmatprep.subr.bf16.mxu0 0
        %3603 = vmatpush1.bf16.msra.mxu0 0
        %3604 = vmatprep.subr.bf16.mxu0 0
        %3605 = vmatpush1.bf16.msra.mxu0 0
        %3606 = vmatprep.subr.bf16.mxu0 0
        %3607 = vmatpush1.bf16.msra.mxu0 0
        %3608 = vmatprep.subr.bf16.mxu0 %v3538
        %3609 = vmatpush1.bf16.msra.mxu0 %v3537
        %3610 = vmatprep.subr.bf16.mxu0 %v3528
        %3611 = vmatpush1.bf16.msra.mxu0 %v3527
        %3612 = vmatprep.subr.bf16.mxu0 0
        %3613 = vmatpush2.bf16.msra.mxu0 0
        %3614 = vmatprep.subr.bf16.mxu0 0
        %3615 = vmatpush2.bf16.msra.mxu0 0
        %3616 = vmatprep.subr.bf16.mxu0 0
        %3617 = vmatpush2.bf16.msra.mxu0 0
        %3618 = vmatprep.subr.bf16.mxu0 0
        %3619 = vmatpush2.bf16.msra.mxu0 0
        %3620 = vmatprep.subr.bf16.mxu0 0
        %3621 = vmatpush2.bf16.msra.mxu0 0
        %3622 = vmatprep.subr.bf16.mxu0 0
        %3623 = vmatpush2.bf16.msra.mxu0 0
        %3624 = vmatprep.subr.bf16.mxu0 0
        %3625 = vmatpush2.bf16.msra.mxu0 0
        %3626 = vmatprep.subr.bf16.mxu0 0
        %3627 = vmatpush2.bf16.msra.mxu0 0
        %3628 = vmatprep.mubr.bf16.mxu0 0
        %3629 = vmatmul.mubr.bf16.gmra.mxu0 %v3553
        %v3630 = vpop.f32.mrf.mxu0
        %v3631 = vadd.f32 %v3549, %v3630
        %v3632 = vpop.f32.mrf.mxu0
        %v3633 = vadd.f32 %v3549, %v3632
        %v3634 = vpop.f32.mrf.mxu0
        %v3635 = vpop.f32.mrf.mxu0
        %3636 = vdwg.mxu0
        %3637 = vmatprep.subr.bf16.mxu0 0
        %3638 = vmatpush1.bf16.msra.mxu0 0
        %3639 = vmatprep.subr.bf16.mxu0 0
        %3640 = vmatpush1.bf16.msra.mxu0 0
        %3641 = vmatprep.subr.bf16.mxu0 0
        %3642 = vmatpush1.bf16.msra.mxu0 0
        %3643 = vmatprep.subr.bf16.mxu0 0
        %3644 = vmatpush1.bf16.msra.mxu0 0
        %3645 = vmatprep.subr.bf16.mxu0 0
        %3646 = vmatpush1.bf16.msra.mxu0 0
        %3647 = vmatprep.subr.bf16.mxu0 0
        %3648 = vmatpush1.bf16.msra.mxu0 0
        %3649 = vmatprep.subr.bf16.mxu0 %v3540
        %3650 = vmatpush1.bf16.msra.mxu0 %v3539
        %3651 = vmatprep.subr.bf16.mxu0 %v3530
        %3652 = vmatpush1.bf16.msra.mxu0 %v3529
        %3653 = vmatprep.subr.bf16.mxu0 0
        %3654 = vmatpush2.bf16.msra.mxu0 0
        %3655 = vmatprep.subr.bf16.mxu0 0
        %3656 = vmatpush2.bf16.msra.mxu0 0
        %3657 = vmatprep.subr.bf16.mxu0 0
        %3658 = vmatpush2.bf16.msra.mxu0 0
        %3659 = vmatprep.subr.bf16.mxu0 0
        %3660 = vmatpush2.bf16.msra.mxu0 0
        %3661 = vmatprep.subr.bf16.mxu0 0
        %3662 = vmatpush2.bf16.msra.mxu0 0
        %3663 = vmatprep.subr.bf16.mxu0 0
        %3664 = vmatpush2.bf16.msra.mxu0 0
        %3665 = vmatprep.subr.bf16.mxu0 0
        %3666 = vmatpush2.bf16.msra.mxu0 0
        %3667 = vmatprep.subr.bf16.mxu0 0
        %3668 = vmatpush2.bf16.msra.mxu0 0
        %3669 = vmatprep.mubr.bf16.mxu0 0
        %3670 = vmatmul.mubr.bf16.gmra.mxu0 %v3553
        %v3671 = vpop.f32.mrf.mxu0
        %v3672 = vadd.f32 %v3549, %v3671
        %v3673 = vpop.f32.mrf.mxu0
        %v3674 = vadd.f32 %v3549, %v3673
        %v3675 = vpop.f32.mrf.mxu0
        %v3676 = vpop.f32.mrf.mxu0
        %3677 = vdwg.mxu0
        %3678 = vmatprep.subr.bf16.mxu0 0
        %3679 = vmatpush1.bf16.msra.mxu0 0
        %3680 = vmatprep.subr.bf16.mxu0 0
        %3681 = vmatpush1.bf16.msra.mxu0 0
        %3682 = vmatprep.subr.bf16.mxu0 0
        %3683 = vmatpush1.bf16.msra.mxu0 0
        %3684 = vmatprep.subr.bf16.mxu0 0
        %3685 = vmatpush1.bf16.msra.mxu0 0
        %3686 = vmatprep.subr.bf16.mxu0 0
        %3687 = vmatpush1.bf16.msra.mxu0 0
        %3688 = vmatprep.subr.bf16.mxu0 0
        %3689 = vmatpush1.bf16.msra.mxu0 0
        %3690 = vmatprep.subr.bf16.mxu0 %v3542
        %3691 = vmatpush1.bf16.msra.mxu0 %v3541
        %3692 = vmatprep.subr.bf16.mxu0 %v3532
        %3693 = vmatpush1.bf16.msra.mxu0 %v3531
        %3694 = vmatprep.subr.bf16.mxu0 0
        %3695 = vmatpush2.bf16.msra.mxu0 0
        %3696 = vmatprep.subr.bf16.mxu0 0
        %3697 = vmatpush2.bf16.msra.mxu0 0
        %3698 = vmatprep.subr.bf16.mxu0 0
        %3699 = vmatpush2.bf16.msra.mxu0 0
        %3700 = vmatprep.subr.bf16.mxu0 0
        %3701 = vmatpush2.bf16.msra.mxu0 0
        %3702 = vmatprep.subr.bf16.mxu0 0
        %3703 = vmatpush2.bf16.msra.mxu0 0
        %3704 = vmatprep.subr.bf16.mxu0 0
        %3705 = vmatpush2.bf16.msra.mxu0 0
        %3706 = vmatprep.subr.bf16.mxu0 0
        %3707 = vmatpush2.bf16.msra.mxu0 0
        %3708 = vmatprep.subr.bf16.mxu0 0
        %3709 = vmatpush2.bf16.msra.mxu0 0
        %3710 = vmatprep.mubr.bf16.mxu0 0
        %3711 = vmatmul.mubr.bf16.gmra.mxu0 %v3553
        %v3712 = vpop.f32.mrf.mxu0
        %v3713 = vadd.f32 %v3549, %v3712
        %v3714 = vpop.f32.mrf.mxu0
        %v3715 = vadd.f32 %v3549, %v3714
        %v3716 = vpop.f32.mrf.mxu0
        %v3717 = vpop.f32.mrf.mxu0
        %3718 = vdwg.mxu0
        %3719 = vmatprep.subr.bf16.mxu0 0
        %3720 = vmatpush1.bf16.msra.mxu0 0
        %3721 = vmatprep.subr.bf16.mxu0 0
        %3722 = vmatpush1.bf16.msra.mxu0 0
        %3723 = vmatprep.subr.bf16.mxu0 0
        %3724 = vmatpush1.bf16.msra.mxu0 0
        %3725 = vmatprep.subr.bf16.mxu0 0
        %3726 = vmatpush1.bf16.msra.mxu0 0
        %3727 = vmatprep.subr.bf16.mxu0 0
        %3728 = vmatpush1.bf16.msra.mxu0 0
        %3729 = vmatprep.subr.bf16.mxu0 0
        %3730 = vmatpush1.bf16.msra.mxu0 0
        %3731 = vmatprep.subr.bf16.mxu0 %v3544
        %3732 = vmatpush1.bf16.msra.mxu0 %v3543
        %3733 = vmatprep.subr.bf16.mxu0 %v3534
        %3734 = vmatpush1.bf16.msra.mxu0 %v3533
        %3735 = vmatprep.subr.bf16.mxu0 0
        %3736 = vmatpush2.bf16.msra.mxu0 0
        %3737 = vmatprep.subr.bf16.mxu0 0
        %3738 = vmatpush2.bf16.msra.mxu0 0
        %3739 = vmatprep.subr.bf16.mxu0 0
        %3740 = vmatpush2.bf16.msra.mxu0 0
        %3741 = vmatprep.subr.bf16.mxu0 0
        %3742 = vmatpush2.bf16.msra.mxu0 0
        %3743 = vmatprep.subr.bf16.mxu0 0
        %3744 = vmatpush2.bf16.msra.mxu0 0
        %3745 = vmatprep.subr.bf16.mxu0 0
        %3746 = vmatpush2.bf16.msra.mxu0 0
        %3747 = vmatprep.subr.bf16.mxu0 0
        %3748 = vmatpush2.bf16.msra.mxu0 0
        %3749 = vmatprep.subr.bf16.mxu0 0
        %3750 = vmatpush2.bf16.msra.mxu0 0
        %3751 = vmatprep.mubr.bf16.mxu0 0
        %3752 = vmatmul.mubr.bf16.gmra.mxu0 %v3553
        %v3753 = vpop.f32.mrf.mxu0
        %v3754 = vadd.f32 %v3549, %v3753
        %v3755 = vpop.f32.mrf.mxu0
        %v3756 = vadd.f32 %v3549, %v3755
        %v3757 = vpop.f32.mrf.mxu0
        %v3758 = vpop.f32.mrf.mxu0
        %3759 = vdwg.mxu0
        %3760 = vst [vmem:[%s326] sm:$0xff] %v3590
        %3761 = vst [vmem:[%s326 + $0x8] sm:$0xff] %v3592
        %3762 = vst [vmem:[%s326 + $0x10] sm:$0xff] %v3631
        %3763 = vst [vmem:[%s326 + $0x18] sm:$0xff] %v3633
        %3764 = vst [vmem:[%s326 + $0x20] sm:$0xff] %v3672
        %3765 = vst [vmem:[%s326 + $0x28] sm:$0xff] %v3674
        %3766 = vst [vmem:[%s326 + $0x30] sm:$0xff] %v3713
        %3767 = vst [vmem:[%s326 + $0x38] sm:$0xff] %v3715
        %3768 = vst [vmem:[%s326 + $0x40] sm:$0xff] %v3754
        %3769 = vst [vmem:[%s326 + $0x48] sm:$0xff] %v3756
        %s3770 = sand.u32 %s225, 1
        %s3771 = scalar_lea.sflag [#allocation3], %s3770
        %s3772 = sand.u32 %s225, 1
        %s3773 = smul.addr %s3772, 80
        %s3774 = scalar_lea.vmem [#allocation2], %s3773
        // Predicated region
        $region57: #{tpu_custom_call.1} parent=55 // pred_check
          %p3775 = pneg %p235
        $region58: #{tpu_custom_call.1} parent=55 // pred_check_branch
          %3777 = sbr.rel (%p3775) target = $region60
        $region59: #{tpu_custom_call.1} parent=55 // pred_region
          %s3778 = smul.u32 10, %s23
          %s3780 = ssub.s32 1280, 1280
          %3781 = vsyncadd %s3771, %s3780
          %s3782 = smul.addr %s3778, 128
          %s3783 = scalar_lea.hbm %s9, %s3782
          %s3785 = sshll.u32 %s3774, 4
          %s3786 = int_to_ptr.vmem [resolvable:$true] %s3785
          %3788 = dma.vmem_to_hbm [thread:$0]  %s3786, 1280, %s3783, %s3771
        $region60: #{tpu_custom_call.1} parent=55 // pred_fallthru
          _
      $region56: #{tpu_custom_call.1} parent=5 // pred_fallthru
        _
      %p3789 = scmp.le.s32.totalorder 2, %s18
      // Predicated region
      $region61: #{tpu_custom_call.1} parent=5 // pred_check
        %p3790 = pneg %p3789
      $region62: #{tpu_custom_call.1} parent=5 // pred_check_branch
        %3792 = sbr.rel (%p3790) target = $region64
      $region63: #{tpu_custom_call.1} parent=5 // pred_region
        %s3793 = ssub.s32 %s18, 2
        // Predicated region
        $region65: #{tpu_custom_call.1} parent=63 // pred_check
          %p3794 = pneg %p241
        $region66: #{tpu_custom_call.1} parent=63 // pred_check_branch
          %3796 = sbr.rel (%p3794) target = $region68
        $region67: #{tpu_custom_call.1} parent=63 // pred_region
          %s3797 = sand.u32 %s226, 1
          %s3798 = scalar_lea.sflag [#allocation3], %s3797
          %s3799 = sand.u32 %s226, 1
          %s3800 = smul.addr %s3799, 80
          %s3801 = scalar_lea.vmem [#allocation2], %s3800
          %3802 = dma.done %s3798, 1280
        $region68: #{tpu_custom_call.1} parent=63 // pred_fallthru
          _
      $region64: #{tpu_custom_call.1} parent=5 // pred_fallthru
        _
    $region6: #{tpu_custom_call.1} parent=1 // loop_footer
      %s22 = sadd.s32 1, %s18
    $region7: #{tpu_custom_call.1} parent=1 // loop_footer_branch
      %17 = sbr.rel target = $region3
    $region8: #{tpu_custom_call.1} parent=1 // loop_exit
      _
    %3803 = vsyncpa [#allocation3], 1
    %s3804 = scalar_lea.sflag [#allocation3], 1
    %3805 = vsyncpa %s3804, 1

</llo_original>
